<compile_context>
chip_gen: v5e
topology: v5e:2x2
jax: 0.10.0
libtpu: 0.0.40
codegen_flags: <defaults>
</compile_context>

<pallas_src>
import functools

import jax
import jax.numpy as jnp
from jax.experimental import pallas as pl
from jax.experimental.pallas import tpu as pltpu


# ---------------------------------------------------------------------------
# fc1: y = x @ W1.T + b1   (memory-bound; tiled over rows, weights resident)
# ---------------------------------------------------------------------------
def _fc1_kernel(x_ref, w_ref, b_ref, o_ref):
    acc = jnp.dot(x_ref[...], w_ref[...], preferred_element_type=jnp.float32)
    o_ref[...] = (acc + b_ref[...]).astype(o_ref.dtype)


# ---------------------------------------------------------------------------
# Outer-product-mean + fc2 for an I_TILE of output rows per grid step.
# ---------------------------------------------------------------------------
def _opm_kernel(xi_ref, xall_ref, w2q_ref, b2_ref, out_ref, ta_ref):
    # xi_ref:   (1, i_tile*S, c)   rows (it, s): x1[b, s, i0+it, p]
    # xall_ref: (1, R, c*S)        cols (q, s):  x1[b, s, j, q]   (i-invariant)
    # w2q_ref:  (c, c, c_z)        w2q[q, p, z] = W2[z, p*c + q] / S
    # b2_ref:   (1, c_z) f32
    # out_ref:  (1, i_tile, R, c_z)
    # ta_ref:   (c, i_tile*S, c_z) scratch, ta[q, it*S + s, z]
    n_q = w2q_ref.shape[0]
    c_z = w2q_ref.shape[2]
    i_tile = out_ref.shape[1]
    S = xi_ref.shape[1] // i_tile

    xi = xi_ref[0]                                   # (i_tile*S, c)

    # ---- Stage A: c fused matmuls, M = i_tile*S, K = c, N = c_z -----------
    for q in range(n_q):                             # static, small
        ta_ref[q] = jnp.dot(
            xi, w2q_ref[q],
            preferred_element_type=jnp.float32).astype(ta_ref.dtype)

    xall = xall_ref[0]                               # (R, c*S), resident
    b2 = b2_ref[...]                                 # (1, c_z) f32, hoisted

    # ---- Stage B: per-it (R, c*S) @ (c*S, c_z) ------------------------------
    # ta_ref[:, it*S:(it+1)*S, :] has rows ordered (q, s); merging its leading
    # dims is a free reshape (S % 8 == 0), matching xall's (q, s) columns.
    for it in range(i_tile):                         # static, small
        ti = ta_ref[:, it * S:(it + 1) * S, :].reshape(n_q * S, c_z)
        acc = jnp.dot(xall, ti, preferred_element_type=jnp.float32)  # (R, c_z)
        out_ref[0, it] = (acc + b2).astype(out_ref.dtype)


def outer_product_mean(x, W1, b1, W2, b2, *, c, i_tile=None, fc1_rows=2048,
                       matmul_dtype=jnp.float32):
    """x: (B, S, R, c_m) float32 -> (B, R, R, c_z) float32."""
    B, S, R, c_m = x.shape
    c_z = W2.shape[0]
    assert S % 8 == 0, "S must be a multiple of 8 (sublane-aligned Ti slabs)"
    if i_tile is None:
        i_tile = R if R <= 32 else 16
    i_tile = min(i_tile, R)
    assert R % i_tile == 0, (R, i_tile)
    mdt = matmul_dtype
    vmem_limit = 64 * 1024 * 1024

    # ---- fc1: tiled matmul kernel over the flattened row dim --------------
    M = B * S * R
    tm = min(fc1_rows, M)
    # M % tm != 0 is handled by Pallas boundary masking (pl.cdiv grid).
    x2d = x.reshape(M, c_m).astype(mdt)
    x1_2d = pl.pallas_call(
        _fc1_kernel,
        out_shape=jax.ShapeDtypeStruct((M, c), mdt),
        grid_spec=pltpu.PrefetchScalarGridSpec(
            num_scalar_prefetch=0,
            grid=(pl.cdiv(M, tm),),
            in_specs=[
                pl.BlockSpec((tm, c_m), lambda m: (m, 0)),
                pl.BlockSpec((c_m, c), lambda m: (0, 0)),
                pl.BlockSpec((1, c), lambda m: (0, 0)),
            ],
            out_specs=pl.BlockSpec((tm, c), lambda m: (m, 0)),
        ),
        compiler_params=pltpu.CompilerParams(
            dimension_semantics=("parallel",),
            vmem_limit_bytes=vmem_limit),
    )(x2d, W1.T.astype(mdt), b1.reshape(1, c).astype(jnp.float32))
    x1 = x1_2d.reshape(B, S, R, c)

    # Two layouts of x1 (x1 is only c/c_m the size of x, so these passes are
    # minor next to fc1's read of x):
    #   xrows[b, (r, s), p] = x1[b, s, r, p]  -> stage-A LHS (cheap transpose,
    #                                            contiguous c stays last)
    #   xall [b, j, (q, s)] = x1[b, s, j, q]  -> stage-B LHS (i-invariant)
    # TODO(synk): fold these relayouts into the fc1 kernel (transposed output
    # blocks) to drop the extra HBM passes over x1; kept in XLA for lowering
    # robustness.
    xrows = x1.transpose(0, 2, 1, 3).reshape(B, R * S, c)
    xall = x1.transpose(0, 2, 3, 1).reshape(B, R, c * S)

    # fc2 weight rearranged and pre-scaled: w2q[q, p, z] = W2[z, p*c+q] / S.
    w2q = (W2.T.reshape(c, c, c_z).transpose(1, 0, 2)
           * jnp.float32(1.0 / S)).astype(mdt)
    b2row = b2.reshape(1, c_z).astype(jnp.float32)

    # Grid (B, R // i_tile): inner i axis keeps the i-invariant xall block
    # resident; at the test shape the product (2) splits evenly over v7x's
    # two TensorCores.
    # TODO(synk): at production R/S (e.g. 384) add a j grid axis (tile xall)
    # so the resident block fits v7x's 64 MiB VMEM.
    out = pl.pallas_call(
        _opm_kernel,
        out_shape=jax.ShapeDtypeStruct((B, R, R, c_z), jnp.float32),
        grid_spec=pltpu.PrefetchScalarGridSpec(
            num_scalar_prefetch=0,
            grid=(B, R // i_tile),
            in_specs=[
                pl.BlockSpec((1, i_tile * S, c), lambda b, i: (b, i, 0)),
                # constant over i -> fetched once per batch element
                pl.BlockSpec((1, R, c * S), lambda b, i: (b, 0, 0)),
                pl.BlockSpec((c, c, c_z), lambda b, i: (0, 0, 0)),
                pl.BlockSpec((1, c_z), lambda b, i: (0, 0)),
            ],
            out_specs=pl.BlockSpec((1, i_tile, R, c_z),
                                   lambda b, i: (b, i, 0, 0)),
            scratch_shapes=[pltpu.VMEM((c, i_tile * S, c_z), mdt)],
        ),
        compiler_params=pltpu.CompilerParams(
            dimension_semantics=("parallel", "parallel"),
            vmem_limit_bytes=vmem_limit),
    )(xrows, xall, w2q, b2row)
    return out


def reference(x, W1, b1, W2, b2, c):
    """Pure-JAX reference matching the PyTorch forward exactly."""
    B, S, R, _ = x.shape
    x1 = x @ W1.T + b1                                       # (B, S, R, c)
    outer = jnp.einsum('bsip,bsjq->bijpq', x1, x1) / S       # (B, R, R, c, c)
    flat = outer.reshape(B, R, R, c * c)                     # row-major p*c+q
    return flat @ W2.T + b2                                  # (B, R, R, c_z)


if __name__ == "__main__":
    B, S, R = 2, 16, 16
    c_m, c, c_z = 32, 16, 32

    key = jax.random.PRNGKey(0)
    kx, k1, k2, k3, k4 = jax.random.split(key, 5)
    x = jax.random.normal(kx, (B, S, R, c_m), dtype=jnp.float32)

    # Deterministic parameter init (PyTorch-Linear-style uniform bounds).
    lim1 = 1.0 / (c_m ** 0.5)
    W1 = jax.random.uniform(k1, (c, c_m), jnp.float32, -lim1, lim1)
    b1 = jax.random.uniform(k2, (c,), jnp.float32, -lim1, lim1)
    lim2 = 1.0 / c  # = 1/sqrt(c*c)
    W2 = jax.random.uniform(k3, (c_z, c * c), jnp.float32, -lim2, lim2)
    b2 = jax.random.uniform(k4, (c_z,), jnp.float32, -lim2, lim2)

    ref = reference(x, W1, b1, W2, b2, c)

    # Exact-semantics path (f32 operands), tight tolerance.
    fwd_f32 = jax.jit(functools.partial(outer_product_mean, c=c))
    out_f32 = jax.block_until_ready(fwd_f32(x, W1, b1, W2, b2))
    assert out_f32.shape == (B, R, R, c_z), out_f32.shape
    err_f32 = float(jnp.max(jnp.abs(out_f32 - ref)))
    assert jnp.allclose(out_f32, ref, atol=1e-4, rtol=1e-4), err_f32

    # bf16-operand path (review item for v6e/v7x): f32 accumulation, looser
    # tolerance appropriate for bf16 inputs to the MXU.
    fwd_bf16 = jax.jit(functools.partial(outer_product_mean, c=c,
                                         matmul_dtype=jnp.bfloat16))
    out_bf16 = jax.block_until_ready(fwd_bf16(x, W1, b1, W2, b2))
    err_bf16 = float(jnp.max(jnp.abs(out_bf16 - ref)))
    assert jnp.allclose(out_bf16, ref, atol=5e-2, rtol=5e-2), err_bf16

    print("KERNEL_OK")
</pallas_src>

<mosaic_0001>
module attributes {stable_mosaic.version = 11 : i64} {
  func.func @_fc1_kernel(%arg0: i32, %arg1: memref<512x32xf32, #tpu.memory_space<vmem>>, %arg2: memref<32x16xf32, #tpu.memory_space<vmem>>, %arg3: memref<1x16xf32, #tpu.memory_space<vmem>>, %arg4: memref<512x16xf32, #tpu.memory_space<vmem>>) attributes {dimension_semantics = [#tpu.dimension_semantics<parallel>], iteration_bounds = array<i64: 1>, scalar_prefetch = 0 : i64, scratch_operands = 0 : i64, tpu.core_type = #tpu.core_type<tc>, window_params = [{transform_indices = @transform_0, window_bounds = array<i64: 512, 32>}, {pipeline_mode = #tpu.pipeline_mode<synchronous>, transform_indices = @transform_1, window_bounds = array<i64: 32, 16>}, {pipeline_mode = #tpu.pipeline_mode<synchronous>, transform_indices = @transform_2, window_bounds = array<i64: 1, 16>}, {transform_indices = @transform_3, window_bounds = array<i64: 512, 16>}]} {
    %c0 = arith.constant 0 : index
    %c0_0 = arith.constant 0 : index
    %0 = vector.load %arg1[%c0, %c0_0] : memref<512x32xf32, #tpu.memory_space<vmem>>, vector<512x32xf32>
    %c0_1 = arith.constant 0 : index
    %c0_2 = arith.constant 0 : index
    %1 = vector.load %arg2[%c0_1, %c0_2] : memref<32x16xf32, #tpu.memory_space<vmem>>, vector<32x16xf32>
    %cst = arith.constant dense<0.000000e+00> : vector<512x16xf32>
    %2 = tpu.matmul %0, %1, %cst {dimension_numbers = #tpu.dot_dimension_numbers<[1], [0], [0], [1], [0, 0, 1, 1], [], []>} : vector<512x32xf32>, vector<32x16xf32>, vector<512x16xf32> -> vector<512x16xf32>
    %c0_3 = arith.constant 0 : index
    %c0_4 = arith.constant 0 : index
    %3 = vector.load %arg3[%c0_3, %c0_4] : memref<1x16xf32, #tpu.memory_space<vmem>>, vector<1x16xf32>
    %4 = vector.broadcast %3 : vector<1x16xf32> to vector<512x16xf32>
    %5 = arith.addf %2, %4 : vector<512x16xf32>
    %c0_5 = arith.constant 0 : index
    %c0_6 = arith.constant 0 : index
    %6 = vector.load %arg4[%c0_5, %c0_6] : memref<512x16xf32, #tpu.memory_space<vmem>>, vector<512x16xf32>
    tpu.vector_store %arg4[%c0_5, %c0_6], %5 {strides = array<i32>} : memref<512x16xf32, #tpu.memory_space<vmem>>, vector<512x16xf32>,
    return
  }
  func.func @transform_0(%arg0: i32) -> (i32, i32) {
    %c0_i32 = arith.constant 0 : i32
    %c0_i32_0 = arith.constant 0 : i32
    return %arg0, %c0_i32 : i32, i32
  }
  func.func @transform_1(%arg0: i32) -> (i32, i32) {
    %c0_i32 = arith.constant 0 : i32
    %c0_i32_0 = arith.constant 0 : i32
    %c0_i32_1 = arith.constant 0 : i32
    return %c0_i32, %c0_i32_0 : i32, i32
  }
  func.func @transform_2(%arg0: i32) -> (i32, i32) {
    %c0_i32 = arith.constant 0 : i32
    %c0_i32_0 = arith.constant 0 : i32
    %c0_i32_1 = arith.constant 0 : i32
    return %c0_i32, %c0_i32_0 : i32, i32
  }
  func.func @transform_3(%arg0: i32) -> (i32, i32) {
    %c0_i32 = arith.constant 0 : i32
    %c0_i32_0 = arith.constant 0 : i32
    return %arg0, %c0_i32 : i32, i32
  }
}

module attributes {stable_mosaic.version = 11 : i64} {
  func.func @_opm_kernel(%arg0: i32, %arg1: i32, %arg2: memref<1x256x16xf32, #tpu.memory_space<vmem>>, %arg3: memref<1x16x256xf32, #tpu.memory_space<vmem>>, %arg4: memref<16x16x32xf32, #tpu.memory_space<vmem>>, %arg5: memref<1x32xf32, #tpu.memory_space<vmem>>, %arg6: memref<1x16x16x32xf32, #tpu.memory_space<vmem>>, %arg7: memref<16x256x32xf32, #tpu.memory_space<vmem>>) attributes {dimension_semantics = [#tpu.dimension_semantics<parallel>, #tpu.dimension_semantics<parallel>], iteration_bounds = array<i64: 2, 1>, scalar_prefetch = 0 : i64, scratch_operands = 1 : i64, tpu.core_type = #tpu.core_type<tc>, window_params = [{transform_indices = @transform_0, window_bounds = array<i64: 1, 256, 16>}, {transform_indices = @transform_1, window_bounds = array<i64: 1, 16, 256>}, {pipeline_mode = #tpu.pipeline_mode<synchronous>, transform_indices = @transform_2, window_bounds = array<i64: 16, 16, 32>}, {pipeline_mode = #tpu.pipeline_mode<synchronous>, transform_indices = @transform_3, window_bounds = array<i64: 1, 32>}, {transform_indices = @transform_4, window_bounds = array<i64: 1, 16, 16, 32>}]} {
    %c0 = arith.constant 0 : index
    %c0_0 = arith.constant 0 : index
    %c0_1 = arith.constant 0 : index
    %0 = vector.load %arg2[%c0, %c0_0, %c0_1] : memref<1x256x16xf32, #tpu.memory_space<vmem>>, vector<1x256x16xf32>
    %1 = vector.shape_cast %0 : vector<1x256x16xf32> to vector<256x16xf32>
    %c0_2 = arith.constant 0 : index
    %c0_3 = arith.constant 0 : index
    %c0_4 = arith.constant 0 : index
    %2 = vector.load %arg4[%c0_2, %c0_3, %c0_4] : memref<16x16x32xf32, #tpu.memory_space<vmem>>, vector<1x16x32xf32>
    %3 = vector.shape_cast %2 : vector<1x16x32xf32> to vector<16x32xf32>
    %cst = arith.constant dense<0.000000e+00> : vector<256x32xf32>
    %4 = tpu.matmul %1, %3, %cst {dimension_numbers = #tpu.dot_dimension_numbers<[1], [0], [0], [1], [0, 0, 1, 1], [], []>} : vector<256x16xf32>, vector<16x32xf32>, vector<256x32xf32> -> vector<256x32xf32>
    %c0_5 = arith.constant 0 : index
    %c0_6 = arith.constant 0 : index
    %c0_7 = arith.constant 0 : index
    %5 = vector.load %arg7[%c0_5, %c0_6, %c0_7] : memref<16x256x32xf32, #tpu.memory_space<vmem>>, vector<1x256x32xf32>
    %6 = vector.shape_cast %5 : vector<1x256x32xf32> to vector<256x32xf32>
    %7 = vector.shape_cast %4 : vector<256x32xf32> to vector<1x256x32xf32>
    tpu.vector_store %arg7[%c0_5, %c0_6, %c0_7], %7 {strides = array<i32>} : memref<16x256x32xf32, #tpu.memory_space<vmem>>, vector<1x256x32xf32>,
    %c1 = arith.constant 1 : index
    %c0_8 = arith.constant 0 : index
    %c0_9 = arith.constant 0 : index
    %8 = vector.load %arg4[%c1, %c0_8, %c0_9] : memref<16x16x32xf32, #tpu.memory_space<vmem>>, vector<1x16x32xf32>
    %9 = vector.shape_cast %8 : vector<1x16x32xf32> to vector<16x32xf32>
    %cst_10 = arith.constant dense<0.000000e+00> : vector<256x32xf32>
    %10 = tpu.matmul %1, %9, %cst_10 {dimension_numbers = #tpu.dot_dimension_numbers<[1], [0], [0], [1], [0, 0, 1, 1], [], []>} : vector<256x16xf32>, vector<16x32xf32>, vector<256x32xf32> -> vector<256x32xf32>
    %c1_11 = arith.constant 1 : index
    %c0_12 = arith.constant 0 : index
    %c0_13 = arith.constant 0 : index
    %11 = vector.load %arg7[%c1_11, %c0_12, %c0_13] : memref<16x256x32xf32, #tpu.memory_space<vmem>>, vector<1x256x32xf32>
    %12 = vector.shape_cast %11 : vector<1x256x32xf32> to vector<256x32xf32>
    %13 = vector.shape_cast %10 : vector<256x32xf32> to vector<1x256x32xf32>
    tpu.vector_store %arg7[%c1_11, %c0_12, %c0_13], %13 {strides = array<i32>} : memref<16x256x32xf32, #tpu.memory_space<vmem>>, vector<1x256x32xf32>,
    %c2 = arith.constant 2 : index
    %c0_14 = arith.constant 0 : index
    %c0_15 = arith.constant 0 : index
    %14 = vector.load %arg4[%c2, %c0_14, %c0_15] : memref<16x16x32xf32, #tpu.memory_space<vmem>>, vector<1x16x32xf32>
    %15 = vector.shape_cast %14 : vector<1x16x32xf32> to vector<16x32xf32>
    %cst_16 = arith.constant dense<0.000000e+00> : vector<256x32xf32>
    %16 = tpu.matmul %1, %15, %cst_16 {dimension_numbers = #tpu.dot_dimension_numbers<[1], [0], [0], [1], [0, 0, 1, 1], [], []>} : vector<256x16xf32>, vector<16x32xf32>, vector<256x32xf32> -> vector<256x32xf32>
    %c2_17 = arith.constant 2 : index
    %c0_18 = arith.constant 0 : index
    %c0_19 = arith.constant 0 : index
    %17 = vector.load %arg7[%c2_17, %c0_18, %c0_19] : memref<16x256x32xf32, #tpu.memory_space<vmem>>, vector<1x256x32xf32>
    %18 = vector.shape_cast %17 : vector<1x256x32xf32> to vector<256x32xf32>
    %19 = vector.shape_cast %16 : vector<256x32xf32> to vector<1x256x32xf32>
    tpu.vector_store %arg7[%c2_17, %c0_18, %c0_19], %19 {strides = array<i32>} : memref<16x256x32xf32, #tpu.memory_space<vmem>>, vector<1x256x32xf32>,
    %c3 = arith.constant 3 : index
    %c0_20 = arith.constant 0 : index
    %c0_21 = arith.constant 0 : index
    %20 = vector.load %arg4[%c3, %c0_20, %c0_21] : memref<16x16x32xf32, #tpu.memory_space<vmem>>, vector<1x16x32xf32>
    %21 = vector.shape_cast %20 : vector<1x16x32xf32> to vector<16x32xf32>
    %cst_22 = arith.constant dense<0.000000e+00> : vector<256x32xf32>
    %22 = tpu.matmul %1, %21, %cst_22 {dimension_numbers = #tpu.dot_dimension_numbers<[1], [0], [0], [1], [0, 0, 1, 1], [], []>} : vector<256x16xf32>, vector<16x32xf32>, vector<256x32xf32> -> vector<256x32xf32>
    %c3_23 = arith.constant 3 : index
    %c0_24 = arith.constant 0 : index
    %c0_25 = arith.constant 0 : index
    %23 = vector.load %arg7[%c3_23, %c0_24, %c0_25] : memref<16x256x32xf32, #tpu.memory_space<vmem>>, vector<1x256x32xf32>
    %24 = vector.shape_cast %23 : vector<1x256x32xf32> to vector<256x32xf32>
    %25 = vector.shape_cast %22 : vector<256x32xf32> to vector<1x256x32xf32>
    tpu.vector_store %arg7[%c3_23, %c0_24, %c0_25], %25 {strides = array<i32>} : memref<16x256x32xf32, #tpu.memory_space<vmem>>, vector<1x256x32xf32>,
    %c4 = arith.constant 4 : index
    %c0_26 = arith.constant 0 : index
    %c0_27 = arith.constant 0 : index
    %26 = vector.load %arg4[%c4, %c0_26, %c0_27] : memref<16x16x32xf32, #tpu.memory_space<vmem>>, vector<1x16x32xf32>
    %27 = vector.shape_cast %26 : vector<1x16x32xf32> to vector<16x32xf32>
    %cst_28 = arith.constant dense<0.000000e+00> : vector<256x32xf32>
    %28 = tpu.matmul %1, %27, %cst_28 {dimension_numbers = #tpu.dot_dimension_numbers<[1], [0], [0], [1], [0, 0, 1, 1], [], []>} : vector<256x16xf32>, vector<16x32xf32>, vector<256x32xf32> -> vector<256x32xf32>
    %c4_29 = arith.constant 4 : index
    %c0_30 = arith.constant 0 : index
    %c0_31 = arith.constant 0 : index
    %29 = vector.load %arg7[%c4_29, %c0_30, %c0_31] : memref<16x256x32xf32, #tpu.memory_space<vmem>>, vector<1x256x32xf32>
    %30 = vector.shape_cast %29 : vector<1x256x32xf32> to vector<256x32xf32>
    %31 = vector.shape_cast %28 : vector<256x32xf32> to vector<1x256x32xf32>
    tpu.vector_store %arg7[%c4_29, %c0_30, %c0_31], %31 {strides = array<i32>} : memref<16x256x32xf32, #tpu.memory_space<vmem>>, vector<1x256x32xf32>,
    %c5 = arith.constant 5 : index
    %c0_32 = arith.constant 0 : index
    %c0_33 = arith.constant 0 : index
    %32 = vector.load %arg4[%c5, %c0_32, %c0_33] : memref<16x16x32xf32, #tpu.memory_space<vmem>>, vector<1x16x32xf32>
    %33 = vector.shape_cast %32 : vector<1x16x32xf32> to vector<16x32xf32>
    %cst_34 = arith.constant dense<0.000000e+00> : vector<256x32xf32>
    %34 = tpu.matmul %1, %33, %cst_34 {dimension_numbers = #tpu.dot_dimension_numbers<[1], [0], [0], [1], [0, 0, 1, 1], [], []>} : vector<256x16xf32>, vector<16x32xf32>, vector<256x32xf32> -> vector<256x32xf32>
    %c5_35 = arith.constant 5 : index
    %c0_36 = arith.constant 0 : index
    %c0_37 = arith.constant 0 : index
    %35 = vector.load %arg7[%c5_35, %c0_36, %c0_37] : memref<16x256x32xf32, #tpu.memory_space<vmem>>, vector<1x256x32xf32>
    %36 = vector.shape_cast %35 : vector<1x256x32xf32> to vector<256x32xf32>
    %37 = vector.shape_cast %34 : vector<256x32xf32> to vector<1x256x32xf32>
    tpu.vector_store %arg7[%c5_35, %c0_36, %c0_37], %37 {strides = array<i32>} : memref<16x256x32xf32, #tpu.memory_space<vmem>>, vector<1x256x32xf32>,
    %c6 = arith.constant 6 : index
    %c0_38 = arith.constant 0 : index
    %c0_39 = arith.constant 0 : index
    %38 = vector.load %arg4[%c6, %c0_38, %c0_39] : memref<16x16x32xf32, #tpu.memory_space<vmem>>, vector<1x16x32xf32>
    %39 = vector.shape_cast %38 : vector<1x16x32xf32> to vector<16x32xf32>
    %cst_40 = arith.constant dense<0.000000e+00> : vector<256x32xf32>
    %40 = tpu.matmul %1, %39, %cst_40 {dimension_numbers = #tpu.dot_dimension_numbers<[1], [0], [0], [1], [0, 0, 1, 1], [], []>} : vector<256x16xf32>, vector<16x32xf32>, vector<256x32xf32> -> vector<256x32xf32>
    %c6_41 = arith.constant 6 : index
    %c0_42 = arith.constant 0 : index
    %c0_43 = arith.constant 0 : index
    %41 = vector.load %arg7[%c6_41, %c0_42, %c0_43] : memref<16x256x32xf32, #tpu.memory_space<vmem>>, vector<1x256x32xf32>
    %42 = vector.shape_cast %41 : vector<1x256x32xf32> to vector<256x32xf32>
    %43 = vector.shape_cast %40 : vector<256x32xf32> to vector<1x256x32xf32>
    tpu.vector_store %arg7[%c6_41, %c0_42, %c0_43], %43 {strides = array<i32>} : memref<16x256x32xf32, #tpu.memory_space<vmem>>, vector<1x256x32xf32>,
    %c7 = arith.constant 7 : index
    %c0_44 = arith.constant 0 : index
    %c0_45 = arith.constant 0 : index
    %44 = vector.load %arg4[%c7, %c0_44, %c0_45] : memref<16x16x32xf32, #tpu.memory_space<vmem>>, vector<1x16x32xf32>
    %45 = vector.shape_cast %44 : vector<1x16x32xf32> to vector<16x32xf32>
    %cst_46 = arith.constant dense<0.000000e+00> : vector<256x32xf32>
    %46 = tpu.matmul %1, %45, %cst_46 {dimension_numbers = #tpu.dot_dimension_numbers<[1], [0], [0], [1], [0, 0, 1, 1], [], []>} : vector<256x16xf32>, vector<16x32xf32>, vector<256x32xf32> -> vector<256x32xf32>
    %c7_47 = arith.constant 7 : index
    %c0_48 = arith.constant 0 : index
    %c0_49 = arith.constant 0 : index
    %47 = vector.load %arg7[%c7_47, %c0_48, %c0_49] : memref<16x256x32xf32, #tpu.memory_space<vmem>>, vector<1x256x32xf32>
    %48 = vector.shape_cast %47 : vector<1x256x32xf32> to vector<256x32xf32>
    %49 = vector.shape_cast %46 : vector<256x32xf32> to vector<1x256x32xf32>
    tpu.vector_store %arg7[%c7_47, %c0_48, %c0_49], %49 {strides = array<i32>} : memref<16x256x32xf32, #tpu.memory_space<vmem>>, vector<1x256x32xf32>,
    %c8 = arith.constant 8 : index
    %c0_50 = arith.constant 0 : index
    %c0_51 = arith.constant 0 : index
    %50 = vector.load %arg4[%c8, %c0_50, %c0_51] : memref<16x16x32xf32, #tpu.memory_space<vmem>>, vector<1x16x32xf32>
    %51 = vector.shape_cast %50 : vector<1x16x32xf32> to vector<16x32xf32>
    %cst_52 = arith.constant dense<0.000000e+00> : vector<256x32xf32>
    %52 = tpu.matmul %1, %51, %cst_52 {dimension_numbers = #tpu.dot_dimension_numbers<[1], [0], [0], [1], [0, 0, 1, 1], [], []>} : vector<256x16xf32>, vector<16x32xf32>, vector<256x32xf32> -> vector<256x32xf32>
    %c8_53 = arith.constant 8 : index
    %c0_54 = arith.constant 0 : index
    %c0_55 = arith.constant 0 : index
    %53 = vector.load %arg7[%c8_53, %c0_54, %c0_55] : memref<16x256x32xf32, #tpu.memory_space<vmem>>, vector<1x256x32xf32>
    %54 = vector.shape_cast %53 : vector<1x256x32xf32> to vector<256x32xf32>
    %55 = vector.shape_cast %52 : vector<256x32xf32> to vector<1x256x32xf32>
    tpu.vector_store %arg7[%c8_53, %c0_54, %c0_55], %55 {strides = array<i32>} : memref<16x256x32xf32, #tpu.memory_space<vmem>>, vector<1x256x32xf32>,
    %c9 = arith.constant 9 : index
    %c0_56 = arith.constant 0 : index
    %c0_57 = arith.constant 0 : index
    %56 = vector.load %arg4[%c9, %c0_56, %c0_57] : memref<16x16x32xf32, #tpu.memory_space<vmem>>, vector<1x16x32xf32>
    %57 = vector.shape_cast %56 : vector<1x16x32xf32> to vector<16x32xf32>
    %cst_58 = arith.constant dense<0.000000e+00> : vector<256x32xf32>
    %58 = tpu.matmul %1, %57, %cst_58 {dimension_numbers = #tpu.dot_dimension_numbers<[1], [0], [0], [1], [0, 0, 1, 1], [], []>} : vector<256x16xf32>, vector<16x32xf32>, vector<256x32xf32> -> vector<256x32xf32>
    %c9_59 = arith.constant 9 : index
    %c0_60 = arith.constant 0 : index
    %c0_61 = arith.constant 0 : index
    %59 = vector.load %arg7[%c9_59, %c0_60, %c0_61] : memref<16x256x32xf32, #tpu.memory_space<vmem>>, vector<1x256x32xf32>
    %60 = vector.shape_cast %59 : vector<1x256x32xf32> to vector<256x32xf32>
    %61 = vector.shape_cast %58 : vector<256x32xf32> to vector<1x256x32xf32>
    tpu.vector_store %arg7[%c9_59, %c0_60, %c0_61], %61 {strides = array<i32>} : memref<16x256x32xf32, #tpu.memory_space<vmem>>, vector<1x256x32xf32>,
    %c10 = arith.constant 10 : index
    %c0_62 = arith.constant 0 : index
    %c0_63 = arith.constant 0 : index
    %62 = vector.load %arg4[%c10, %c0_62, %c0_63] : memref<16x16x32xf32, #tpu.memory_space<vmem>>, vector<1x16x32xf32>
    %63 = vector.shape_cast %62 : vector<1x16x32xf32> to vector<16x32xf32>
    %cst_64 = arith.constant dense<0.000000e+00> : vector<256x32xf32>
    %64 = tpu.matmul %1, %63, %cst_64 {dimension_numbers = #tpu.dot_dimension_numbers<[1], [0], [0], [1], [0, 0, 1, 1], [], []>} : vector<256x16xf32>, vector<16x32xf32>, vector<256x32xf32> -> vector<256x32xf32>
    %c10_65 = arith.constant 10 : index
    %c0_66 = arith.constant 0 : index
    %c0_67 = arith.constant 0 : index
    %65 = vector.load %arg7[%c10_65, %c0_66, %c0_67] : memref<16x256x32xf32, #tpu.memory_space<vmem>>, vector<1x256x32xf32>
    %66 = vector.shape_cast %65 : vector<1x256x32xf32> to vector<256x32xf32>
    %67 = vector.shape_cast %64 : vector<256x32xf32> to vector<1x256x32xf32>
    tpu.vector_store %arg7[%c10_65, %c0_66, %c0_67], %67 {strides = array<i32>} : memref<16x256x32xf32, #tpu.memory_space<vmem>>, vector<1x256x32xf32>,
    %c11 = arith.constant 11 : index
    %c0_68 = arith.constant 0 : index
    %c0_69 = arith.constant 0 : index
    %68 = vector.load %arg4[%c11, %c0_68, %c0_69] : memref<16x16x32xf32, #tpu.memory_space<vmem>>, vector<1x16x32xf32>
    %69 = vector.shape_cast %68 : vector<1x16x32xf32> to vector<16x32xf32>
    %cst_70 = arith.constant dense<0.000000e+00> : vector<256x32xf32>
    %70 = tpu.matmul %1, %69, %cst_70 {dimension_numbers = #tpu.dot_dimension_numbers<[1], [0], [0], [1], [0, 0, 1, 1], [], []>} : vector<256x16xf32>, vector<16x32xf32>, vector<256x32xf32> -> vector<256x32xf32>
    %c11_71 = arith.constant 11 : index
    %c0_72 = arith.constant 0 : index
    %c0_73 = arith.constant 0 : index
    %71 = vector.load %arg7[%c11_71, %c0_72, %c0_73] : memref<16x256x32xf32, #tpu.memory_space<vmem>>, vector<1x256x32xf32>
    %72 = vector.shape_cast %71 : vector<1x256x32xf32> to vector<256x32xf32>
    %73 = vector.shape_cast %70 : vector<256x32xf32> to vector<1x256x32xf32>
    tpu.vector_store %arg7[%c11_71, %c0_72, %c0_73], %73 {strides = array<i32>} : memref<16x256x32xf32, #tpu.memory_space<vmem>>, vector<1x256x32xf32>,
    %c12 = arith.constant 12 : index
    %c0_74 = arith.constant 0 : index
    %c0_75 = arith.constant 0 : index
    %74 = vector.load %arg4[%c12, %c0_74, %c0_75] : memref<16x16x32xf32, #tpu.memory_space<vmem>>, vector<1x16x32xf32>
    %75 = vector.shape_cast %74 : vector<1x16x32xf32> to vector<16x32xf32>
    %cst_76 = arith.constant dense<0.000000e+00> : vector<256x32xf32>
    %76 = tpu.matmul %1, %75, %cst_76 {dimension_numbers = #tpu.dot_dimension_numbers<[1], [0], [0], [1], [0, 0, 1, 1], [], []>} : vector<256x16xf32>, vector<16x32xf32>, vector<256x32xf32> -> vector<256x32xf32>
    %c12_77 = arith.constant 12 : index
    %c0_78 = arith.constant 0 : index
    %c0_79 = arith.constant 0 : index
    %77 = vector.load %arg7[%c12_77, %c0_78, %c0_79] : memref<16x256x32xf32, #tpu.memory_space<vmem>>, vector<1x256x32xf32>
    %78 = vector.shape_cast %77 : vector<1x256x32xf32> to vector<256x32xf32>
    %79 = vector.shape_cast %76 : vector<256x32xf32> to vector<1x256x32xf32>
    tpu.vector_store %arg7[%c12_77, %c0_78, %c0_79], %79 {strides = array<i32>} : memref<16x256x32xf32, #tpu.memory_space<vmem>>, vector<1x256x32xf32>,
    %c13 = arith.constant 13 : index
    %c0_80 = arith.constant 0 : index
    %c0_81 = arith.constant 0 : index
    %80 = vector.load %arg4[%c13, %c0_80, %c0_81] : memref<16x16x32xf32, #tpu.memory_space<vmem>>, vector<1x16x32xf32>
    %81 = vector.shape_cast %80 : vector<1x16x32xf32> to vector<16x32xf32>
    %cst_82 = arith.constant dense<0.000000e+00> : vector<256x32xf32>
    %82 = tpu.matmul %1, %81, %cst_82 {dimension_numbers = #tpu.dot_dimension_numbers<[1], [0], [0], [1], [0, 0, 1, 1], [], []>} : vector<256x16xf32>, vector<16x32xf32>, vector<256x32xf32> -> vector<256x32xf32>
    %c13_83 = arith.constant 13 : index
    %c0_84 = arith.constant 0 : index
    %c0_85 = arith.constant 0 : index
    %83 = vector.load %arg7[%c13_83, %c0_84, %c0_85] : memref<16x256x32xf32, #tpu.memory_space<vmem>>, vector<1x256x32xf32>
    %84 = vector.shape_cast %83 : vector<1x256x32xf32> to vector<256x32xf32>
    %85 = vector.shape_cast %82 : vector<256x32xf32> to vector<1x256x32xf32>
    tpu.vector_store %arg7[%c13_83, %c0_84, %c0_85], %85 {strides = array<i32>} : memref<16x256x32xf32, #tpu.memory_space<vmem>>, vector<1x256x32xf32>,
    %c14 = arith.constant 14 : index
    %c0_86 = arith.constant 0 : index
    %c0_87 = arith.constant 0 : index
    %86 = vector.load %arg4[%c14, %c0_86, %c0_87] : memref<16x16x32xf32, #tpu.memory_space<vmem>>, vector<1x16x32xf32>
    %87 = vector.shape_cast %86 : vector<1x16x32xf32> to vector<16x32xf32>
    %cst_88 = arith.constant dense<0.000000e+00> : vector<256x32xf32>
    %88 = tpu.matmul %1, %87, %cst_88 {dimension_numbers = #tpu.dot_dimension_numbers<[1], [0], [0], [1], [0, 0, 1, 1], [], []>} : vector<256x16xf32>, vector<16x32xf32>, vector<256x32xf32> -> vector<256x32xf32>
    %c14_89 = arith.constant 14 : index
    %c0_90 = arith.constant 0 : index
    %c0_91 = arith.constant 0 : index
    %89 = vector.load %arg7[%c14_89, %c0_90, %c0_91] : memref<16x256x32xf32, #tpu.memory_space<vmem>>, vector<1x256x32xf32>
    %90 = vector.shape_cast %89 : vector<1x256x32xf32> to vector<256x32xf32>
    %91 = vector.shape_cast %88 : vector<256x32xf32> to vector<1x256x32xf32>
    tpu.vector_store %arg7[%c14_89, %c0_90, %c0_91], %91 {strides = array<i32>} : memref<16x256x32xf32, #tpu.memory_space<vmem>>, vector<1x256x32xf32>,
    %c15 = arith.constant 15 : index
    %c0_92 = arith.constant 0 : index
    %c0_93 = arith.constant 0 : index
    %92 = vector.load %arg4[%c15, %c0_92, %c0_93] : memref<16x16x32xf32, #tpu.memory_space<vmem>>, vector<1x16x32xf32>
    %93 = vector.shape_cast %92 : vector<1x16x32xf32> to vector<16x32xf32>
    %cst_94 = arith.constant dense<0.000000e+00> : vector<256x32xf32>
    %94 = tpu.matmul %1, %93, %cst_94 {dimension_numbers = #tpu.dot_dimension_numbers<[1], [0], [0], [1], [0, 0, 1, 1], [], []>} : vector<256x16xf32>, vector<16x32xf32>, vector<256x32xf32> -> vector<256x32xf32>
    %c15_95 = arith.constant 15 : index
    %c0_96 = arith.constant 0 : index
    %c0_97 = arith.constant 0 : index
    %95 = vector.load %arg7[%c15_95, %c0_96, %c0_97] : memref<16x256x32xf32, #tpu.memory_space<vmem>>, vector<1x256x32xf32>
    %96 = vector.shape_cast %95 : vector<1x256x32xf32> to vector<256x32xf32>
    %97 = vector.shape_cast %94 : vector<256x32xf32> to vector<1x256x32xf32>
    tpu.vector_store %arg7[%c15_95, %c0_96, %c0_97], %97 {strides = array<i32>} : memref<16x256x32xf32, #tpu.memory_space<vmem>>, vector<1x256x32xf32>,
    %c0_98 = arith.constant 0 : index
    %c0_99 = arith.constant 0 : index
    %c0_100 = arith.constant 0 : index
    %98 = vector.load %arg3[%c0_98, %c0_99, %c0_100] : memref<1x16x256xf32, #tpu.memory_space<vmem>>, vector<1x16x256xf32>
    %99 = vector.shape_cast %98 : vector<1x16x256xf32> to vector<16x256xf32>
    %c0_101 = arith.constant 0 : index
    %c0_102 = arith.constant 0 : index
    %100 = vector.load %arg5[%c0_101, %c0_102] : memref<1x32xf32, #tpu.memory_space<vmem>>, vector<1x32xf32>
    %c0_103 = arith.constant 0 : index
    %c0_104 = arith.constant 0 : index
    %c0_105 = arith.constant 0 : index
    %101 = vector.load %arg7[%c0_103, %c0_104, %c0_105] : memref<16x256x32xf32, #tpu.memory_space<vmem>>, vector<16x16x32xf32>
    %102 = vector.shape_cast %101 : vector<16x16x32xf32> to vector<256x32xf32>
    %cst_106 = arith.constant dense<0.000000e+00> : vector<16x32xf32>
    %103 = tpu.matmul %99, %102, %cst_106 {dimension_numbers = #tpu.dot_dimension_numbers<[1], [0], [0], [1], [0, 0, 1, 1], [], []>} : vector<16x256xf32>, vector<256x32xf32>, vector<16x32xf32> -> vector<16x32xf32>
    %104 = vector.broadcast %100 : vector<1x32xf32> to vector<16x32xf32>
    %105 = arith.addf %103, %104 : vector<16x32xf32>
    %c0_107 = arith.constant 0 : index
    %c0_108 = arith.constant 0 : index
    %c0_109 = arith.constant 0 : index
    %c0_110 = arith.constant 0 : index
    %106 = vector.load %arg6[%c0_107, %c0_108, %c0_109, %c0_110] : memref<1x16x16x32xf32, #tpu.memory_space<vmem>>, vector<1x1x16x32xf32>
    %107 = vector.shape_cast %106 : vector<1x1x16x32xf32> to vector<16x32xf32>
    %108 = vector.shape_cast %105 : vector<16x32xf32> to vector<1x1x16x32xf32>
    tpu.vector_store %arg6[%c0_107, %c0_108, %c0_109, %c0_110], %108 {strides = array<i32>} : memref<1x16x16x32xf32, #tpu.memory_space<vmem>>, vector<1x1x16x32xf32>,
    %c0_111 = arith.constant 0 : index
    %c16 = arith.constant 16 : index
    %c0_112 = arith.constant 0 : index
    %109 = vector.load %arg7[%c0_111, %c16, %c0_112] : memref<16x256x32xf32, #tpu.memory_space<vmem>>, vector<16x16x32xf32>
    %110 = vector.shape_cast %109 : vector<16x16x32xf32> to vector<256x32xf32>
    %cst_113 = arith.constant dense<0.000000e+00> : vector<16x32xf32>
    %111 = tpu.matmul %99, %110, %cst_113 {dimension_numbers = #tpu.dot_dimension_numbers<[1], [0], [0], [1], [0, 0, 1, 1], [], []>} : vector<16x256xf32>, vector<256x32xf32>, vector<16x32xf32> -> vector<16x32xf32>
    %112 = vector.broadcast %100 : vector<1x32xf32> to vector<16x32xf32>
    %113 = arith.addf %111, %112 : vector<16x32xf32>
    %c0_114 = arith.constant 0 : index
    %c1_115 = arith.constant 1 : index
    %c0_116 = arith.constant 0 : index
    %c0_117 = arith.constant 0 : index
    %114 = vector.load %arg6[%c0_114, %c1_115, %c0_116, %c0_117] : memref<1x16x16x32xf32, #tpu.memory_space<vmem>>, vector<1x1x16x32xf32>
    %115 = vector.shape_cast %114 : vector<1x1x16x32xf32> to vector<16x32xf32>
    %116 = vector.shape_cast %113 : vector<16x32xf32> to vector<1x1x16x32xf32>
    tpu.vector_store %arg6[%c0_114, %c1_115, %c0_116, %c0_117], %116 {strides = array<i32>} : memref<1x16x16x32xf32, #tpu.memory_space<vmem>>, vector<1x1x16x32xf32>,
    %c0_118 = arith.constant 0 : index
    %c32 = arith.constant 32 : index
    %c0_119 = arith.constant 0 : index
    %117 = vector.load %arg7[%c0_118, %c32, %c0_119] : memref<16x256x32xf32, #tpu.memory_space<vmem>>, vector<16x16x32xf32>
    %118 = vector.shape_cast %117 : vector<16x16x32xf32> to vector<256x32xf32>
    %cst_120 = arith.constant dense<0.000000e+00> : vector<16x32xf32>
    %119 = tpu.matmul %99, %118, %cst_120 {dimension_numbers = #tpu.dot_dimension_numbers<[1], [0], [0], [1], [0, 0, 1, 1], [], []>} : vector<16x256xf32>, vector<256x32xf32>, vector<16x32xf32> -> vector<16x32xf32>
    %120 = vector.broadcast %100 : vector<1x32xf32> to vector<16x32xf32>
    %121 = arith.addf %119, %120 : vector<16x32xf32>
    %c0_121 = arith.constant 0 : index
    %c2_122 = arith.constant 2 : index
    %c0_123 = arith.constant 0 : index
    %c0_124 = arith.constant 0 : index
    %122 = vector.load %arg6[%c0_121, %c2_122, %c0_123, %c0_124] : memref<1x16x16x32xf32, #tpu.memory_space<vmem>>, vector<1x1x16x32xf32>
    %123 = vector.shape_cast %122 : vector<1x1x16x32xf32> to vector<16x32xf32>
    %124 = vector.shape_cast %121 : vector<16x32xf32> to vector<1x1x16x32xf32>
    tpu.vector_store %arg6[%c0_121, %c2_122, %c0_123, %c0_124], %124 {strides = array<i32>} : memref<1x16x16x32xf32, #tpu.memory_space<vmem>>, vector<1x1x16x32xf32>,
    %c0_125 = arith.constant 0 : index
    %c48 = arith.constant 48 : index
    %c0_126 = arith.constant 0 : index
    %125 = vector.load %arg7[%c0_125, %c48, %c0_126] : memref<16x256x32xf32, #tpu.memory_space<vmem>>, vector<16x16x32xf32>
    %126 = vector.shape_cast %125 : vector<16x16x32xf32> to vector<256x32xf32>
    %cst_127 = arith.constant dense<0.000000e+00> : vector<16x32xf32>
    %127 = tpu.matmul %99, %126, %cst_127 {dimension_numbers = #tpu.dot_dimension_numbers<[1], [0], [0], [1], [0, 0, 1, 1], [], []>} : vector<16x256xf32>, vector<256x32xf32>, vector<16x32xf32> -> vector<16x32xf32>
    %128 = vector.broadcast %100 : vector<1x32xf32> to vector<16x32xf32>
    %129 = arith.addf %127, %128 : vector<16x32xf32>
    %c0_128 = arith.constant 0 : index
    %c3_129 = arith.constant 3 : index
    %c0_130 = arith.constant 0 : index
    %c0_131 = arith.constant 0 : index
    %130 = vector.load %arg6[%c0_128, %c3_129, %c0_130, %c0_131] : memref<1x16x16x32xf32, #tpu.memory_space<vmem>>, vector<1x1x16x32xf32>
    %131 = vector.shape_cast %130 : vector<1x1x16x32xf32> to vector<16x32xf32>
    %132 = vector.shape_cast %129 : vector<16x32xf32> to vector<1x1x16x32xf32>
    tpu.vector_store %arg6[%c0_128, %c3_129, %c0_130, %c0_131], %132 {strides = array<i32>} : memref<1x16x16x32xf32, #tpu.memory_space<vmem>>, vector<1x1x16x32xf32>,
    %c0_132 = arith.constant 0 : index
    %c64 = arith.constant 64 : index
    %c0_133 = arith.constant 0 : index
    %133 = vector.load %arg7[%c0_132, %c64, %c0_133] : memref<16x256x32xf32, #tpu.memory_space<vmem>>, vector<16x16x32xf32>
    %134 = vector.shape_cast %133 : vector<16x16x32xf32> to vector<256x32xf32>
    %cst_134 = arith.constant dense<0.000000e+00> : vector<16x32xf32>
    %135 = tpu.matmul %99, %134, %cst_134 {dimension_numbers = #tpu.dot_dimension_numbers<[1], [0], [0], [1], [0, 0, 1, 1], [], []>} : vector<16x256xf32>, vector<256x32xf32>, vector<16x32xf32> -> vector<16x32xf32>
    %136 = vector.broadcast %100 : vector<1x32xf32> to vector<16x32xf32>
    %137 = arith.addf %135, %136 : vector<16x32xf32>
    %c0_135 = arith.constant 0 : index
    %c4_136 = arith.constant 4 : index
    %c0_137 = arith.constant 0 : index
    %c0_138 = arith.constant 0 : index
    %138 = vector.load %arg6[%c0_135, %c4_136, %c0_137, %c0_138] : memref<1x16x16x32xf32, #tpu.memory_space<vmem>>, vector<1x1x16x32xf32>
    %139 = vector.shape_cast %138 : vector<1x1x16x32xf32> to vector<16x32xf32>
    %140 = vector.shape_cast %137 : vector<16x32xf32> to vector<1x1x16x32xf32>
    tpu.vector_store %arg6[%c0_135, %c4_136, %c0_137, %c0_138], %140 {strides = array<i32>} : memref<1x16x16x32xf32, #tpu.memory_space<vmem>>, vector<1x1x16x32xf32>,
    %c0_139 = arith.constant 0 : index
    %c80 = arith.constant 80 : index
    %c0_140 = arith.constant 0 : index
    %141 = vector.load %arg7[%c0_139, %c80, %c0_140] : memref<16x256x32xf32, #tpu.memory_space<vmem>>, vector<16x16x32xf32>
    %142 = vector.shape_cast %141 : vector<16x16x32xf32> to vector<256x32xf32>
    %cst_141 = arith.constant dense<0.000000e+00> : vector<16x32xf32>
    %143 = tpu.matmul %99, %142, %cst_141 {dimension_numbers = #tpu.dot_dimension_numbers<[1], [0], [0], [1], [0, 0, 1, 1], [], []>} : vector<16x256xf32>, vector<256x32xf32>, vector<16x32xf32> -> vector<16x32xf32>
    %144 = vector.broadcast %100 : vector<1x32xf32> to vector<16x32xf32>
    %145 = arith.addf %143, %144 : vector<16x32xf32>
    %c0_142 = arith.constant 0 : index
    %c5_143 = arith.constant 5 : index
    %c0_144 = arith.constant 0 : index
    %c0_145 = arith.constant 0 : index
    %146 = vector.load %arg6[%c0_142, %c5_143, %c0_144, %c0_145] : memref<1x16x16x32xf32, #tpu.memory_space<vmem>>, vector<1x1x16x32xf32>
    %147 = vector.shape_cast %146 : vector<1x1x16x32xf32> to vector<16x32xf32>
    %148 = vector.shape_cast %145 : vector<16x32xf32> to vector<1x1x16x32xf32>
    tpu.vector_store %arg6[%c0_142, %c5_143, %c0_144, %c0_145], %148 {strides = array<i32>} : memref<1x16x16x32xf32, #tpu.memory_space<vmem>>, vector<1x1x16x32xf32>,
    %c0_146 = arith.constant 0 : index
    %c96 = arith.constant 96 : index
    %c0_147 = arith.constant 0 : index
    %149 = vector.load %arg7[%c0_146, %c96, %c0_147] : memref<16x256x32xf32, #tpu.memory_space<vmem>>, vector<16x16x32xf32>
    %150 = vector.shape_cast %149 : vector<16x16x32xf32> to vector<256x32xf32>
    %cst_148 = arith.constant dense<0.000000e+00> : vector<16x32xf32>
    %151 = tpu.matmul %99, %150, %cst_148 {dimension_numbers = #tpu.dot_dimension_numbers<[1], [0], [0], [1], [0, 0, 1, 1], [], []>} : vector<16x256xf32>, vector<256x32xf32>, vector<16x32xf32> -> vector<16x32xf32>
    %152 = vector.broadcast %100 : vector<1x32xf32> to vector<16x32xf32>
    %153 = arith.addf %151, %152 : vector<16x32xf32>
    %c0_149 = arith.constant 0 : index
    %c6_150 = arith.constant 6 : index
    %c0_151 = arith.constant 0 : index
    %c0_152 = arith.constant 0 : index
    %154 = vector.load %arg6[%c0_149, %c6_150, %c0_151, %c0_152] : memref<1x16x16x32xf32, #tpu.memory_space<vmem>>, vector<1x1x16x32xf32>
    %155 = vector.shape_cast %154 : vector<1x1x16x32xf32> to vector<16x32xf32>
    %156 = vector.shape_cast %153 : vector<16x32xf32> to vector<1x1x16x32xf32>
    tpu.vector_store %arg6[%c0_149, %c6_150, %c0_151, %c0_152], %156 {strides = array<i32>} : memref<1x16x16x32xf32, #tpu.memory_space<vmem>>, vector<1x1x16x32xf32>,
    %c0_153 = arith.constant 0 : index
    %c112 = arith.constant 112 : index
    %c0_154 = arith.constant 0 : index
    %157 = vector.load %arg7[%c0_153, %c112, %c0_154] : memref<16x256x32xf32, #tpu.memory_space<vmem>>, vector<16x16x32xf32>
    %158 = vector.shape_cast %157 : vector<16x16x32xf32> to vector<256x32xf32>
    %cst_155 = arith.constant dense<0.000000e+00> : vector<16x32xf32>
    %159 = tpu.matmul %99, %158, %cst_155 {dimension_numbers = #tpu.dot_dimension_numbers<[1], [0], [0], [1], [0, 0, 1, 1], [], []>} : vector<16x256xf32>, vector<256x32xf32>, vector<16x32xf32> -> vector<16x32xf32>
    %160 = vector.broadcast %100 : vector<1x32xf32> to vector<16x32xf32>
    %161 = arith.addf %159, %160 : vector<16x32xf32>
    %c0_156 = arith.constant 0 : index
    %c7_157 = arith.constant 7 : index
    %c0_158 = arith.constant 0 : index
    %c0_159 = arith.constant 0 : index
    %162 = vector.load %arg6[%c0_156, %c7_157, %c0_158, %c0_159] : memref<1x16x16x32xf32, #tpu.memory_space<vmem>>, vector<1x1x16x32xf32>
    %163 = vector.shape_cast %162 : vector<1x1x16x32xf32> to vector<16x32xf32>
    %164 = vector.shape_cast %161 : vector<16x32xf32> to vector<1x1x16x32xf32>
    tpu.vector_store %arg6[%c0_156, %c7_157, %c0_158, %c0_159], %164 {strides = array<i32>} : memref<1x16x16x32xf32, #tpu.memory_space<vmem>>, vector<1x1x16x32xf32>,
    %c0_160 = arith.constant 0 : index
    %c128 = arith.constant 128 : index
    %c0_161 = arith.constant 0 : index
    %165 = vector.load %arg7[%c0_160, %c128, %c0_161] : memref<16x256x32xf32, #tpu.memory_space<vmem>>, vector<16x16x32xf32>
    %166 = vector.shape_cast %165 : vector<16x16x32xf32> to vector<256x32xf32>
    %cst_162 = arith.constant dense<0.000000e+00> : vector<16x32xf32>
    %167 = tpu.matmul %99, %166, %cst_162 {dimension_numbers = #tpu.dot_dimension_numbers<[1], [0], [0], [1], [0, 0, 1, 1], [], []>} : vector<16x256xf32>, vector<256x32xf32>, vector<16x32xf32> -> vector<16x32xf32>
    %168 = vector.broadcast %100 : vector<1x32xf32> to vector<16x32xf32>
    %169 = arith.addf %167, %168 : vector<16x32xf32>
    %c0_163 = arith.constant 0 : index
    %c8_164 = arith.constant 8 : index
    %c0_165 = arith.constant 0 : index
    %c0_166 = arith.constant 0 : index
    %170 = vector.load %arg6[%c0_163, %c8_164, %c0_165, %c0_166] : memref<1x16x16x32xf32, #tpu.memory_space<vmem>>, vector<1x1x16x32xf32>
    %171 = vector.shape_cast %170 : vector<1x1x16x32xf32> to vector<16x32xf32>
    %172 = vector.shape_cast %169 : vector<16x32xf32> to vector<1x1x16x32xf32>
    tpu.vector_store %arg6[%c0_163, %c8_164, %c0_165, %c0_166], %172 {strides = array<i32>} : memref<1x16x16x32xf32, #tpu.memory_space<vmem>>, vector<1x1x16x32xf32>,
    %c0_167 = arith.constant 0 : index
    %c144 = arith.constant 144 : index
    %c0_168 = arith.constant 0 : index
    %173 = vector.load %arg7[%c0_167, %c144, %c0_168] : memref<16x256x32xf32, #tpu.memory_space<vmem>>, vector<16x16x32xf32>
    %174 = vector.shape_cast %173 : vector<16x16x32xf32> to vector<256x32xf32>
    %cst_169 = arith.constant dense<0.000000e+00> : vector<16x32xf32>
    %175 = tpu.matmul %99, %174, %cst_169 {dimension_numbers = #tpu.dot_dimension_numbers<[1], [0], [0], [1], [0, 0, 1, 1], [], []>} : vector<16x256xf32>, vector<256x32xf32>, vector<16x32xf32> -> vector<16x32xf32>
    %176 = vector.broadcast %100 : vector<1x32xf32> to vector<16x32xf32>
    %177 = arith.addf %175, %176 : vector<16x32xf32>
    %c0_170 = arith.constant 0 : index
    %c9_171 = arith.constant 9 : index
    %c0_172 = arith.constant 0 : index
    %c0_173 = arith.constant 0 : index
    %178 = vector.load %arg6[%c0_170, %c9_171, %c0_172, %c0_173] : memref<1x16x16x32xf32, #tpu.memory_space<vmem>>, vector<1x1x16x32xf32>
    %179 = vector.shape_cast %178 : vector<1x1x16x32xf32> to vector<16x32xf32>
    %180 = vector.shape_cast %177 : vector<16x32xf32> to vector<1x1x16x32xf32>
    tpu.vector_store %arg6[%c0_170, %c9_171, %c0_172, %c0_173], %180 {strides = array<i32>} : memref<1x16x16x32xf32, #tpu.memory_space<vmem>>, vector<1x1x16x32xf32>,
    %c0_174 = arith.constant 0 : index
    %c160 = arith.constant 160 : index
    %c0_175 = arith.constant 0 : index
    %181 = vector.load %arg7[%c0_174, %c160, %c0_175] : memref<16x256x32xf32, #tpu.memory_space<vmem>>, vector<16x16x32xf32>
    %182 = vector.shape_cast %181 : vector<16x16x32xf32> to vector<256x32xf32>
    %cst_176 = arith.constant dense<0.000000e+00> : vector<16x32xf32>
    %183 = tpu.matmul %99, %182, %cst_176 {dimension_numbers = #tpu.dot_dimension_numbers<[1], [0], [0], [1], [0, 0, 1, 1], [], []>} : vector<16x256xf32>, vector<256x32xf32>, vector<16x32xf32> -> vector<16x32xf32>
    %184 = vector.broadcast %100 : vector<1x32xf32> to vector<16x32xf32>
    %185 = arith.addf %183, %184 : vector<16x32xf32>
    %c0_177 = arith.constant 0 : index
    %c10_178 = arith.constant 10 : index
    %c0_179 = arith.constant 0 : index
    %c0_180 = arith.constant 0 : index
    %186 = vector.load %arg6[%c0_177, %c10_178, %c0_179, %c0_180] : memref<1x16x16x32xf32, #tpu.memory_space<vmem>>, vector<1x1x16x32xf32>
    %187 = vector.shape_cast %186 : vector<1x1x16x32xf32> to vector<16x32xf32>
    %188 = vector.shape_cast %185 : vector<16x32xf32> to vector<1x1x16x32xf32>
    tpu.vector_store %arg6[%c0_177, %c10_178, %c0_179, %c0_180], %188 {strides = array<i32>} : memref<1x16x16x32xf32, #tpu.memory_space<vmem>>, vector<1x1x16x32xf32>,
    %c0_181 = arith.constant 0 : index
    %c176 = arith.constant 176 : index
    %c0_182 = arith.constant 0 : index
    %189 = vector.load %arg7[%c0_181, %c176, %c0_182] : memref<16x256x32xf32, #tpu.memory_space<vmem>>, vector<16x16x32xf32>
    %190 = vector.shape_cast %189 : vector<16x16x32xf32> to vector<256x32xf32>
    %cst_183 = arith.constant dense<0.000000e+00> : vector<16x32xf32>
    %191 = tpu.matmul %99, %190, %cst_183 {dimension_numbers = #tpu.dot_dimension_numbers<[1], [0], [0], [1], [0, 0, 1, 1], [], []>} : vector<16x256xf32>, vector<256x32xf32>, vector<16x32xf32> -> vector<16x32xf32>
    %192 = vector.broadcast %100 : vector<1x32xf32> to vector<16x32xf32>
    %193 = arith.addf %191, %192 : vector<16x32xf32>
    %c0_184 = arith.constant 0 : index
    %c11_185 = arith.constant 11 : index
    %c0_186 = arith.constant 0 : index
    %c0_187 = arith.constant 0 : index
    %194 = vector.load %arg6[%c0_184, %c11_185, %c0_186, %c0_187] : memref<1x16x16x32xf32, #tpu.memory_space<vmem>>, vector<1x1x16x32xf32>
    %195 = vector.shape_cast %194 : vector<1x1x16x32xf32> to vector<16x32xf32>
    %196 = vector.shape_cast %193 : vector<16x32xf32> to vector<1x1x16x32xf32>
    tpu.vector_store %arg6[%c0_184, %c11_185, %c0_186, %c0_187], %196 {strides = array<i32>} : memref<1x16x16x32xf32, #tpu.memory_space<vmem>>, vector<1x1x16x32xf32>,
    %c0_188 = arith.constant 0 : index
    %c192 = arith.constant 192 : index
    %c0_189 = arith.constant 0 : index
    %197 = vector.load %arg7[%c0_188, %c192, %c0_189] : memref<16x256x32xf32, #tpu.memory_space<vmem>>, vector<16x16x32xf32>
    %198 = vector.shape_cast %197 : vector<16x16x32xf32> to vector<256x32xf32>
    %cst_190 = arith.constant dense<0.000000e+00> : vector<16x32xf32>
    %199 = tpu.matmul %99, %198, %cst_190 {dimension_numbers = #tpu.dot_dimension_numbers<[1], [0], [0], [1], [0, 0, 1, 1], [], []>} : vector<16x256xf32>, vector<256x32xf32>, vector<16x32xf32> -> vector<16x32xf32>
    %200 = vector.broadcast %100 : vector<1x32xf32> to vector<16x32xf32>
    %201 = arith.addf %199, %200 : vector<16x32xf32>
    %c0_191 = arith.constant 0 : index
    %c12_192 = arith.constant 12 : index
    %c0_193 = arith.constant 0 : index
    %c0_194 = arith.constant 0 : index
    %202 = vector.load %arg6[%c0_191, %c12_192, %c0_193, %c0_194] : memref<1x16x16x32xf32, #tpu.memory_space<vmem>>, vector<1x1x16x32xf32>
    %203 = vector.shape_cast %202 : vector<1x1x16x32xf32> to vector<16x32xf32>
    %204 = vector.shape_cast %201 : vector<16x32xf32> to vector<1x1x16x32xf32>
    tpu.vector_store %arg6[%c0_191, %c12_192, %c0_193, %c0_194], %204 {strides = array<i32>} : memref<1x16x16x32xf32, #tpu.memory_space<vmem>>, vector<1x1x16x32xf32>,
    %c0_195 = arith.constant 0 : index
    %c208 = arith.constant 208 : index
    %c0_196 = arith.constant 0 : index
    %205 = vector.load %arg7[%c0_195, %c208, %c0_196] : memref<16x256x32xf32, #tpu.memory_space<vmem>>, vector<16x16x32xf32>
    %206 = vector.shape_cast %205 : vector<16x16x32xf32> to vector<256x32xf32>
    %cst_197 = arith.constant dense<0.000000e+00> : vector<16x32xf32>
    %207 = tpu.matmul %99, %206, %cst_197 {dimension_numbers = #tpu.dot_dimension_numbers<[1], [0], [0], [1], [0, 0, 1, 1], [], []>} : vector<16x256xf32>, vector<256x32xf32>, vector<16x32xf32> -> vector<16x32xf32>
    %208 = vector.broadcast %100 : vector<1x32xf32> to vector<16x32xf32>
    %209 = arith.addf %207, %208 : vector<16x32xf32>
    %c0_198 = arith.constant 0 : index
    %c13_199 = arith.constant 13 : index
    %c0_200 = arith.constant 0 : index
    %c0_201 = arith.constant 0 : index
    %210 = vector.load %arg6[%c0_198, %c13_199, %c0_200, %c0_201] : memref<1x16x16x32xf32, #tpu.memory_space<vmem>>, vector<1x1x16x32xf32>
    %211 = vector.shape_cast %210 : vector<1x1x16x32xf32> to vector<16x32xf32>
    %212 = vector.shape_cast %209 : vector<16x32xf32> to vector<1x1x16x32xf32>
    tpu.vector_store %arg6[%c0_198, %c13_199, %c0_200, %c0_201], %212 {strides = array<i32>} : memref<1x16x16x32xf32, #tpu.memory_space<vmem>>, vector<1x1x16x32xf32>,
    %c0_202 = arith.constant 0 : index
    %c224 = arith.constant 224 : index
    %c0_203 = arith.constant 0 : index
    %213 = vector.load %arg7[%c0_202, %c224, %c0_203] : memref<16x256x32xf32, #tpu.memory_space<vmem>>, vector<16x16x32xf32>
    %214 = vector.shape_cast %213 : vector<16x16x32xf32> to vector<256x32xf32>
    %cst_204 = arith.constant dense<0.000000e+00> : vector<16x32xf32>
    %215 = tpu.matmul %99, %214, %cst_204 {dimension_numbers = #tpu.dot_dimension_numbers<[1], [0], [0], [1], [0, 0, 1, 1], [], []>} : vector<16x256xf32>, vector<256x32xf32>, vector<16x32xf32> -> vector<16x32xf32>
    %216 = vector.broadcast %100 : vector<1x32xf32> to vector<16x32xf32>
    %217 = arith.addf %215, %216 : vector<16x32xf32>
    %c0_205 = arith.constant 0 : index
    %c14_206 = arith.constant 14 : index
    %c0_207 = arith.constant 0 : index
    %c0_208 = arith.constant 0 : index
    %218 = vector.load %arg6[%c0_205, %c14_206, %c0_207, %c0_208] : memref<1x16x16x32xf32, #tpu.memory_space<vmem>>, vector<1x1x16x32xf32>
    %219 = vector.shape_cast %218 : vector<1x1x16x32xf32> to vector<16x32xf32>
    %220 = vector.shape_cast %217 : vector<16x32xf32> to vector<1x1x16x32xf32>
    tpu.vector_store %arg6[%c0_205, %c14_206, %c0_207, %c0_208], %220 {strides = array<i32>} : memref<1x16x16x32xf32, #tpu.memory_space<vmem>>, vector<1x1x16x32xf32>,
    %c0_209 = arith.constant 0 : index
    %c240 = arith.constant 240 : index
    %c0_210 = arith.constant 0 : index
    %221 = vector.load %arg7[%c0_209, %c240, %c0_210] : memref<16x256x32xf32, #tpu.memory_space<vmem>>, vector<16x16x32xf32>
    %222 = vector.shape_cast %221 : vector<16x16x32xf32> to vector<256x32xf32>
    %cst_211 = arith.constant dense<0.000000e+00> : vector<16x32xf32>
    %223 = tpu.matmul %99, %222, %cst_211 {dimension_numbers = #tpu.dot_dimension_numbers<[1], [0], [0], [1], [0, 0, 1, 1], [], []>} : vector<16x256xf32>, vector<256x32xf32>, vector<16x32xf32> -> vector<16x32xf32>
    %224 = vector.broadcast %100 : vector<1x32xf32> to vector<16x32xf32>
    %225 = arith.addf %223, %224 : vector<16x32xf32>
    %c0_212 = arith.constant 0 : index
    %c15_213 = arith.constant 15 : index
    %c0_214 = arith.constant 0 : index
    %c0_215 = arith.constant 0 : index
    %226 = vector.load %arg6[%c0_212, %c15_213, %c0_214, %c0_215] : memref<1x16x16x32xf32, #tpu.memory_space<vmem>>, vector<1x1x16x32xf32>
    %227 = vector.shape_cast %226 : vector<1x1x16x32xf32> to vector<16x32xf32>
    %228 = vector.shape_cast %225 : vector<16x32xf32> to vector<1x1x16x32xf32>
    tpu.vector_store %arg6[%c0_212, %c15_213, %c0_214, %c0_215], %228 {strides = array<i32>} : memref<1x16x16x32xf32, #tpu.memory_space<vmem>>, vector<1x1x16x32xf32>,
    return
  }
  func.func @transform_0(%arg0: i32, %arg1: i32) -> (i32, i32, i32) {
    %c0_i32 = arith.constant 0 : i32
    %c0_i32_0 = arith.constant 0 : i32
    return %arg0, %arg1, %c0_i32 : i32, i32, i32
  }
  func.func @transform_1(%arg0: i32, %arg1: i32) -> (i32, i32, i32) {
    %c0_i32 = arith.constant 0 : i32
    %c0_i32_0 = arith.constant 0 : i32
    %c0_i32_1 = arith.constant 0 : i32
    return %arg0, %c0_i32, %c0_i32_0 : i32, i32, i32
  }
  func.func @transform_2(%arg0: i32, %arg1: i32) -> (i32, i32, i32) {
    %c0_i32 = arith.constant 0 : i32
    %c0_i32_0 = arith.constant 0 : i32
    %c0_i32_1 = arith.constant 0 : i32
    %c0_i32_2 = arith.constant 0 : i32
    return %c0_i32, %c0_i32_0, %c0_i32_1 : i32, i32, i32
  }
  func.func @transform_3(%arg0: i32, %arg1: i32) -> (i32, i32) {
    %c0_i32 = arith.constant 0 : i32
    %c0_i32_0 = arith.constant 0 : i32
    %c0_i32_1 = arith.constant 0 : i32
    return %c0_i32, %c0_i32_0 : i32, i32
  }
  func.func @transform_4(%arg0: i32, %arg1: i32) -> (i32, i32, i32, i32) {
    %c0_i32 = arith.constant 0 : i32
    %c0_i32_0 = arith.constant 0 : i32
    %c0_i32_1 = arith.constant 0 : i32
    return %arg0, %arg1, %c0_i32, %c0_i32_0 : i32, i32, i32, i32
  }
}

</mosaic_0001>

<llo_original>
// kernel: outer_product_mean.2
$region0: #{outer_product_mean.2}
  #allocation0 [shape = 'u32[]', space=smem, size = 0x4, offset = 0x4, fixed_abs, tag = 'smem constant byte address 0x4 - core index']
  #allocation1 [shape = 'u32[72,128]{1,0:T(1,128)}', space=vmem, size = 0x9000, scoped, tag = 'internal scratch']
  %s0 = inlined_call_operand.hbm [shape: f32[512,32], index: 0, kind: input, shape index: {}]
  %s1 = inlined_call_operand.vmem [shape: f32[32,16], index: 1, kind: input, shape index: {}]
  %s2 = inlined_call_operand.vmem [shape: f32[1,16], index: 2, kind: input, shape index: {}]
  %s3 = inlined_call_operand.vmem [shape: f32[512,16], index: 3, kind: output, shape index: {}]
  %s4 = sld [smem:[#allocation0]]
  $region26: #{outer_product_mean.2} parent=0
    _
  %s6 = ssub.s32 1, %s4
  %s7 = scalar_select 0, %s6, %s4
  $region1: #{outer_product_mean.2} parent=0
    #allocation2 [shape = 'u8[262144]{0}', space=vmem, size = 0x40000, scoped, tag = 'input window, operand 0, single buffered']
    #allocation3 [shape = 's32[1]{0}', space=sflag, size = 0x4, scoped, tag = 'scoped memory for outer_product_mean.2']
    %8 = vsyncpa [#allocation3], 0
    // Predicated region
    $region2: #{outer_product_mean.2} parent=1 // pred_check
      _
    $region3: #{outer_product_mean.2} parent=1 // pred_check_branch
      %10 = sbr.rel (0) target = $region5
    $region4: #{outer_product_mean.2} parent=1 // pred_region
      %12 = vsyncadd [#allocation3], 0
      %s13 = sshll.u32 %s0, 4
      %s14 = int_to_ptr.hbm [resolvable:$true] %s13
      %s15 = sshll.u32 [#allocation2], 4
      %s16 = int_to_ptr.vmem [resolvable:$true] %s15
      %21 = dma.hbm_to_vmem [thread:$0]  %s14, 8192, %s16, [#allocation3], 128, 128, 8
    $region5: #{outer_product_mean.2} parent=1 // pred_fallthru
      _
    // Predicated region
    $region6: #{outer_product_mean.2} parent=1 // pred_check
      _
    $region7: #{outer_product_mean.2} parent=1 // pred_check_branch
      %23 = sbr.rel (0) target = $region9
    $region8: #{outer_product_mean.2} parent=1 // pred_region
      _
    $region9: #{outer_product_mean.2} parent=1 // pred_fallthru
      _
    // Predicated region
    $region10: #{outer_product_mean.2} parent=1 // pred_check
      _
    $region11: #{outer_product_mean.2} parent=1 // pred_check_branch
      %25 = sbr.rel (0) target = $region13
    $region12: #{outer_product_mean.2} parent=1 // pred_region
      _
    $region13: #{outer_product_mean.2} parent=1 // pred_fallthru
      _
    // Predicated region
    $region14: #{outer_product_mean.2} parent=1 // pred_check
      _
    $region15: #{outer_product_mean.2} parent=1 // pred_check_branch
      %27 = sbr.rel (0) target = $region17
    $region16: #{outer_product_mean.2} parent=1 // pred_region
      %29 = dma.done [#allocation3], 8192
    $region17: #{outer_product_mean.2} parent=1 // pred_fallthru
      _
    %v30 = vld [vmem:[#allocation2] sm:$0xff]
    %v31 = vld [vmem:[#allocation2 + $0x8] sm:$0xff]
    %v32 = vld [vmem:[#allocation2 + $0x10] sm:$0xff]
    %v33 = vld [vmem:[#allocation2 + $0x18] sm:$0xff]
    %v34 = vld [vmem:[#allocation2 + $0x20] sm:$0xff]
    %v35 = vld [vmem:[#allocation2 + $0x28] sm:$0xff]
    %v36 = vld [vmem:[#allocation2 + $0x30] sm:$0xff]
    %v37 = vld [vmem:[#allocation2 + $0x38] sm:$0xff]
    %v38 = vld [vmem:[#allocation2 + $0x40] sm:$0xff]
    %v39 = vld [vmem:[#allocation2 + $0x48] sm:$0xff]
    %v40 = vld [vmem:[#allocation2 + $0x50] sm:$0xff]
    %v41 = vld [vmem:[#allocation2 + $0x58] sm:$0xff]
    %v42 = vld [vmem:[#allocation2 + $0x60] sm:$0xff]
    %v43 = vld [vmem:[#allocation2 + $0x68] sm:$0xff]
    %v44 = vld [vmem:[#allocation2 + $0x70] sm:$0xff]
    %v45 = vld [vmem:[#allocation2 + $0x78] sm:$0xff]
    %v46 = vld [vmem:[#allocation2 + $0x80] sm:$0xff]
    %v47 = vld [vmem:[#allocation2 + $0x88] sm:$0xff]
    %v48 = vld [vmem:[#allocation2 + $0x90] sm:$0xff]
    %v49 = vld [vmem:[#allocation2 + $0x98] sm:$0xff]
    %v50 = vld [vmem:[#allocation2 + $0xa0] sm:$0xff]
    %v51 = vld [vmem:[#allocation2 + $0xa8] sm:$0xff]
    %v52 = vld [vmem:[#allocation2 + $0xb0] sm:$0xff]
    %v53 = vld [vmem:[#allocation2 + $0xb8] sm:$0xff]
    %v54 = vld [vmem:[#allocation2 + $0xc0] sm:$0xff]
    %v55 = vld [vmem:[#allocation2 + $0xc8] sm:$0xff]
    %v56 = vld [vmem:[#allocation2 + $0xd0] sm:$0xff]
    %v57 = vld [vmem:[#allocation2 + $0xd8] sm:$0xff]
    %v58 = vld [vmem:[#allocation2 + $0xe0] sm:$0xff]
    %v59 = vld [vmem:[#allocation2 + $0xe8] sm:$0xff]
    %v60 = vld [vmem:[#allocation2 + $0xf0] sm:$0xff]
    %v61 = vld [vmem:[#allocation2 + $0xf8] sm:$0xff]
    %v62 = vld [vmem:[#allocation2 + $0x100] sm:$0xff]
    %v63 = vld [vmem:[#allocation2 + $0x108] sm:$0xff]
    %v64 = vld [vmem:[#allocation2 + $0x110] sm:$0xff]
    %v65 = vld [vmem:[#allocation2 + $0x118] sm:$0xff]
    %v66 = vld [vmem:[#allocation2 + $0x120] sm:$0xff]
    %v67 = vld [vmem:[#allocation2 + $0x128] sm:$0xff]
    %v68 = vld [vmem:[#allocation2 + $0x130] sm:$0xff]
    %v69 = vld [vmem:[#allocation2 + $0x138] sm:$0xff]
    %v70 = vld [vmem:[#allocation2 + $0x140] sm:$0xff]
    %v71 = vld [vmem:[#allocation2 + $0x148] sm:$0xff]
    %v72 = vld [vmem:[#allocation2 + $0x150] sm:$0xff]
    %v73 = vld [vmem:[#allocation2 + $0x158] sm:$0xff]
    %v74 = vld [vmem:[#allocation2 + $0x160] sm:$0xff]
    %v75 = vld [vmem:[#allocation2 + $0x168] sm:$0xff]
    %v76 = vld [vmem:[#allocation2 + $0x170] sm:$0xff]
    %v77 = vld [vmem:[#allocation2 + $0x178] sm:$0xff]
    %v78 = vld [vmem:[#allocation2 + $0x180] sm:$0xff]
    %v79 = vld [vmem:[#allocation2 + $0x188] sm:$0xff]
    %v80 = vld [vmem:[#allocation2 + $0x190] sm:$0xff]
    %v81 = vld [vmem:[#allocation2 + $0x198] sm:$0xff]
    %v82 = vld [vmem:[#allocation2 + $0x1a0] sm:$0xff]
    %v83 = vld [vmem:[#allocation2 + $0x1a8] sm:$0xff]
    %v84 = vld [vmem:[#allocation2 + $0x1b0] sm:$0xff]
    %v85 = vld [vmem:[#allocation2 + $0x1b8] sm:$0xff]
    %v86 = vld [vmem:[#allocation2 + $0x1c0] sm:$0xff]
    %v87 = vld [vmem:[#allocation2 + $0x1c8] sm:$0xff]
    %v88 = vld [vmem:[#allocation2 + $0x1d0] sm:$0xff]
    %v89 = vld [vmem:[#allocation2 + $0x1d8] sm:$0xff]
    %v90 = vld [vmem:[#allocation2 + $0x1e0] sm:$0xff]
    %v91 = vld [vmem:[#allocation2 + $0x1e8] sm:$0xff]
    %v92 = vld [vmem:[#allocation2 + $0x1f0] sm:$0xff]
    %v93 = vld [vmem:[#allocation2 + $0x1f8] sm:$0xff]
    %v94 = vld [vmem:[%s1] sm:$0xff]
    %v95 = vld [vmem:[%s1 + $0x8] sm:$0xff]
    %v96 = vld [vmem:[%s1 + $0x10] sm:$0xff]
    %v97 = vld [vmem:[%s1 + $0x18] sm:$0xff]
    %v98 = vld [vmem:[%s2] sm:$0x1]
    %v100 = vperm.slane %v98, 0
    %vm102 = vcmask 261120
    %v104 = vsel %vm102, %v30, 0
    %v107 = vsel %vm102, %v31, 0
    %v110 = vsel %vm102, %v32, 0
    %v113 = vsel %vm102, %v33, 0
    %v116 = vsel %vm102, %v34, 0
    %v119 = vsel %vm102, %v35, 0
    %v122 = vsel %vm102, %v36, 0
    %v125 = vsel %vm102, %v37, 0
    %v128 = vsel %vm102, %v38, 0
    %v131 = vsel %vm102, %v39, 0
    %v134 = vsel %vm102, %v40, 0
    %v137 = vsel %vm102, %v41, 0
    %v140 = vsel %vm102, %v42, 0
    %v143 = vsel %vm102, %v43, 0
    %v146 = vsel %vm102, %v44, 0
    %v149 = vsel %vm102, %v45, 0
    %v152 = vsel %vm102, %v46, 0
    %v155 = vsel %vm102, %v47, 0
    %v158 = vsel %vm102, %v48, 0
    %v161 = vsel %vm102, %v49, 0
    %v164 = vsel %vm102, %v50, 0
    %v167 = vsel %vm102, %v51, 0
    %v170 = vsel %vm102, %v52, 0
    %v173 = vsel %vm102, %v53, 0
    %v176 = vsel %vm102, %v54, 0
    %v179 = vsel %vm102, %v55, 0
    %v182 = vsel %vm102, %v56, 0
    %v185 = vsel %vm102, %v57, 0
    %v188 = vsel %vm102, %v58, 0
    %v191 = vsel %vm102, %v59, 0
    %v194 = vsel %vm102, %v60, 0
    %v197 = vsel %vm102, %v61, 0
    %v200 = vsel %vm102, %v62, 0
    %v203 = vsel %vm102, %v63, 0
    %v206 = vsel %vm102, %v64, 0
    %v209 = vsel %vm102, %v65, 0
    %v212 = vsel %vm102, %v66, 0
    %v215 = vsel %vm102, %v67, 0
    %v218 = vsel %vm102, %v68, 0
    %v221 = vsel %vm102, %v69, 0
    %v224 = vsel %vm102, %v70, 0
    %v227 = vsel %vm102, %v71, 0
    %v230 = vsel %vm102, %v72, 0
    %v233 = vsel %vm102, %v73, 0
    %v236 = vsel %vm102, %v74, 0
    %v239 = vsel %vm102, %v75, 0
    %v242 = vsel %vm102, %v76, 0
    %v245 = vsel %vm102, %v77, 0
    %v248 = vsel %vm102, %v78, 0
    %v251 = vsel %vm102, %v79, 0
    %v254 = vsel %vm102, %v80, 0
    %v257 = vsel %vm102, %v81, 0
    %v260 = vsel %vm102, %v82, 0
    %v263 = vsel %vm102, %v83, 0
    %v266 = vsel %vm102, %v84, 0
    %v269 = vsel %vm102, %v85, 0
    %v272 = vsel %vm102, %v86, 0
    %v275 = vsel %vm102, %v87, 0
    %v278 = vsel %vm102, %v88, 0
    %v281 = vsel %vm102, %v89, 0
    %v284 = vsel %vm102, %v90, 0
    %v287 = vsel %vm102, %v91, 0
    %v290 = vsel %vm102, %v92, 0
    %v293 = vsel %vm102, %v93, 0
    %295 = vmatpush.msra.mxu0 0.0
    %296 = vmatpush.msra.mxu0 0.0
    %297 = vmatpush.msra.mxu0 0.0
    %298 = vmatpush.msra.mxu0 0.0
    %299 = vmatpush.msra.mxu0 0.0
    %300 = vmatpush.msra.mxu0 0.0
    %301 = vmatpush.msra.mxu0 0.0
    %302 = vmatpush.msra.mxu0 0.0
    %303 = vmatpush.msra.mxu0 0.0
    %304 = vmatpush.msra.mxu0 0.0
    %305 = vmatpush.msra.mxu0 0.0
    %306 = vmatpush.msra.mxu0 0.0
    %307 = vmatpush.msra.mxu0 %v97
    %308 = vmatpush.msra.mxu0 %v96
    %309 = vmatpush.msra.mxu0 %v95
    %310 = vmatpush.msra.mxu0 %v94
    %311 = vmatmul.f32.gmra.mxu0 %v104
    %v312 = vpop.f32.mrf.mxu0
    %v313 = vadd.f32 %v100, %v312
    %314 = vmatmul.f32.gmra.mxu0 %v107
    %v315 = vpop.f32.mrf.mxu0
    %v316 = vadd.f32 %v100, %v315
    %317 = vmatmul.f32.gmra.mxu0 %v110
    %v318 = vpop.f32.mrf.mxu0
    %v319 = vadd.f32 %v100, %v318
    %320 = vmatmul.f32.gmra.mxu0 %v113
    %v321 = vpop.f32.mrf.mxu0
    %v322 = vadd.f32 %v100, %v321
    %323 = vmatmul.f32.gmra.mxu0 %v116
    %v324 = vpop.f32.mrf.mxu0
    %v325 = vadd.f32 %v100, %v324
    %326 = vmatmul.f32.gmra.mxu0 %v119
    %v327 = vpop.f32.mrf.mxu0
    %v328 = vadd.f32 %v100, %v327
    %329 = vmatmul.f32.gmra.mxu0 %v122
    %v330 = vpop.f32.mrf.mxu0
    %v331 = vadd.f32 %v100, %v330
    %332 = vmatmul.f32.gmra.mxu0 %v125
    %v333 = vpop.f32.mrf.mxu0
    %v334 = vadd.f32 %v100, %v333
    %335 = vmatmul.f32.gmra.mxu0 %v128
    %v336 = vpop.f32.mrf.mxu0
    %v337 = vadd.f32 %v100, %v336
    %338 = vmatmul.f32.gmra.mxu0 %v131
    %v339 = vpop.f32.mrf.mxu0
    %v340 = vadd.f32 %v100, %v339
    %341 = vmatmul.f32.gmra.mxu0 %v134
    %v342 = vpop.f32.mrf.mxu0
    %v343 = vadd.f32 %v100, %v342
    %344 = vmatmul.f32.gmra.mxu0 %v137
    %v345 = vpop.f32.mrf.mxu0
    %v346 = vadd.f32 %v100, %v345
    %347 = vmatmul.f32.gmra.mxu0 %v140
    %v348 = vpop.f32.mrf.mxu0
    %v349 = vadd.f32 %v100, %v348
    %350 = vmatmul.f32.gmra.mxu0 %v143
    %v351 = vpop.f32.mrf.mxu0
    %v352 = vadd.f32 %v100, %v351
    %353 = vmatmul.f32.gmra.mxu0 %v146
    %v354 = vpop.f32.mrf.mxu0
    %v355 = vadd.f32 %v100, %v354
    %356 = vmatmul.f32.gmra.mxu0 %v149
    %v357 = vpop.f32.mrf.mxu0
    %v358 = vadd.f32 %v100, %v357
    %359 = vmatmul.f32.gmra.mxu0 %v152
    %v360 = vpop.f32.mrf.mxu0
    %v361 = vadd.f32 %v100, %v360
    %362 = vmatmul.f32.gmra.mxu0 %v155
    %v363 = vpop.f32.mrf.mxu0
    %v364 = vadd.f32 %v100, %v363
    %365 = vmatmul.f32.gmra.mxu0 %v158
    %v366 = vpop.f32.mrf.mxu0
    %v367 = vadd.f32 %v100, %v366
    %368 = vmatmul.f32.gmra.mxu0 %v161
    %v369 = vpop.f32.mrf.mxu0
    %v370 = vadd.f32 %v100, %v369
    %371 = vmatmul.f32.gmra.mxu0 %v164
    %v372 = vpop.f32.mrf.mxu0
    %v373 = vadd.f32 %v100, %v372
    %374 = vmatmul.f32.gmra.mxu0 %v167
    %v375 = vpop.f32.mrf.mxu0
    %v376 = vadd.f32 %v100, %v375
    %377 = vmatmul.f32.gmra.mxu0 %v170
    %v378 = vpop.f32.mrf.mxu0
    %v379 = vadd.f32 %v100, %v378
    %380 = vmatmul.f32.gmra.mxu0 %v173
    %v381 = vpop.f32.mrf.mxu0
    %v382 = vadd.f32 %v100, %v381
    %383 = vmatmul.f32.gmra.mxu0 %v176
    %v384 = vpop.f32.mrf.mxu0
    %v385 = vadd.f32 %v100, %v384
    %386 = vmatmul.f32.gmra.mxu0 %v179
    %v387 = vpop.f32.mrf.mxu0
    %v388 = vadd.f32 %v100, %v387
    %389 = vmatmul.f32.gmra.mxu0 %v182
    %v390 = vpop.f32.mrf.mxu0
    %v391 = vadd.f32 %v100, %v390
    %392 = vmatmul.f32.gmra.mxu0 %v185
    %v393 = vpop.f32.mrf.mxu0
    %v394 = vadd.f32 %v100, %v393
    %395 = vmatmul.f32.gmra.mxu0 %v188
    %v396 = vpop.f32.mrf.mxu0
    %v397 = vadd.f32 %v100, %v396
    %398 = vmatmul.f32.gmra.mxu0 %v191
    %v399 = vpop.f32.mrf.mxu0
    %v400 = vadd.f32 %v100, %v399
    %401 = vmatmul.f32.gmra.mxu0 %v194
    %v402 = vpop.f32.mrf.mxu0
    %v403 = vadd.f32 %v100, %v402
    %404 = vmatmul.f32.gmra.mxu0 %v197
    %v405 = vpop.f32.mrf.mxu0
    %v406 = vadd.f32 %v100, %v405
    %407 = vmatmul.f32.gmra.mxu0 %v200
    %v408 = vpop.f32.mrf.mxu0
    %v409 = vadd.f32 %v100, %v408
    %410 = vmatmul.f32.gmra.mxu0 %v203
    %v411 = vpop.f32.mrf.mxu0
    %v412 = vadd.f32 %v100, %v411
    %413 = vmatmul.f32.gmra.mxu0 %v206
    %v414 = vpop.f32.mrf.mxu0
    %v415 = vadd.f32 %v100, %v414
    %416 = vmatmul.f32.gmra.mxu0 %v209
    %v417 = vpop.f32.mrf.mxu0
    %v418 = vadd.f32 %v100, %v417
    %419 = vmatmul.f32.gmra.mxu0 %v212
    %v420 = vpop.f32.mrf.mxu0
    %v421 = vadd.f32 %v100, %v420
    %422 = vmatmul.f32.gmra.mxu0 %v215
    %v423 = vpop.f32.mrf.mxu0
    %v424 = vadd.f32 %v100, %v423
    %425 = vmatmul.f32.gmra.mxu0 %v218
    %v426 = vpop.f32.mrf.mxu0
    %v427 = vadd.f32 %v100, %v426
    %428 = vmatmul.f32.gmra.mxu0 %v221
    %v429 = vpop.f32.mrf.mxu0
    %v430 = vadd.f32 %v100, %v429
    %431 = vmatmul.f32.gmra.mxu0 %v224
    %v432 = vpop.f32.mrf.mxu0
    %v433 = vadd.f32 %v100, %v432
    %434 = vmatmul.f32.gmra.mxu0 %v227
    %v435 = vpop.f32.mrf.mxu0
    %v436 = vadd.f32 %v100, %v435
    %437 = vmatmul.f32.gmra.mxu0 %v230
    %v438 = vpop.f32.mrf.mxu0
    %v439 = vadd.f32 %v100, %v438
    %440 = vmatmul.f32.gmra.mxu0 %v233
    %v441 = vpop.f32.mrf.mxu0
    %v442 = vadd.f32 %v100, %v441
    %443 = vmatmul.f32.gmra.mxu0 %v236
    %v444 = vpop.f32.mrf.mxu0
    %v445 = vadd.f32 %v100, %v444
    %446 = vmatmul.f32.gmra.mxu0 %v239
    %v447 = vpop.f32.mrf.mxu0
    %v448 = vadd.f32 %v100, %v447
    %449 = vmatmul.f32.gmra.mxu0 %v242
    %v450 = vpop.f32.mrf.mxu0
    %v451 = vadd.f32 %v100, %v450
    %452 = vmatmul.f32.gmra.mxu0 %v245
    %v453 = vpop.f32.mrf.mxu0
    %v454 = vadd.f32 %v100, %v453
    %455 = vmatmul.f32.gmra.mxu0 %v248
    %v456 = vpop.f32.mrf.mxu0
    %v457 = vadd.f32 %v100, %v456
    %458 = vmatmul.f32.gmra.mxu0 %v251
    %v459 = vpop.f32.mrf.mxu0
    %v460 = vadd.f32 %v100, %v459
    %461 = vmatmul.f32.gmra.mxu0 %v254
    %v462 = vpop.f32.mrf.mxu0
    %v463 = vadd.f32 %v100, %v462
    %464 = vmatmul.f32.gmra.mxu0 %v257
    %v465 = vpop.f32.mrf.mxu0
    %v466 = vadd.f32 %v100, %v465
    %467 = vmatmul.f32.gmra.mxu0 %v260
    %v468 = vpop.f32.mrf.mxu0
    %v469 = vadd.f32 %v100, %v468
    %470 = vmatmul.f32.gmra.mxu0 %v263
    %v471 = vpop.f32.mrf.mxu0
    %v472 = vadd.f32 %v100, %v471
    %473 = vmatmul.f32.gmra.mxu0 %v266
    %v474 = vpop.f32.mrf.mxu0
    %v475 = vadd.f32 %v100, %v474
    %476 = vmatmul.f32.gmra.mxu0 %v269
    %v477 = vpop.f32.mrf.mxu0
    %v478 = vadd.f32 %v100, %v477
    %479 = vmatmul.f32.gmra.mxu0 %v272
    %v480 = vpop.f32.mrf.mxu0
    %v481 = vadd.f32 %v100, %v480
    %482 = vmatmul.f32.gmra.mxu0 %v275
    %v483 = vpop.f32.mrf.mxu0
    %v484 = vadd.f32 %v100, %v483
    %485 = vmatmul.f32.gmra.mxu0 %v278
    %v486 = vpop.f32.mrf.mxu0
    %v487 = vadd.f32 %v100, %v486
    %488 = vmatmul.f32.gmra.mxu0 %v281
    %v489 = vpop.f32.mrf.mxu0
    %v490 = vadd.f32 %v100, %v489
    %491 = vmatmul.f32.gmra.mxu0 %v284
    %v492 = vpop.f32.mrf.mxu0
    %v493 = vadd.f32 %v100, %v492
    %494 = vmatmul.f32.gmra.mxu0 %v287
    %v495 = vpop.f32.mrf.mxu0
    %v496 = vadd.f32 %v100, %v495
    %497 = vmatmul.f32.gmra.mxu0 %v290
    %v498 = vpop.f32.mrf.mxu0
    %v499 = vadd.f32 %v100, %v498
    %500 = vmatmul.f32.gmra.mxu0 %v293
    %v501 = vpop.f32.mrf.mxu0
    %v502 = vadd.f32 %v100, %v501
    %503 = vdwg.mxu0
    %vm504 = vcmask 130048
    %505 = vst.msk [vmem:[%s3] sm:$0xff] %vm504, %v313
    %506 = vst.msk [vmem:[%s3 + $0x8] sm:$0xff] %vm504, %v316
    %507 = vst.msk [vmem:[%s3 + $0x10] sm:$0xff] %vm504, %v319
    %508 = vst.msk [vmem:[%s3 + $0x18] sm:$0xff] %vm504, %v322
    %509 = vst.msk [vmem:[%s3 + $0x20] sm:$0xff] %vm504, %v325
    %510 = vst.msk [vmem:[%s3 + $0x28] sm:$0xff] %vm504, %v328
    %511 = vst.msk [vmem:[%s3 + $0x30] sm:$0xff] %vm504, %v331
    %512 = vst.msk [vmem:[%s3 + $0x38] sm:$0xff] %vm504, %v334
    %513 = vst.msk [vmem:[%s3 + $0x40] sm:$0xff] %vm504, %v337
    %514 = vst.msk [vmem:[%s3 + $0x48] sm:$0xff] %vm504, %v340
    %515 = vst.msk [vmem:[%s3 + $0x50] sm:$0xff] %vm504, %v343
    %516 = vst.msk [vmem:[%s3 + $0x58] sm:$0xff] %vm504, %v346
    %517 = vst.msk [vmem:[%s3 + $0x60] sm:$0xff] %vm504, %v349
    %518 = vst.msk [vmem:[%s3 + $0x68] sm:$0xff] %vm504, %v352
    %519 = vst.msk [vmem:[%s3 + $0x70] sm:$0xff] %vm504, %v355
    %520 = vst.msk [vmem:[%s3 + $0x78] sm:$0xff] %vm504, %v358
    %521 = vst.msk [vmem:[%s3 + $0x80] sm:$0xff] %vm504, %v361
    %522 = vst.msk [vmem:[%s3 + $0x88] sm:$0xff] %vm504, %v364
    %523 = vst.msk [vmem:[%s3 + $0x90] sm:$0xff] %vm504, %v367
    %524 = vst.msk [vmem:[%s3 + $0x98] sm:$0xff] %vm504, %v370
    %525 = vst.msk [vmem:[%s3 + $0xa0] sm:$0xff] %vm504, %v373
    %526 = vst.msk [vmem:[%s3 + $0xa8] sm:$0xff] %vm504, %v376
    %527 = vst.msk [vmem:[%s3 + $0xb0] sm:$0xff] %vm504, %v379
    %528 = vst.msk [vmem:[%s3 + $0xb8] sm:$0xff] %vm504, %v382
    %529 = vst.msk [vmem:[%s3 + $0xc0] sm:$0xff] %vm504, %v385
    %530 = vst.msk [vmem:[%s3 + $0xc8] sm:$0xff] %vm504, %v388
    %531 = vst.msk [vmem:[%s3 + $0xd0] sm:$0xff] %vm504, %v391
    %532 = vst.msk [vmem:[%s3 + $0xd8] sm:$0xff] %vm504, %v394
    %533 = vst.msk [vmem:[%s3 + $0xe0] sm:$0xff] %vm504, %v397
    %534 = vst.msk [vmem:[%s3 + $0xe8] sm:$0xff] %vm504, %v400
    %535 = vst.msk [vmem:[%s3 + $0xf0] sm:$0xff] %vm504, %v403
    %536 = vst.msk [vmem:[%s3 + $0xf8] sm:$0xff] %vm504, %v406
    %537 = vst.msk [vmem:[%s3 + $0x100] sm:$0xff] %vm504, %v409
    %538 = vst.msk [vmem:[%s3 + $0x108] sm:$0xff] %vm504, %v412
    %539 = vst.msk [vmem:[%s3 + $0x110] sm:$0xff] %vm504, %v415
    %540 = vst.msk [vmem:[%s3 + $0x118] sm:$0xff] %vm504, %v418
    %541 = vst.msk [vmem:[%s3 + $0x120] sm:$0xff] %vm504, %v421
    %542 = vst.msk [vmem:[%s3 + $0x128] sm:$0xff] %vm504, %v424
    %543 = vst.msk [vmem:[%s3 + $0x130] sm:$0xff] %vm504, %v427
    %544 = vst.msk [vmem:[%s3 + $0x138] sm:$0xff] %vm504, %v430
    %545 = vst.msk [vmem:[%s3 + $0x140] sm:$0xff] %vm504, %v433
    %546 = vst.msk [vmem:[%s3 + $0x148] sm:$0xff] %vm504, %v436
    %547 = vst.msk [vmem:[%s3 + $0x150] sm:$0xff] %vm504, %v439
    %548 = vst.msk [vmem:[%s3 + $0x158] sm:$0xff] %vm504, %v442
    %549 = vst.msk [vmem:[%s3 + $0x160] sm:$0xff] %vm504, %v445
    %550 = vst.msk [vmem:[%s3 + $0x168] sm:$0xff] %vm504, %v448
    %551 = vst.msk [vmem:[%s3 + $0x170] sm:$0xff] %vm504, %v451
    %552 = vst.msk [vmem:[%s3 + $0x178] sm:$0xff] %vm504, %v454
    %553 = vst.msk [vmem:[%s3 + $0x180] sm:$0xff] %vm504, %v457
    %554 = vst.msk [vmem:[%s3 + $0x188] sm:$0xff] %vm504, %v460
    %555 = vst.msk [vmem:[%s3 + $0x190] sm:$0xff] %vm504, %v463
    %556 = vst.msk [vmem:[%s3 + $0x198] sm:$0xff] %vm504, %v466
    %557 = vst.msk [vmem:[%s3 + $0x1a0] sm:$0xff] %vm504, %v469
    %558 = vst.msk [vmem:[%s3 + $0x1a8] sm:$0xff] %vm504, %v472
    %559 = vst.msk [vmem:[%s3 + $0x1b0] sm:$0xff] %vm504, %v475
    %560 = vst.msk [vmem:[%s3 + $0x1b8] sm:$0xff] %vm504, %v478
    %561 = vst.msk [vmem:[%s3 + $0x1c0] sm:$0xff] %vm504, %v481
    %562 = vst.msk [vmem:[%s3 + $0x1c8] sm:$0xff] %vm504, %v484
    %563 = vst.msk [vmem:[%s3 + $0x1d0] sm:$0xff] %vm504, %v487
    %564 = vst.msk [vmem:[%s3 + $0x1d8] sm:$0xff] %vm504, %v490
    %565 = vst.msk [vmem:[%s3 + $0x1e0] sm:$0xff] %vm504, %v493
    %566 = vst.msk [vmem:[%s3 + $0x1e8] sm:$0xff] %vm504, %v496
    %567 = vst.msk [vmem:[%s3 + $0x1f0] sm:$0xff] %vm504, %v499
    %568 = vst.msk [vmem:[%s3 + $0x1f8] sm:$0xff] %vm504, %v502
    // Predicated region
    $region18: #{outer_product_mean.2} parent=1 // pred_check
      _
    $region19: #{outer_product_mean.2} parent=1 // pred_check_branch
      %570 = sbr.rel (0) target = $region21
    $region20: #{outer_product_mean.2} parent=1 // pred_region
      _
    $region21: #{outer_product_mean.2} parent=1 // pred_fallthru
      _
    // Predicated region
    $region22: #{outer_product_mean.2} parent=1 // pred_check
      _
    $region23: #{outer_product_mean.2} parent=1 // pred_check_branch
      %572 = sbr.rel (0) target = $region25
    $region24: #{outer_product_mean.2} parent=1 // pred_region
      _
    $region25: #{outer_product_mean.2} parent=1 // pred_fallthru
      _
    %573 = vsyncpa [#allocation3], 1

// kernel: outer_product_mean.3
$region0: #{outer_product_mean.3}
  #allocation0 [shape = 'u32[]', space=smem, size = 0x4, offset = 0x4, fixed_abs, tag = 'smem constant byte address 0x4 - core index']
  #allocation1 [shape = 'u32[72,128]{1,0:T(1,128)}', space=vmem, size = 0x9000, scoped, tag = 'internal scratch']
  #allocation2 [shape = 'f32[16,256,32]{2,1,0:T(8,128)}', space=vmem, size = 0x200000, scoped, tag = 'scratch operand']
  %s0 = inlined_call_operand.vmem [shape: f32[2,256,16], index: 0, kind: input, shape index: {}]
  %s1 = inlined_call_operand.vmem [shape: f32[2,16,256], index: 1, kind: input, shape index: {}]
  %s2 = inlined_call_operand.vmem [shape: f32[16,16,32], index: 2, kind: input, shape index: {}]
  %s3 = inlined_call_operand.vmem [shape: f32[1,32], index: 3, kind: input, shape index: {}]
  %s4 = inlined_call_operand.hbm [shape: f32[2,16,16,32], index: 4, kind: output, shape index: {}]
  %s5 = sld [smem:[#allocation0]]
  $region49: #{outer_product_mean.3} parent=0
    _
  %s7 = ssub.s32 1, %s5
  %s8 = scalar_select 0, %s7, %s5
  $region1: #{outer_product_mean.3} parent=0
    #allocation3 [shape = 'u8[262144]{0}', space=vmem, size = 0x40000, scoped, tag = 'output window, operand 0']
    #allocation4 [shape = 's32[2]{0}', space=sflag, size = 0x8, scoped, tag = 'scoped memory for outer_product_mean.3']
    %9 = vsyncpa [#allocation4], 0
    %s10 = scalar_lea.sflag [#allocation4], 1
    %11 = vsyncpa %s10, 0
    loop: start=0, step=1, limit=4
    $region2: #{outer_product_mean.3} parent=1 // loop_pre_header
      _
    $region3: #{outer_product_mean.3} parent=1 // loop_header
      %s13 = sphi 0, %s17
      %p14 = scmp.ge.s32.totalorder %s13, 4
      %s20 = sphi 0, %s32
      %s21 = sphi 0, %s28
      %s22 = sphi 0, %s20
      %s23 = sphi 0, %s21
      %s24 = sphi 0, %s22
      %s25 = sphi 0, %s23
      %s37 = sphi 0, %s39
      %s40 = sphi 0, %s37
      %s41 = sphi 0, %s40
      %s57 = sphi 0, %s41
      %s63 = sphi 0, %s65
      %s66 = sphi 0, %s63
      %s67 = sphi 0, %s66
      %s83 = sphi 0, %s67
      %s87 = sphi 0, %s87
      %s89 = sphi 0, %s87
      %s90 = sphi 0, %s89
      %s104 = sphi 0, %s90
      %s108 = sphi 0, %s108
      %s110 = sphi 0, %s108
      %s111 = sphi 0, %s110
      %s125 = sphi 0, %s111
      %s133 = sphi 0, %s135
      %s136 = sphi 0, %s133
      %s137 = sphi 0, %s136
      %s153 = sphi 0, %s137
    $region4: #{outer_product_mean.3} parent=1 // loop_header_branch
      %16 = sbr.rel (%p14) target = $region8
    $region5: #{outer_product_mean.3} parent=1 // loop_body
      %s18 = ssub.s32 %s13, 1
      %s19 = ssub.s32 %s13, 2
      %s26 = sadd.s32 1, %s21
      %p27 = scmp.ge.s32.totalorder %s26, 1
      %s28 = scalar_select %p27, 0, %s26
      %s29 = sadd.s32 1, %s20
      %s30 = scalar_select %p27, %s29, %s20
      %p31 = scmp.ge.s32.totalorder %s30, 2
      %s32 = scalar_select %p31, 0, %s30
      %s33 = ssub.s32 %s20, %s32
      %s34 = ssub.s32 %s21, %s28
      %s35 = sor.u32 %s33, %s34
      %p36 = scmp.eq.s32.totalorder %s35, 0
      %s38 = sadd.s32 %s37, 1
      %s39 = scalar_select %p36, %s37, %s38
      %p42 = pneg %p36
      %p43 = scmp.eq.s32.totalorder %s13, 1
      %p44 = por %p42, %p43
      %p45 = scmp.ne.s32.totalorder %s37, %s40
      %p46 = scmp.eq.s32.totalorder %s13, 0
      %p47 = por %p45, %p46
      %p48 = scmp.ne.s32.totalorder %s37, %s40
      %p49 = scmp.eq.s32.totalorder %s18, 1
      %p50 = por %p48, %p49
      %p51 = scmp.ne.s32.totalorder %s40, %s41
      %p52 = scmp.eq.s32.totalorder %s18, 0
      %p53 = por %p51, %p52
      %p54 = scmp.ne.s32.totalorder %s40, %s41
      %p55 = scmp.eq.s32.totalorder %s19, 1
      %p56 = por %p54, %p55
      %p58 = scmp.ne.s32.totalorder %s41, %s57
      %p59 = scmp.eq.s32.totalorder %s19, 0
      %p60 = por %p58, %p59
      %s61 = ssub.s32 %s20, %s32
      %p62 = scmp.eq.s32.totalorder %s61, 0
      %s64 = sadd.s32 %s63, 1
      %s65 = scalar_select %p62, %s63, %s64
      %p68 = pneg %p62
      %p69 = scmp.eq.s32.totalorder %s13, 1
      %p70 = por %p68, %p69
      %p71 = scmp.ne.s32.totalorder %s63, %s66
      %p72 = scmp.eq.s32.totalorder %s13, 0
      %p73 = por %p71, %p72
      %p74 = scmp.ne.s32.totalorder %s63, %s66
      %p75 = scmp.eq.s32.totalorder %s18, 1
      %p76 = por %p74, %p75
      %p77 = scmp.ne.s32.totalorder %s66, %s67
      %p78 = scmp.eq.s32.totalorder %s18, 0
      %p79 = por %p77, %p78
      %p80 = scmp.ne.s32.totalorder %s66, %s67
      %p81 = scmp.eq.s32.totalorder %s19, 1
      %p82 = por %p80, %p81
      %p84 = scmp.ne.s32.totalorder %s67, %s83
      %p85 = scmp.eq.s32.totalorder %s19, 0
      %p86 = por %p84, %p85
      %s88 = sadd.s32 %s87, 1
      %p91 = scmp.eq.s32.totalorder %s13, 1
      %p92 = scmp.ne.s32.totalorder %s87, %s89
      %p93 = scmp.eq.s32.totalorder %s13, 0
      %p94 = por %p92, %p93
      %p95 = scmp.ne.s32.totalorder %s87, %s89
      %p96 = scmp.eq.s32.totalorder %s18, 1
      %p97 = por %p95, %p96
      %p98 = scmp.ne.s32.totalorder %s89, %s90
      %p99 = scmp.eq.s32.totalorder %s18, 0
      %p100 = por %p98, %p99
      %p101 = scmp.ne.s32.totalorder %s89, %s90
      %p102 = scmp.eq.s32.totalorder %s19, 1
      %p103 = por %p101, %p102
      %p105 = scmp.ne.s32.totalorder %s90, %s104
      %p106 = scmp.eq.s32.totalorder %s19, 0
      %p107 = por %p105, %p106
      %s109 = sadd.s32 %s108, 1
      %p112 = scmp.eq.s32.totalorder %s13, 1
      %p113 = scmp.ne.s32.totalorder %s108, %s110
      %p114 = scmp.eq.s32.totalorder %s13, 0
      %p115 = por %p113, %p114
      %p116 = scmp.ne.s32.totalorder %s108, %s110
      %p117 = scmp.eq.s32.totalorder %s18, 1
      %p118 = por %p116, %p117
      %p119 = scmp.ne.s32.totalorder %s110, %s111
      %p120 = scmp.eq.s32.totalorder %s18, 0
      %p121 = por %p119, %p120
      %p122 = scmp.ne.s32.totalorder %s110, %s111
      %p123 = scmp.eq.s32.totalorder %s19, 1
      %p124 = por %p122, %p123
      %p126 = scmp.ne.s32.totalorder %s111, %s125
      %p127 = scmp.eq.s32.totalorder %s19, 0
      %p128 = por %p126, %p127
      %s129 = ssub.s32 %s20, %s32
      %s130 = ssub.s32 %s21, %s28
      %s131 = sor.u32 %s129, %s130
      %p132 = scmp.eq.s32.totalorder %s131, 0
      %s134 = sadd.s32 %s133, 1
      %s135 = scalar_select %p132, %s133, %s134
      %p138 = pneg %p132
      %p139 = scmp.eq.s32.totalorder %s13, 1
      %p140 = por %p138, %p139
      %p141 = scmp.ne.s32.totalorder %s133, %s136
      %p142 = scmp.eq.s32.totalorder %s13, 0
      %p143 = por %p141, %p142
      %p144 = scmp.ne.s32.totalorder %s133, %s136
      %p145 = scmp.eq.s32.totalorder %s18, 1
      %p146 = por %p144, %p145
      %p147 = scmp.ne.s32.totalorder %s136, %s137
      %p148 = scmp.eq.s32.totalorder %s18, 0
      %p149 = por %p147, %p148
      %p150 = scmp.ne.s32.totalorder %s136, %s137
      %p151 = scmp.eq.s32.totalorder %s19, 1
      %p152 = por %p150, %p151
      %p154 = scmp.ne.s32.totalorder %s137, %s153
      %p155 = scmp.eq.s32.totalorder %s19, 0
      %p156 = por %p154, %p155
      %p157 = scmp.le.s32.totalorder 1, %s13
      %p158 = scmp.lt.s32.totalorder %s13, 3
      %p159 = pnand %p157, %p158
      %p160 = pneg %p159
      // Predicated region
      $region9: #{outer_product_mean.3} parent=5 // pred_check
        _
      $region10: #{outer_product_mean.3} parent=5 // pred_check_branch
        %162 = sbr.rel (%p159) target = $region12
      $region11: #{outer_product_mean.3} parent=5 // pred_region
        %s163 = ssub.s32 %s13, 1
        // Predicated region
        $region13: #{outer_product_mean.3} parent=11 // pred_check
          %p164 = pneg %p100
        $region14: #{outer_product_mean.3} parent=11 // pred_check_branch
          %166 = sbr.rel (%p164) target = $region16
        $region15: #{outer_product_mean.3} parent=11 // pred_region
          _
        $region16: #{outer_product_mean.3} parent=11 // pred_fallthru
          _
        // Predicated region
        $region17: #{outer_product_mean.3} parent=11 // pred_check
          %p167 = pneg %p121
        $region18: #{outer_product_mean.3} parent=11 // pred_check_branch
          %169 = sbr.rel (%p167) target = $region20
        $region19: #{outer_product_mean.3} parent=11 // pred_region
          _
        $region20: #{outer_product_mean.3} parent=11 // pred_fallthru
          _
      $region12: #{outer_product_mean.3} parent=5 // pred_fallthru
        _
      %p170 = scmp.lt.s32.totalorder %s13, 2
      // Predicated region
      $region21: #{outer_product_mean.3} parent=5 // pred_check
        %p171 = pneg %p170
      $region22: #{outer_product_mean.3} parent=5 // pred_check_branch
        %173 = sbr.rel (%p171) target = $region24
      $region23: #{outer_product_mean.3} parent=5 // pred_region
        // Predicated region
        $region25: #{outer_product_mean.3} parent=23 // pred_check
          %p174 = pneg %p47
        $region26: #{outer_product_mean.3} parent=23 // pred_check_branch
          %176 = sbr.rel (%p174) target = $region28
        $region27: #{outer_product_mean.3} parent=23 // pred_region
          %s177 = smul.u32 32, %s21
          %p178 = scmp.lt.s32.totalorder %s20, 1
          %s179 = scalar_select %p178, %s20, 1
          %p180 = scmp.lt.s32.totalorder %s177, 31
          %s181 = scalar_select %p180, %s177, 31
          %s182 = smul.addr %s179, 32
          %s183 = sadd.s32 %s181, %s182
          %s184 = smul.addr %s183, 8
          %s185 = scalar_lea.vmem %s0, %s184
          %s186 = smul.u32 32, %s21
        $region28: #{outer_product_mean.3} parent=23 // pred_fallthru
          _
        // Predicated region
        $region29: #{outer_product_mean.3} parent=23 // pred_check
          %p187 = pneg %p73
        $region30: #{outer_product_mean.3} parent=23 // pred_check_branch
          %189 = sbr.rel (%p187) target = $region32
        $region31: #{outer_product_mean.3} parent=23 // pred_region
          %p190 = scmp.lt.s32.totalorder %s20, 1
          %s191 = scalar_select %p190, %s20, 1
          %s192 = smul.addr %s191, 4
          %s193 = smul.addr %s192, 8
          %s194 = scalar_lea.vmem %s1, %s193
        $region32: #{outer_product_mean.3} parent=23 // pred_fallthru
          _
      $region24: #{outer_product_mean.3} parent=5 // pred_fallthru
        _
      %p195 = scmp.le.s32.totalorder 1, %s13
      %p196 = scmp.lt.s32.totalorder %s13, 3
      %p197 = pnand %p195, %p196
      %p198 = pneg %p197
      // Predicated region
      $region33: #{outer_product_mean.3} parent=5 // pred_check
        _
      $region34: #{outer_product_mean.3} parent=5 // pred_check_branch
        %200 = sbr.rel (%p197) target = $region36
      $region35: #{outer_product_mean.3} parent=5 // pred_region
        %s201 = ssub.s32 %s13, 1
        %s202 = smul.u32 32, %s23
        %p203 = scmp.lt.s32.totalorder %s22, 1
        %s204 = scalar_select %p203, %s22, 1
        %p205 = scmp.lt.s32.totalorder %s202, 31
        %s206 = scalar_select %p205, %s202, 31
        %s207 = smul.addr %s204, 32
        %s208 = sadd.s32 %s206, %s207
        %s209 = smul.addr %s208, 8
        %s210 = scalar_lea.vmem %s0, %s209
        %p211 = pneg %p53
        %p212 = pneg %p50
        %p213 = scmp.lt.s32.totalorder %s22, 1
        %s214 = scalar_select %p213, %s22, 1
        %s215 = smul.addr %s214, 4
        %s216 = smul.addr %s215, 8
        %s217 = scalar_lea.vmem %s1, %s216
        %p218 = pneg %p79
        %p219 = pneg %p76
        %p220 = pneg %p100
        %p221 = pneg %p97
        %p222 = pneg %p121
        %p223 = pneg %p118
        %p224 = pneg %p149
        %p225 = pneg %p146
        %s226 = sand.u32 %s136, 1
        %s227 = scalar_lea.sflag [#allocation4], %s226
        %s228 = sand.u32 %s136, 1
        %s229 = smul.addr %s228, 256
        %s230 = scalar_lea.vmem [#allocation3], %s229
        %s231 = smul.u32 32, %s23
        %p232 = scmp.lt.s32.totalorder %s22, 1
        %s233 = scalar_select %p232, %s22, 1
        %p234 = scmp.lt.s32.totalorder %s231, 31
        %s235 = scalar_select %p234, %s231, 31
        %s236 = smul.addr %s233, 32
        %s237 = sadd.s32 %s235, %s236
        %s238 = smul.addr %s237, 8
        %s239 = scalar_lea.vmem %s0, %s238
        %s240 = smul.u32 32, %s23
        %p241 = scmp.lt.s32.totalorder %s22, 1
        %s242 = scalar_select %p241, %s22, 1
        %s243 = smul.addr %s242, 4
        %s244 = smul.addr %s243, 8
        %s245 = scalar_lea.vmem %s1, %s244
        %s246 = smul.u32 16, %s23
        %v247 = vld [vmem:[%s239] sm:$0xff]
        %v248 = vld [vmem:[%s239 + $0x8] sm:$0xff]
        %v249 = vld [vmem:[%s239 + $0x10] sm:$0xff]
        %v250 = vld [vmem:[%s239 + $0x18] sm:$0xff]
        %v251 = vld [vmem:[%s239 + $0x20] sm:$0xff]
        %v252 = vld [vmem:[%s239 + $0x28] sm:$0xff]
        %v253 = vld [vmem:[%s239 + $0x30] sm:$0xff]
        %v254 = vld [vmem:[%s239 + $0x38] sm:$0xff]
        %v255 = vld [vmem:[%s239 + $0x40] sm:$0xff]
        %v256 = vld [vmem:[%s239 + $0x48] sm:$0xff]
        %v257 = vld [vmem:[%s239 + $0x50] sm:$0xff]
        %v258 = vld [vmem:[%s239 + $0x58] sm:$0xff]
        %v259 = vld [vmem:[%s239 + $0x60] sm:$0xff]
        %v260 = vld [vmem:[%s239 + $0x68] sm:$0xff]
        %v261 = vld [vmem:[%s239 + $0x70] sm:$0xff]
        %v262 = vld [vmem:[%s239 + $0x78] sm:$0xff]
        %v263 = vld [vmem:[%s239 + $0x80] sm:$0xff]
        %v264 = vld [vmem:[%s239 + $0x88] sm:$0xff]
        %v265 = vld [vmem:[%s239 + $0x90] sm:$0xff]
        %v266 = vld [vmem:[%s239 + $0x98] sm:$0xff]
        %v267 = vld [vmem:[%s239 + $0xa0] sm:$0xff]
        %v268 = vld [vmem:[%s239 + $0xa8] sm:$0xff]
        %v269 = vld [vmem:[%s239 + $0xb0] sm:$0xff]
        %v270 = vld [vmem:[%s239 + $0xb8] sm:$0xff]
        %v271 = vld [vmem:[%s239 + $0xc0] sm:$0xff]
        %v272 = vld [vmem:[%s239 + $0xc8] sm:$0xff]
        %v273 = vld [vmem:[%s239 + $0xd0] sm:$0xff]
        %v274 = vld [vmem:[%s239 + $0xd8] sm:$0xff]
        %v275 = vld [vmem:[%s239 + $0xe0] sm:$0xff]
        %v276 = vld [vmem:[%s239 + $0xe8] sm:$0xff]
        %v277 = vld [vmem:[%s239 + $0xf0] sm:$0xff]
        %v278 = vld [vmem:[%s239 + $0xf8] sm:$0xff]
        %v279 = vld [vmem:[%s2] sm:$0xff]
        %v280 = vld [vmem:[%s2 + $0x8] sm:$0xff]
        %vm281 = vcmask 130048
        %v283 = vsel %vm281, %v247, 0
        %v286 = vsel %vm281, %v248, 0
        %v289 = vsel %vm281, %v249, 0
        %v292 = vsel %vm281, %v250, 0
        %v295 = vsel %vm281, %v251, 0
        %v298 = vsel %vm281, %v252, 0
        %v301 = vsel %vm281, %v253, 0
        %v304 = vsel %vm281, %v254, 0
        %v307 = vsel %vm281, %v255, 0
        %v310 = vsel %vm281, %v256, 0
        %v313 = vsel %vm281, %v257, 0
        %v316 = vsel %vm281, %v258, 0
        %v319 = vsel %vm281, %v259, 0
        %v322 = vsel %vm281, %v260, 0
        %v325 = vsel %vm281, %v261, 0
        %v328 = vsel %vm281, %v262, 0
        %v331 = vsel %vm281, %v263, 0
        %v334 = vsel %vm281, %v264, 0
        %v337 = vsel %vm281, %v265, 0
        %v340 = vsel %vm281, %v266, 0
        %v343 = vsel %vm281, %v267, 0
        %v346 = vsel %vm281, %v268, 0
        %v349 = vsel %vm281, %v269, 0
        %v352 = vsel %vm281, %v270, 0
        %v355 = vsel %vm281, %v271, 0
        %v358 = vsel %vm281, %v272, 0
        %v361 = vsel %vm281, %v273, 0
        %v364 = vsel %vm281, %v274, 0
        %v367 = vsel %vm281, %v275, 0
        %v370 = vsel %vm281, %v276, 0
        %v373 = vsel %vm281, %v277, 0
        %v376 = vsel %vm281, %v278, 0
        %378 = vmatpush.msra.mxu0 0.0
        %379 = vmatpush.msra.mxu0 0.0
        %380 = vmatpush.msra.mxu0 0.0
        %381 = vmatpush.msra.mxu0 0.0
        %382 = vmatpush.msra.mxu0 0.0
        %383 = vmatpush.msra.mxu0 0.0
        %384 = vmatpush.msra.mxu0 0.0
        %385 = vmatpush.msra.mxu0 0.0
        %386 = vmatpush.msra.mxu0 0.0
        %387 = vmatpush.msra.mxu0 0.0
        %388 = vmatpush.msra.mxu0 0.0
        %389 = vmatpush.msra.mxu0 0.0
        %390 = vmatpush.msra.mxu0 0.0
        %391 = vmatpush.msra.mxu0 0.0
        %392 = vmatpush.msra.mxu0 %v280
        %393 = vmatpush.msra.mxu0 %v279
        %394 = vmatmul.f32.gmra.mxu0 %v283
        %v395 = vpop.f32.mrf.mxu0
        %v396 = vadd.f32 0.0, %v395
        %397 = vmatmul.f32.gmra.mxu0 %v286
        %v398 = vpop.f32.mrf.mxu0
        %v399 = vadd.f32 0.0, %v398
        %400 = vmatmul.f32.gmra.mxu0 %v289
        %v401 = vpop.f32.mrf.mxu0
        %v402 = vadd.f32 0.0, %v401
        %403 = vmatmul.f32.gmra.mxu0 %v292
        %v404 = vpop.f32.mrf.mxu0
        %v405 = vadd.f32 0.0, %v404
        %406 = vmatmul.f32.gmra.mxu0 %v295
        %v407 = vpop.f32.mrf.mxu0
        %v408 = vadd.f32 0.0, %v407
        %409 = vmatmul.f32.gmra.mxu0 %v298
        %v410 = vpop.f32.mrf.mxu0
        %v411 = vadd.f32 0.0, %v410
        %412 = vmatmul.f32.gmra.mxu0 %v301
        %v413 = vpop.f32.mrf.mxu0
        %v414 = vadd.f32 0.0, %v413
        %415 = vmatmul.f32.gmra.mxu0 %v304
        %v416 = vpop.f32.mrf.mxu0
        %v417 = vadd.f32 0.0, %v416
        %418 = vmatmul.f32.gmra.mxu0 %v307
        %v419 = vpop.f32.mrf.mxu0
        %v420 = vadd.f32 0.0, %v419
        %421 = vmatmul.f32.gmra.mxu0 %v310
        %v422 = vpop.f32.mrf.mxu0
        %v423 = vadd.f32 0.0, %v422
        %424 = vmatmul.f32.gmra.mxu0 %v313
        %v425 = vpop.f32.mrf.mxu0
        %v426 = vadd.f32 0.0, %v425
        %427 = vmatmul.f32.gmra.mxu0 %v316
        %v428 = vpop.f32.mrf.mxu0
        %v429 = vadd.f32 0.0, %v428
        %430 = vmatmul.f32.gmra.mxu0 %v319
        %v431 = vpop.f32.mrf.mxu0
        %v432 = vadd.f32 0.0, %v431
        %433 = vmatmul.f32.gmra.mxu0 %v322
        %v434 = vpop.f32.mrf.mxu0
        %v435 = vadd.f32 0.0, %v434
        %436 = vmatmul.f32.gmra.mxu0 %v325
        %v437 = vpop.f32.mrf.mxu0
        %v438 = vadd.f32 0.0, %v437
        %439 = vmatmul.f32.gmra.mxu0 %v328
        %v440 = vpop.f32.mrf.mxu0
        %v441 = vadd.f32 0.0, %v440
        %442 = vmatmul.f32.gmra.mxu0 %v331
        %v443 = vpop.f32.mrf.mxu0
        %v444 = vadd.f32 0.0, %v443
        %445 = vmatmul.f32.gmra.mxu0 %v334
        %v446 = vpop.f32.mrf.mxu0
        %v447 = vadd.f32 0.0, %v446
        %448 = vmatmul.f32.gmra.mxu0 %v337
        %v449 = vpop.f32.mrf.mxu0
        %v450 = vadd.f32 0.0, %v449
        %451 = vmatmul.f32.gmra.mxu0 %v340
        %v452 = vpop.f32.mrf.mxu0
        %v453 = vadd.f32 0.0, %v452
        %454 = vmatmul.f32.gmra.mxu0 %v343
        %v455 = vpop.f32.mrf.mxu0
        %v456 = vadd.f32 0.0, %v455
        %457 = vmatmul.f32.gmra.mxu0 %v346
        %v458 = vpop.f32.mrf.mxu0
        %v459 = vadd.f32 0.0, %v458
        %460 = vmatmul.f32.gmra.mxu0 %v349
        %v461 = vpop.f32.mrf.mxu0
        %v462 = vadd.f32 0.0, %v461
        %463 = vmatmul.f32.gmra.mxu0 %v352
        %v464 = vpop.f32.mrf.mxu0
        %v465 = vadd.f32 0.0, %v464
        %466 = vmatmul.f32.gmra.mxu0 %v355
        %v467 = vpop.f32.mrf.mxu0
        %v468 = vadd.f32 0.0, %v467
        %469 = vmatmul.f32.gmra.mxu0 %v358
        %v470 = vpop.f32.mrf.mxu0
        %v471 = vadd.f32 0.0, %v470
        %472 = vmatmul.f32.gmra.mxu0 %v361
        %v473 = vpop.f32.mrf.mxu0
        %v474 = vadd.f32 0.0, %v473
        %475 = vmatmul.f32.gmra.mxu0 %v364
        %v476 = vpop.f32.mrf.mxu0
        %v477 = vadd.f32 0.0, %v476
        %478 = vmatmul.f32.gmra.mxu0 %v367
        %v479 = vpop.f32.mrf.mxu0
        %v480 = vadd.f32 0.0, %v479
        %481 = vmatmul.f32.gmra.mxu0 %v370
        %v482 = vpop.f32.mrf.mxu0
        %v483 = vadd.f32 0.0, %v482
        %484 = vmatmul.f32.gmra.mxu0 %v373
        %v485 = vpop.f32.mrf.mxu0
        %v486 = vadd.f32 0.0, %v485
        %487 = vmatmul.f32.gmra.mxu0 %v376
        %v488 = vpop.f32.mrf.mxu0
        %v489 = vadd.f32 0.0, %v488
        %490 = vdwg.mxu0
        %vm491 = vcmask 261120
        %492 = vst.msk [vmem:[#allocation2] sm:$0xff] %vm491, %v396
        %493 = vst.msk [vmem:[#allocation2 + $0x8] sm:$0xff] %vm491, %v399
        %494 = vst.msk [vmem:[#allocation2 + $0x10] sm:$0xff] %vm491, %v402
        %495 = vst.msk [vmem:[#allocation2 + $0x18] sm:$0xff] %vm491, %v405
        %496 = vst.msk [vmem:[#allocation2 + $0x20] sm:$0xff] %vm491, %v408
        %497 = vst.msk [vmem:[#allocation2 + $0x28] sm:$0xff] %vm491, %v411
        %498 = vst.msk [vmem:[#allocation2 + $0x30] sm:$0xff] %vm491, %v414
        %499 = vst.msk [vmem:[#allocation2 + $0x38] sm:$0xff] %vm491, %v417
        %500 = vst.msk [vmem:[#allocation2 + $0x40] sm:$0xff] %vm491, %v420
        %501 = vst.msk [vmem:[#allocation2 + $0x48] sm:$0xff] %vm491, %v423
        %502 = vst.msk [vmem:[#allocation2 + $0x50] sm:$0xff] %vm491, %v426
        %503 = vst.msk [vmem:[#allocation2 + $0x58] sm:$0xff] %vm491, %v429
        %504 = vst.msk [vmem:[#allocation2 + $0x60] sm:$0xff] %vm491, %v432
        %505 = vst.msk [vmem:[#allocation2 + $0x68] sm:$0xff] %vm491, %v435
        %506 = vst.msk [vmem:[#allocation2 + $0x70] sm:$0xff] %vm491, %v438
        %507 = vst.msk [vmem:[#allocation2 + $0x78] sm:$0xff] %vm491, %v441
        %508 = vst.msk [vmem:[#allocation2 + $0x80] sm:$0xff] %vm491, %v444
        %509 = vst.msk [vmem:[#allocation2 + $0x88] sm:$0xff] %vm491, %v447
        %510 = vst.msk [vmem:[#allocation2 + $0x90] sm:$0xff] %vm491, %v450
        %511 = vst.msk [vmem:[#allocation2 + $0x98] sm:$0xff] %vm491, %v453
        %512 = vst.msk [vmem:[#allocation2 + $0xa0] sm:$0xff] %vm491, %v456
        %513 = vst.msk [vmem:[#allocation2 + $0xa8] sm:$0xff] %vm491, %v459
        %514 = vst.msk [vmem:[#allocation2 + $0xb0] sm:$0xff] %vm491, %v462
        %515 = vst.msk [vmem:[#allocation2 + $0xb8] sm:$0xff] %vm491, %v465
        %516 = vst.msk [vmem:[#allocation2 + $0xc0] sm:$0xff] %vm491, %v468
        %517 = vst.msk [vmem:[#allocation2 + $0xc8] sm:$0xff] %vm491, %v471
        %518 = vst.msk [vmem:[#allocation2 + $0xd0] sm:$0xff] %vm491, %v474
        %519 = vst.msk [vmem:[#allocation2 + $0xd8] sm:$0xff] %vm491, %v477
        %520 = vst.msk [vmem:[#allocation2 + $0xe0] sm:$0xff] %vm491, %v480
        %521 = vst.msk [vmem:[#allocation2 + $0xe8] sm:$0xff] %vm491, %v483
        %522 = vst.msk [vmem:[#allocation2 + $0xf0] sm:$0xff] %vm491, %v486
        %523 = vst.msk [vmem:[#allocation2 + $0xf8] sm:$0xff] %vm491, %v489
        %s524 = scalar_lea.vmem %s2, 16
        %v525 = vld [vmem:[%s524] sm:$0xff]
        %v526 = vld [vmem:[%s524 + $0x8] sm:$0xff]
        %527 = vmatpush.msra.mxu0 0.0
        %528 = vmatpush.msra.mxu0 0.0
        %529 = vmatpush.msra.mxu0 0.0
        %530 = vmatpush.msra.mxu0 0.0
        %531 = vmatpush.msra.mxu0 0.0
        %532 = vmatpush.msra.mxu0 0.0
        %533 = vmatpush.msra.mxu0 0.0
        %534 = vmatpush.msra.mxu0 0.0
        %535 = vmatpush.msra.mxu0 0.0
        %536 = vmatpush.msra.mxu0 0.0
        %537 = vmatpush.msra.mxu0 0.0
        %538 = vmatpush.msra.mxu0 0.0
        %539 = vmatpush.msra.mxu0 0.0
        %540 = vmatpush.msra.mxu0 0.0
        %541 = vmatpush.msra.mxu0 %v526
        %542 = vmatpush.msra.mxu0 %v525
        %543 = vmatmul.f32.gmra.mxu0 %v283
        %v544 = vpop.f32.mrf.mxu0
        %v545 = vadd.f32 0.0, %v544
        %546 = vmatmul.f32.gmra.mxu0 %v286
        %v547 = vpop.f32.mrf.mxu0
        %v548 = vadd.f32 0.0, %v547
        %549 = vmatmul.f32.gmra.mxu0 %v289
        %v550 = vpop.f32.mrf.mxu0
        %v551 = vadd.f32 0.0, %v550
        %552 = vmatmul.f32.gmra.mxu0 %v292
        %v553 = vpop.f32.mrf.mxu0
        %v554 = vadd.f32 0.0, %v553
        %555 = vmatmul.f32.gmra.mxu0 %v295
        %v556 = vpop.f32.mrf.mxu0
        %v557 = vadd.f32 0.0, %v556
        %558 = vmatmul.f32.gmra.mxu0 %v298
        %v559 = vpop.f32.mrf.mxu0
        %v560 = vadd.f32 0.0, %v559
        %561 = vmatmul.f32.gmra.mxu0 %v301
        %v562 = vpop.f32.mrf.mxu0
        %v563 = vadd.f32 0.0, %v562
        %564 = vmatmul.f32.gmra.mxu0 %v304
        %v565 = vpop.f32.mrf.mxu0
        %v566 = vadd.f32 0.0, %v565
        %567 = vmatmul.f32.gmra.mxu0 %v307
        %v568 = vpop.f32.mrf.mxu0
        %v569 = vadd.f32 0.0, %v568
        %570 = vmatmul.f32.gmra.mxu0 %v310
        %v571 = vpop.f32.mrf.mxu0
        %v572 = vadd.f32 0.0, %v571
        %573 = vmatmul.f32.gmra.mxu0 %v313
        %v574 = vpop.f32.mrf.mxu0
        %v575 = vadd.f32 0.0, %v574
        %576 = vmatmul.f32.gmra.mxu0 %v316
        %v577 = vpop.f32.mrf.mxu0
        %v578 = vadd.f32 0.0, %v577
        %579 = vmatmul.f32.gmra.mxu0 %v319
        %v580 = vpop.f32.mrf.mxu0
        %v581 = vadd.f32 0.0, %v580
        %582 = vmatmul.f32.gmra.mxu0 %v322
        %v583 = vpop.f32.mrf.mxu0
        %v584 = vadd.f32 0.0, %v583
        %585 = vmatmul.f32.gmra.mxu0 %v325
        %v586 = vpop.f32.mrf.mxu0
        %v587 = vadd.f32 0.0, %v586
        %588 = vmatmul.f32.gmra.mxu0 %v328
        %v589 = vpop.f32.mrf.mxu0
        %v590 = vadd.f32 0.0, %v589
        %591 = vmatmul.f32.gmra.mxu0 %v331
        %v592 = vpop.f32.mrf.mxu0
        %v593 = vadd.f32 0.0, %v592
        %594 = vmatmul.f32.gmra.mxu0 %v334
        %v595 = vpop.f32.mrf.mxu0
        %v596 = vadd.f32 0.0, %v595
        %597 = vmatmul.f32.gmra.mxu0 %v337
        %v598 = vpop.f32.mrf.mxu0
        %v599 = vadd.f32 0.0, %v598
        %600 = vmatmul.f32.gmra.mxu0 %v340
        %v601 = vpop.f32.mrf.mxu0
        %v602 = vadd.f32 0.0, %v601
        %603 = vmatmul.f32.gmra.mxu0 %v343
        %v604 = vpop.f32.mrf.mxu0
        %v605 = vadd.f32 0.0, %v604
        %606 = vmatmul.f32.gmra.mxu0 %v346
        %v607 = vpop.f32.mrf.mxu0
        %v608 = vadd.f32 0.0, %v607
        %609 = vmatmul.f32.gmra.mxu0 %v349
        %v610 = vpop.f32.mrf.mxu0
        %v611 = vadd.f32 0.0, %v610
        %612 = vmatmul.f32.gmra.mxu0 %v352
        %v613 = vpop.f32.mrf.mxu0
        %v614 = vadd.f32 0.0, %v613
        %615 = vmatmul.f32.gmra.mxu0 %v355
        %v616 = vpop.f32.mrf.mxu0
        %v617 = vadd.f32 0.0, %v616
        %618 = vmatmul.f32.gmra.mxu0 %v358
        %v619 = vpop.f32.mrf.mxu0
        %v620 = vadd.f32 0.0, %v619
        %621 = vmatmul.f32.gmra.mxu0 %v361
        %v622 = vpop.f32.mrf.mxu0
        %v623 = vadd.f32 0.0, %v622
        %624 = vmatmul.f32.gmra.mxu0 %v364
        %v625 = vpop.f32.mrf.mxu0
        %v626 = vadd.f32 0.0, %v625
        %627 = vmatmul.f32.gmra.mxu0 %v367
        %v628 = vpop.f32.mrf.mxu0
        %v629 = vadd.f32 0.0, %v628
        %630 = vmatmul.f32.gmra.mxu0 %v370
        %v631 = vpop.f32.mrf.mxu0
        %v632 = vadd.f32 0.0, %v631
        %633 = vmatmul.f32.gmra.mxu0 %v373
        %v634 = vpop.f32.mrf.mxu0
        %v635 = vadd.f32 0.0, %v634
        %636 = vmatmul.f32.gmra.mxu0 %v376
        %v637 = vpop.f32.mrf.mxu0
        %v638 = vadd.f32 0.0, %v637
        %639 = vdwg.mxu0
        %s640 = scalar_lea.vmem [#allocation2], 256
        %641 = vst.msk [vmem:[%s640] sm:$0xff] %vm491, %v545
        %642 = vst.msk [vmem:[%s640 + $0x8] sm:$0xff] %vm491, %v548
        %643 = vst.msk [vmem:[%s640 + $0x10] sm:$0xff] %vm491, %v551
        %644 = vst.msk [vmem:[%s640 + $0x18] sm:$0xff] %vm491, %v554
        %645 = vst.msk [vmem:[%s640 + $0x20] sm:$0xff] %vm491, %v557
        %646 = vst.msk [vmem:[%s640 + $0x28] sm:$0xff] %vm491, %v560
        %647 = vst.msk [vmem:[%s640 + $0x30] sm:$0xff] %vm491, %v563
        %648 = vst.msk [vmem:[%s640 + $0x38] sm:$0xff] %vm491, %v566
        %649 = vst.msk [vmem:[%s640 + $0x40] sm:$0xff] %vm491, %v569
        %650 = vst.msk [vmem:[%s640 + $0x48] sm:$0xff] %vm491, %v572
        %651 = vst.msk [vmem:[%s640 + $0x50] sm:$0xff] %vm491, %v575
        %652 = vst.msk [vmem:[%s640 + $0x58] sm:$0xff] %vm491, %v578
        %653 = vst.msk [vmem:[%s640 + $0x60] sm:$0xff] %vm491, %v581
        %654 = vst.msk [vmem:[%s640 + $0x68] sm:$0xff] %vm491, %v584
        %655 = vst.msk [vmem:[%s640 + $0x70] sm:$0xff] %vm491, %v587
        %656 = vst.msk [vmem:[%s640 + $0x78] sm:$0xff] %vm491, %v590
        %657 = vst.msk [vmem:[%s640 + $0x80] sm:$0xff] %vm491, %v593
        %658 = vst.msk [vmem:[%s640 + $0x88] sm:$0xff] %vm491, %v596
        %659 = vst.msk [vmem:[%s640 + $0x90] sm:$0xff] %vm491, %v599
        %660 = vst.msk [vmem:[%s640 + $0x98] sm:$0xff] %vm491, %v602
        %661 = vst.msk [vmem:[%s640 + $0xa0] sm:$0xff] %vm491, %v605
        %662 = vst.msk [vmem:[%s640 + $0xa8] sm:$0xff] %vm491, %v608
        %663 = vst.msk [vmem:[%s640 + $0xb0] sm:$0xff] %vm491, %v611
        %664 = vst.msk [vmem:[%s640 + $0xb8] sm:$0xff] %vm491, %v614
        %665 = vst.msk [vmem:[%s640 + $0xc0] sm:$0xff] %vm491, %v617
        %666 = vst.msk [vmem:[%s640 + $0xc8] sm:$0xff] %vm491, %v620
        %667 = vst.msk [vmem:[%s640 + $0xd0] sm:$0xff] %vm491, %v623
        %668 = vst.msk [vmem:[%s640 + $0xd8] sm:$0xff] %vm491, %v626
        %669 = vst.msk [vmem:[%s640 + $0xe0] sm:$0xff] %vm491, %v629
        %670 = vst.msk [vmem:[%s640 + $0xe8] sm:$0xff] %vm491, %v632
        %671 = vst.msk [vmem:[%s640 + $0xf0] sm:$0xff] %vm491, %v635
        %672 = vst.msk [vmem:[%s640 + $0xf8] sm:$0xff] %vm491, %v638
        %s673 = scalar_lea.vmem %s2, 32
        %v674 = vld [vmem:[%s673] sm:$0xff]
        %v675 = vld [vmem:[%s673 + $0x8] sm:$0xff]
        %676 = vmatpush.msra.mxu0 0.0
        %677 = vmatpush.msra.mxu0 0.0
        %678 = vmatpush.msra.mxu0 0.0
        %679 = vmatpush.msra.mxu0 0.0
        %680 = vmatpush.msra.mxu0 0.0
        %681 = vmatpush.msra.mxu0 0.0
        %682 = vmatpush.msra.mxu0 0.0
        %683 = vmatpush.msra.mxu0 0.0
        %684 = vmatpush.msra.mxu0 0.0
        %685 = vmatpush.msra.mxu0 0.0
        %686 = vmatpush.msra.mxu0 0.0
        %687 = vmatpush.msra.mxu0 0.0
        %688 = vmatpush.msra.mxu0 0.0
        %689 = vmatpush.msra.mxu0 0.0
        %690 = vmatpush.msra.mxu0 %v675
        %691 = vmatpush.msra.mxu0 %v674
        %692 = vmatmul.f32.gmra.mxu0 %v283
        %v693 = vpop.f32.mrf.mxu0
        %v694 = vadd.f32 0.0, %v693
        %695 = vmatmul.f32.gmra.mxu0 %v286
        %v696 = vpop.f32.mrf.mxu0
        %v697 = vadd.f32 0.0, %v696
        %698 = vmatmul.f32.gmra.mxu0 %v289
        %v699 = vpop.f32.mrf.mxu0
        %v700 = vadd.f32 0.0, %v699
        %701 = vmatmul.f32.gmra.mxu0 %v292
        %v702 = vpop.f32.mrf.mxu0
        %v703 = vadd.f32 0.0, %v702
        %704 = vmatmul.f32.gmra.mxu0 %v295
        %v705 = vpop.f32.mrf.mxu0
        %v706 = vadd.f32 0.0, %v705
        %707 = vmatmul.f32.gmra.mxu0 %v298
        %v708 = vpop.f32.mrf.mxu0
        %v709 = vadd.f32 0.0, %v708
        %710 = vmatmul.f32.gmra.mxu0 %v301
        %v711 = vpop.f32.mrf.mxu0
        %v712 = vadd.f32 0.0, %v711
        %713 = vmatmul.f32.gmra.mxu0 %v304
        %v714 = vpop.f32.mrf.mxu0
        %v715 = vadd.f32 0.0, %v714
        %716 = vmatmul.f32.gmra.mxu0 %v307
        %v717 = vpop.f32.mrf.mxu0
        %v718 = vadd.f32 0.0, %v717
        %719 = vmatmul.f32.gmra.mxu0 %v310
        %v720 = vpop.f32.mrf.mxu0
        %v721 = vadd.f32 0.0, %v720
        %722 = vmatmul.f32.gmra.mxu0 %v313
        %v723 = vpop.f32.mrf.mxu0
        %v724 = vadd.f32 0.0, %v723
        %725 = vmatmul.f32.gmra.mxu0 %v316
        %v726 = vpop.f32.mrf.mxu0
        %v727 = vadd.f32 0.0, %v726
        %728 = vmatmul.f32.gmra.mxu0 %v319
        %v729 = vpop.f32.mrf.mxu0
        %v730 = vadd.f32 0.0, %v729
        %731 = vmatmul.f32.gmra.mxu0 %v322
        %v732 = vpop.f32.mrf.mxu0
        %v733 = vadd.f32 0.0, %v732
        %734 = vmatmul.f32.gmra.mxu0 %v325
        %v735 = vpop.f32.mrf.mxu0
        %v736 = vadd.f32 0.0, %v735
        %737 = vmatmul.f32.gmra.mxu0 %v328
        %v738 = vpop.f32.mrf.mxu0
        %v739 = vadd.f32 0.0, %v738
        %740 = vmatmul.f32.gmra.mxu0 %v331
        %v741 = vpop.f32.mrf.mxu0
        %v742 = vadd.f32 0.0, %v741
        %743 = vmatmul.f32.gmra.mxu0 %v334
        %v744 = vpop.f32.mrf.mxu0
        %v745 = vadd.f32 0.0, %v744
        %746 = vmatmul.f32.gmra.mxu0 %v337
        %v747 = vpop.f32.mrf.mxu0
        %v748 = vadd.f32 0.0, %v747
        %749 = vmatmul.f32.gmra.mxu0 %v340
        %v750 = vpop.f32.mrf.mxu0
        %v751 = vadd.f32 0.0, %v750
        %752 = vmatmul.f32.gmra.mxu0 %v343
        %v753 = vpop.f32.mrf.mxu0
        %v754 = vadd.f32 0.0, %v753
        %755 = vmatmul.f32.gmra.mxu0 %v346
        %v756 = vpop.f32.mrf.mxu0
        %v757 = vadd.f32 0.0, %v756
        %758 = vmatmul.f32.gmra.mxu0 %v349
        %v759 = vpop.f32.mrf.mxu0
        %v760 = vadd.f32 0.0, %v759
        %761 = vmatmul.f32.gmra.mxu0 %v352
        %v762 = vpop.f32.mrf.mxu0
        %v763 = vadd.f32 0.0, %v762
        %764 = vmatmul.f32.gmra.mxu0 %v355
        %v765 = vpop.f32.mrf.mxu0
        %v766 = vadd.f32 0.0, %v765
        %767 = vmatmul.f32.gmra.mxu0 %v358
        %v768 = vpop.f32.mrf.mxu0
        %v769 = vadd.f32 0.0, %v768
        %770 = vmatmul.f32.gmra.mxu0 %v361
        %v771 = vpop.f32.mrf.mxu0
        %v772 = vadd.f32 0.0, %v771
        %773 = vmatmul.f32.gmra.mxu0 %v364
        %v774 = vpop.f32.mrf.mxu0
        %v775 = vadd.f32 0.0, %v774
        %776 = vmatmul.f32.gmra.mxu0 %v367
        %v777 = vpop.f32.mrf.mxu0
        %v778 = vadd.f32 0.0, %v777
        %779 = vmatmul.f32.gmra.mxu0 %v370
        %v780 = vpop.f32.mrf.mxu0
        %v781 = vadd.f32 0.0, %v780
        %782 = vmatmul.f32.gmra.mxu0 %v373
        %v783 = vpop.f32.mrf.mxu0
        %v784 = vadd.f32 0.0, %v783
        %785 = vmatmul.f32.gmra.mxu0 %v376
        %v786 = vpop.f32.mrf.mxu0
        %v787 = vadd.f32 0.0, %v786
        %788 = vdwg.mxu0
        %s789 = scalar_lea.vmem [#allocation2], 512
        %790 = vst.msk [vmem:[%s789] sm:$0xff] %vm491, %v694
        %791 = vst.msk [vmem:[%s789 + $0x8] sm:$0xff] %vm491, %v697
        %792 = vst.msk [vmem:[%s789 + $0x10] sm:$0xff] %vm491, %v700
        %793 = vst.msk [vmem:[%s789 + $0x18] sm:$0xff] %vm491, %v703
        %794 = vst.msk [vmem:[%s789 + $0x20] sm:$0xff] %vm491, %v706
        %795 = vst.msk [vmem:[%s789 + $0x28] sm:$0xff] %vm491, %v709
        %796 = vst.msk [vmem:[%s789 + $0x30] sm:$0xff] %vm491, %v712
        %797 = vst.msk [vmem:[%s789 + $0x38] sm:$0xff] %vm491, %v715
        %798 = vst.msk [vmem:[%s789 + $0x40] sm:$0xff] %vm491, %v718
        %799 = vst.msk [vmem:[%s789 + $0x48] sm:$0xff] %vm491, %v721
        %800 = vst.msk [vmem:[%s789 + $0x50] sm:$0xff] %vm491, %v724
        %801 = vst.msk [vmem:[%s789 + $0x58] sm:$0xff] %vm491, %v727
        %802 = vst.msk [vmem:[%s789 + $0x60] sm:$0xff] %vm491, %v730
        %803 = vst.msk [vmem:[%s789 + $0x68] sm:$0xff] %vm491, %v733
        %804 = vst.msk [vmem:[%s789 + $0x70] sm:$0xff] %vm491, %v736
        %805 = vst.msk [vmem:[%s789 + $0x78] sm:$0xff] %vm491, %v739
        %806 = vst.msk [vmem:[%s789 + $0x80] sm:$0xff] %vm491, %v742
        %807 = vst.msk [vmem:[%s789 + $0x88] sm:$0xff] %vm491, %v745
        %808 = vst.msk [vmem:[%s789 + $0x90] sm:$0xff] %vm491, %v748
        %809 = vst.msk [vmem:[%s789 + $0x98] sm:$0xff] %vm491, %v751
        %810 = vst.msk [vmem:[%s789 + $0xa0] sm:$0xff] %vm491, %v754
        %811 = vst.msk [vmem:[%s789 + $0xa8] sm:$0xff] %vm491, %v757
        %812 = vst.msk [vmem:[%s789 + $0xb0] sm:$0xff] %vm491, %v760
        %813 = vst.msk [vmem:[%s789 + $0xb8] sm:$0xff] %vm491, %v763
        %814 = vst.msk [vmem:[%s789 + $0xc0] sm:$0xff] %vm491, %v766
        %815 = vst.msk [vmem:[%s789 + $0xc8] sm:$0xff] %vm491, %v769
        %816 = vst.msk [vmem:[%s789 + $0xd0] sm:$0xff] %vm491, %v772
        %817 = vst.msk [vmem:[%s789 + $0xd8] sm:$0xff] %vm491, %v775
        %818 = vst.msk [vmem:[%s789 + $0xe0] sm:$0xff] %vm491, %v778
        %819 = vst.msk [vmem:[%s789 + $0xe8] sm:$0xff] %vm491, %v781
        %820 = vst.msk [vmem:[%s789 + $0xf0] sm:$0xff] %vm491, %v784
        %821 = vst.msk [vmem:[%s789 + $0xf8] sm:$0xff] %vm491, %v787
        %s822 = scalar_lea.vmem %s2, 48
        %v823 = vld [vmem:[%s822] sm:$0xff]
        %v824 = vld [vmem:[%s822 + $0x8] sm:$0xff]
        %825 = vmatpush.msra.mxu0 0.0
        %826 = vmatpush.msra.mxu0 0.0
        %827 = vmatpush.msra.mxu0 0.0
        %828 = vmatpush.msra.mxu0 0.0
        %829 = vmatpush.msra.mxu0 0.0
        %830 = vmatpush.msra.mxu0 0.0
        %831 = vmatpush.msra.mxu0 0.0
        %832 = vmatpush.msra.mxu0 0.0
        %833 = vmatpush.msra.mxu0 0.0
        %834 = vmatpush.msra.mxu0 0.0
        %835 = vmatpush.msra.mxu0 0.0
        %836 = vmatpush.msra.mxu0 0.0
        %837 = vmatpush.msra.mxu0 0.0
        %838 = vmatpush.msra.mxu0 0.0
        %839 = vmatpush.msra.mxu0 %v824
        %840 = vmatpush.msra.mxu0 %v823
        %841 = vmatmul.f32.gmra.mxu0 %v283
        %v842 = vpop.f32.mrf.mxu0
        %v843 = vadd.f32 0.0, %v842
        %844 = vmatmul.f32.gmra.mxu0 %v286
        %v845 = vpop.f32.mrf.mxu0
        %v846 = vadd.f32 0.0, %v845
        %847 = vmatmul.f32.gmra.mxu0 %v289
        %v848 = vpop.f32.mrf.mxu0
        %v849 = vadd.f32 0.0, %v848
        %850 = vmatmul.f32.gmra.mxu0 %v292
        %v851 = vpop.f32.mrf.mxu0
        %v852 = vadd.f32 0.0, %v851
        %853 = vmatmul.f32.gmra.mxu0 %v295
        %v854 = vpop.f32.mrf.mxu0
        %v855 = vadd.f32 0.0, %v854
        %856 = vmatmul.f32.gmra.mxu0 %v298
        %v857 = vpop.f32.mrf.mxu0
        %v858 = vadd.f32 0.0, %v857
        %859 = vmatmul.f32.gmra.mxu0 %v301
        %v860 = vpop.f32.mrf.mxu0
        %v861 = vadd.f32 0.0, %v860
        %862 = vmatmul.f32.gmra.mxu0 %v304
        %v863 = vpop.f32.mrf.mxu0
        %v864 = vadd.f32 0.0, %v863
        %865 = vmatmul.f32.gmra.mxu0 %v307
        %v866 = vpop.f32.mrf.mxu0
        %v867 = vadd.f32 0.0, %v866
        %868 = vmatmul.f32.gmra.mxu0 %v310
        %v869 = vpop.f32.mrf.mxu0
        %v870 = vadd.f32 0.0, %v869
        %871 = vmatmul.f32.gmra.mxu0 %v313
        %v872 = vpop.f32.mrf.mxu0
        %v873 = vadd.f32 0.0, %v872
        %874 = vmatmul.f32.gmra.mxu0 %v316
        %v875 = vpop.f32.mrf.mxu0
        %v876 = vadd.f32 0.0, %v875
        %877 = vmatmul.f32.gmra.mxu0 %v319
        %v878 = vpop.f32.mrf.mxu0
        %v879 = vadd.f32 0.0, %v878
        %880 = vmatmul.f32.gmra.mxu0 %v322
        %v881 = vpop.f32.mrf.mxu0
        %v882 = vadd.f32 0.0, %v881
        %883 = vmatmul.f32.gmra.mxu0 %v325
        %v884 = vpop.f32.mrf.mxu0
        %v885 = vadd.f32 0.0, %v884
        %886 = vmatmul.f32.gmra.mxu0 %v328
        %v887 = vpop.f32.mrf.mxu0
        %v888 = vadd.f32 0.0, %v887
        %889 = vmatmul.f32.gmra.mxu0 %v331
        %v890 = vpop.f32.mrf.mxu0
        %v891 = vadd.f32 0.0, %v890
        %892 = vmatmul.f32.gmra.mxu0 %v334
        %v893 = vpop.f32.mrf.mxu0
        %v894 = vadd.f32 0.0, %v893
        %895 = vmatmul.f32.gmra.mxu0 %v337
        %v896 = vpop.f32.mrf.mxu0
        %v897 = vadd.f32 0.0, %v896
        %898 = vmatmul.f32.gmra.mxu0 %v340
        %v899 = vpop.f32.mrf.mxu0
        %v900 = vadd.f32 0.0, %v899
        %901 = vmatmul.f32.gmra.mxu0 %v343
        %v902 = vpop.f32.mrf.mxu0
        %v903 = vadd.f32 0.0, %v902
        %904 = vmatmul.f32.gmra.mxu0 %v346
        %v905 = vpop.f32.mrf.mxu0
        %v906 = vadd.f32 0.0, %v905
        %907 = vmatmul.f32.gmra.mxu0 %v349
        %v908 = vpop.f32.mrf.mxu0
        %v909 = vadd.f32 0.0, %v908
        %910 = vmatmul.f32.gmra.mxu0 %v352
        %v911 = vpop.f32.mrf.mxu0
        %v912 = vadd.f32 0.0, %v911
        %913 = vmatmul.f32.gmra.mxu0 %v355
        %v914 = vpop.f32.mrf.mxu0
        %v915 = vadd.f32 0.0, %v914
        %916 = vmatmul.f32.gmra.mxu0 %v358
        %v917 = vpop.f32.mrf.mxu0
        %v918 = vadd.f32 0.0, %v917
        %919 = vmatmul.f32.gmra.mxu0 %v361
        %v920 = vpop.f32.mrf.mxu0
        %v921 = vadd.f32 0.0, %v920
        %922 = vmatmul.f32.gmra.mxu0 %v364
        %v923 = vpop.f32.mrf.mxu0
        %v924 = vadd.f32 0.0, %v923
        %925 = vmatmul.f32.gmra.mxu0 %v367
        %v926 = vpop.f32.mrf.mxu0
        %v927 = vadd.f32 0.0, %v926
        %928 = vmatmul.f32.gmra.mxu0 %v370
        %v929 = vpop.f32.mrf.mxu0
        %v930 = vadd.f32 0.0, %v929
        %931 = vmatmul.f32.gmra.mxu0 %v373
        %v932 = vpop.f32.mrf.mxu0
        %v933 = vadd.f32 0.0, %v932
        %934 = vmatmul.f32.gmra.mxu0 %v376
        %v935 = vpop.f32.mrf.mxu0
        %v936 = vadd.f32 0.0, %v935
        %937 = vdwg.mxu0
        %s938 = scalar_lea.vmem [#allocation2], 768
        %939 = vst.msk [vmem:[%s938] sm:$0xff] %vm491, %v843
        %940 = vst.msk [vmem:[%s938 + $0x8] sm:$0xff] %vm491, %v846
        %941 = vst.msk [vmem:[%s938 + $0x10] sm:$0xff] %vm491, %v849
        %942 = vst.msk [vmem:[%s938 + $0x18] sm:$0xff] %vm491, %v852
        %943 = vst.msk [vmem:[%s938 + $0x20] sm:$0xff] %vm491, %v855
        %944 = vst.msk [vmem:[%s938 + $0x28] sm:$0xff] %vm491, %v858
        %945 = vst.msk [vmem:[%s938 + $0x30] sm:$0xff] %vm491, %v861
        %946 = vst.msk [vmem:[%s938 + $0x38] sm:$0xff] %vm491, %v864
        %947 = vst.msk [vmem:[%s938 + $0x40] sm:$0xff] %vm491, %v867
        %948 = vst.msk [vmem:[%s938 + $0x48] sm:$0xff] %vm491, %v870
        %949 = vst.msk [vmem:[%s938 + $0x50] sm:$0xff] %vm491, %v873
        %950 = vst.msk [vmem:[%s938 + $0x58] sm:$0xff] %vm491, %v876
        %951 = vst.msk [vmem:[%s938 + $0x60] sm:$0xff] %vm491, %v879
        %952 = vst.msk [vmem:[%s938 + $0x68] sm:$0xff] %vm491, %v882
        %953 = vst.msk [vmem:[%s938 + $0x70] sm:$0xff] %vm491, %v885
        %954 = vst.msk [vmem:[%s938 + $0x78] sm:$0xff] %vm491, %v888
        %955 = vst.msk [vmem:[%s938 + $0x80] sm:$0xff] %vm491, %v891
        %956 = vst.msk [vmem:[%s938 + $0x88] sm:$0xff] %vm491, %v894
        %957 = vst.msk [vmem:[%s938 + $0x90] sm:$0xff] %vm491, %v897
        %958 = vst.msk [vmem:[%s938 + $0x98] sm:$0xff] %vm491, %v900
        %959 = vst.msk [vmem:[%s938 + $0xa0] sm:$0xff] %vm491, %v903
        %960 = vst.msk [vmem:[%s938 + $0xa8] sm:$0xff] %vm491, %v906
        %961 = vst.msk [vmem:[%s938 + $0xb0] sm:$0xff] %vm491, %v909
        %962 = vst.msk [vmem:[%s938 + $0xb8] sm:$0xff] %vm491, %v912
        %963 = vst.msk [vmem:[%s938 + $0xc0] sm:$0xff] %vm491, %v915
        %964 = vst.msk [vmem:[%s938 + $0xc8] sm:$0xff] %vm491, %v918
        %965 = vst.msk [vmem:[%s938 + $0xd0] sm:$0xff] %vm491, %v921
        %966 = vst.msk [vmem:[%s938 + $0xd8] sm:$0xff] %vm491, %v924
        %967 = vst.msk [vmem:[%s938 + $0xe0] sm:$0xff] %vm491, %v927
        %968 = vst.msk [vmem:[%s938 + $0xe8] sm:$0xff] %vm491, %v930
        %969 = vst.msk [vmem:[%s938 + $0xf0] sm:$0xff] %vm491, %v933
        %970 = vst.msk [vmem:[%s938 + $0xf8] sm:$0xff] %vm491, %v936
        %s971 = scalar_lea.vmem %s2, 64
        %v972 = vld [vmem:[%s971] sm:$0xff]
        %v973 = vld [vmem:[%s971 + $0x8] sm:$0xff]
        %974 = vmatpush.msra.mxu0 0.0
        %975 = vmatpush.msra.mxu0 0.0
        %976 = vmatpush.msra.mxu0 0.0
        %977 = vmatpush.msra.mxu0 0.0
        %978 = vmatpush.msra.mxu0 0.0
        %979 = vmatpush.msra.mxu0 0.0
        %980 = vmatpush.msra.mxu0 0.0
        %981 = vmatpush.msra.mxu0 0.0
        %982 = vmatpush.msra.mxu0 0.0
        %983 = vmatpush.msra.mxu0 0.0
        %984 = vmatpush.msra.mxu0 0.0
        %985 = vmatpush.msra.mxu0 0.0
        %986 = vmatpush.msra.mxu0 0.0
        %987 = vmatpush.msra.mxu0 0.0
        %988 = vmatpush.msra.mxu0 %v973
        %989 = vmatpush.msra.mxu0 %v972
        %990 = vmatmul.f32.gmra.mxu0 %v283
        %v991 = vpop.f32.mrf.mxu0
        %v992 = vadd.f32 0.0, %v991
        %993 = vmatmul.f32.gmra.mxu0 %v286
        %v994 = vpop.f32.mrf.mxu0
        %v995 = vadd.f32 0.0, %v994
        %996 = vmatmul.f32.gmra.mxu0 %v289
        %v997 = vpop.f32.mrf.mxu0
        %v998 = vadd.f32 0.0, %v997
        %999 = vmatmul.f32.gmra.mxu0 %v292
        %v1000 = vpop.f32.mrf.mxu0
        %v1001 = vadd.f32 0.0, %v1000
        %1002 = vmatmul.f32.gmra.mxu0 %v295
        %v1003 = vpop.f32.mrf.mxu0
        %v1004 = vadd.f32 0.0, %v1003
        %1005 = vmatmul.f32.gmra.mxu0 %v298
        %v1006 = vpop.f32.mrf.mxu0
        %v1007 = vadd.f32 0.0, %v1006
        %1008 = vmatmul.f32.gmra.mxu0 %v301
        %v1009 = vpop.f32.mrf.mxu0
        %v1010 = vadd.f32 0.0, %v1009
        %1011 = vmatmul.f32.gmra.mxu0 %v304
        %v1012 = vpop.f32.mrf.mxu0
        %v1013 = vadd.f32 0.0, %v1012
        %1014 = vmatmul.f32.gmra.mxu0 %v307
        %v1015 = vpop.f32.mrf.mxu0
        %v1016 = vadd.f32 0.0, %v1015
        %1017 = vmatmul.f32.gmra.mxu0 %v310
        %v1018 = vpop.f32.mrf.mxu0
        %v1019 = vadd.f32 0.0, %v1018
        %1020 = vmatmul.f32.gmra.mxu0 %v313
        %v1021 = vpop.f32.mrf.mxu0
        %v1022 = vadd.f32 0.0, %v1021
        %1023 = vmatmul.f32.gmra.mxu0 %v316
        %v1024 = vpop.f32.mrf.mxu0
        %v1025 = vadd.f32 0.0, %v1024
        %1026 = vmatmul.f32.gmra.mxu0 %v319
        %v1027 = vpop.f32.mrf.mxu0
        %v1028 = vadd.f32 0.0, %v1027
        %1029 = vmatmul.f32.gmra.mxu0 %v322
        %v1030 = vpop.f32.mrf.mxu0
        %v1031 = vadd.f32 0.0, %v1030
        %1032 = vmatmul.f32.gmra.mxu0 %v325
        %v1033 = vpop.f32.mrf.mxu0
        %v1034 = vadd.f32 0.0, %v1033
        %1035 = vmatmul.f32.gmra.mxu0 %v328
        %v1036 = vpop.f32.mrf.mxu0
        %v1037 = vadd.f32 0.0, %v1036
        %1038 = vmatmul.f32.gmra.mxu0 %v331
        %v1039 = vpop.f32.mrf.mxu0
        %v1040 = vadd.f32 0.0, %v1039
        %1041 = vmatmul.f32.gmra.mxu0 %v334
        %v1042 = vpop.f32.mrf.mxu0
        %v1043 = vadd.f32 0.0, %v1042
        %1044 = vmatmul.f32.gmra.mxu0 %v337
        %v1045 = vpop.f32.mrf.mxu0
        %v1046 = vadd.f32 0.0, %v1045
        %1047 = vmatmul.f32.gmra.mxu0 %v340
        %v1048 = vpop.f32.mrf.mxu0
        %v1049 = vadd.f32 0.0, %v1048
        %1050 = vmatmul.f32.gmra.mxu0 %v343
        %v1051 = vpop.f32.mrf.mxu0
        %v1052 = vadd.f32 0.0, %v1051
        %1053 = vmatmul.f32.gmra.mxu0 %v346
        %v1054 = vpop.f32.mrf.mxu0
        %v1055 = vadd.f32 0.0, %v1054
        %1056 = vmatmul.f32.gmra.mxu0 %v349
        %v1057 = vpop.f32.mrf.mxu0
        %v1058 = vadd.f32 0.0, %v1057
        %1059 = vmatmul.f32.gmra.mxu0 %v352
        %v1060 = vpop.f32.mrf.mxu0
        %v1061 = vadd.f32 0.0, %v1060
        %1062 = vmatmul.f32.gmra.mxu0 %v355
        %v1063 = vpop.f32.mrf.mxu0
        %v1064 = vadd.f32 0.0, %v1063
        %1065 = vmatmul.f32.gmra.mxu0 %v358
        %v1066 = vpop.f32.mrf.mxu0
        %v1067 = vadd.f32 0.0, %v1066
        %1068 = vmatmul.f32.gmra.mxu0 %v361
        %v1069 = vpop.f32.mrf.mxu0
        %v1070 = vadd.f32 0.0, %v1069
        %1071 = vmatmul.f32.gmra.mxu0 %v364
        %v1072 = vpop.f32.mrf.mxu0
        %v1073 = vadd.f32 0.0, %v1072
        %1074 = vmatmul.f32.gmra.mxu0 %v367
        %v1075 = vpop.f32.mrf.mxu0
        %v1076 = vadd.f32 0.0, %v1075
        %1077 = vmatmul.f32.gmra.mxu0 %v370
        %v1078 = vpop.f32.mrf.mxu0
        %v1079 = vadd.f32 0.0, %v1078
        %1080 = vmatmul.f32.gmra.mxu0 %v373
        %v1081 = vpop.f32.mrf.mxu0
        %v1082 = vadd.f32 0.0, %v1081
        %1083 = vmatmul.f32.gmra.mxu0 %v376
        %v1084 = vpop.f32.mrf.mxu0
        %v1085 = vadd.f32 0.0, %v1084
        %1086 = vdwg.mxu0
        %s1087 = scalar_lea.vmem [#allocation2], 1024
        %1088 = vst.msk [vmem:[%s1087] sm:$0xff] %vm491, %v992
        %1089 = vst.msk [vmem:[%s1087 + $0x8] sm:$0xff] %vm491, %v995
        %1090 = vst.msk [vmem:[%s1087 + $0x10] sm:$0xff] %vm491, %v998
        %1091 = vst.msk [vmem:[%s1087 + $0x18] sm:$0xff] %vm491, %v1001
        %1092 = vst.msk [vmem:[%s1087 + $0x20] sm:$0xff] %vm491, %v1004
        %1093 = vst.msk [vmem:[%s1087 + $0x28] sm:$0xff] %vm491, %v1007
        %1094 = vst.msk [vmem:[%s1087 + $0x30] sm:$0xff] %vm491, %v1010
        %1095 = vst.msk [vmem:[%s1087 + $0x38] sm:$0xff] %vm491, %v1013
        %1096 = vst.msk [vmem:[%s1087 + $0x40] sm:$0xff] %vm491, %v1016
        %1097 = vst.msk [vmem:[%s1087 + $0x48] sm:$0xff] %vm491, %v1019
        %1098 = vst.msk [vmem:[%s1087 + $0x50] sm:$0xff] %vm491, %v1022
        %1099 = vst.msk [vmem:[%s1087 + $0x58] sm:$0xff] %vm491, %v1025
        %1100 = vst.msk [vmem:[%s1087 + $0x60] sm:$0xff] %vm491, %v1028
        %1101 = vst.msk [vmem:[%s1087 + $0x68] sm:$0xff] %vm491, %v1031
        %1102 = vst.msk [vmem:[%s1087 + $0x70] sm:$0xff] %vm491, %v1034
        %1103 = vst.msk [vmem:[%s1087 + $0x78] sm:$0xff] %vm491, %v1037
        %1104 = vst.msk [vmem:[%s1087 + $0x80] sm:$0xff] %vm491, %v1040
        %1105 = vst.msk [vmem:[%s1087 + $0x88] sm:$0xff] %vm491, %v1043
        %1106 = vst.msk [vmem:[%s1087 + $0x90] sm:$0xff] %vm491, %v1046
        %1107 = vst.msk [vmem:[%s1087 + $0x98] sm:$0xff] %vm491, %v1049
        %1108 = vst.msk [vmem:[%s1087 + $0xa0] sm:$0xff] %vm491, %v1052
        %1109 = vst.msk [vmem:[%s1087 + $0xa8] sm:$0xff] %vm491, %v1055
        %1110 = vst.msk [vmem:[%s1087 + $0xb0] sm:$0xff] %vm491, %v1058
        %1111 = vst.msk [vmem:[%s1087 + $0xb8] sm:$0xff] %vm491, %v1061
        %1112 = vst.msk [vmem:[%s1087 + $0xc0] sm:$0xff] %vm491, %v1064
        %1113 = vst.msk [vmem:[%s1087 + $0xc8] sm:$0xff] %vm491, %v1067
        %1114 = vst.msk [vmem:[%s1087 + $0xd0] sm:$0xff] %vm491, %v1070
        %1115 = vst.msk [vmem:[%s1087 + $0xd8] sm:$0xff] %vm491, %v1073
        %1116 = vst.msk [vmem:[%s1087 + $0xe0] sm:$0xff] %vm491, %v1076
        %1117 = vst.msk [vmem:[%s1087 + $0xe8] sm:$0xff] %vm491, %v1079
        %1118 = vst.msk [vmem:[%s1087 + $0xf0] sm:$0xff] %vm491, %v1082
        %1119 = vst.msk [vmem:[%s1087 + $0xf8] sm:$0xff] %vm491, %v1085
        %s1120 = scalar_lea.vmem %s2, 80
        %v1121 = vld [vmem:[%s1120] sm:$0xff]
        %v1122 = vld [vmem:[%s1120 + $0x8] sm:$0xff]
        %1123 = vmatpush.msra.mxu0 0.0
        %1124 = vmatpush.msra.mxu0 0.0
        %1125 = vmatpush.msra.mxu0 0.0
        %1126 = vmatpush.msra.mxu0 0.0
        %1127 = vmatpush.msra.mxu0 0.0
        %1128 = vmatpush.msra.mxu0 0.0
        %1129 = vmatpush.msra.mxu0 0.0
        %1130 = vmatpush.msra.mxu0 0.0
        %1131 = vmatpush.msra.mxu0 0.0
        %1132 = vmatpush.msra.mxu0 0.0
        %1133 = vmatpush.msra.mxu0 0.0
        %1134 = vmatpush.msra.mxu0 0.0
        %1135 = vmatpush.msra.mxu0 0.0
        %1136 = vmatpush.msra.mxu0 0.0
        %1137 = vmatpush.msra.mxu0 %v1122
        %1138 = vmatpush.msra.mxu0 %v1121
        %1139 = vmatmul.f32.gmra.mxu0 %v283
        %v1140 = vpop.f32.mrf.mxu0
        %v1141 = vadd.f32 0.0, %v1140
        %1142 = vmatmul.f32.gmra.mxu0 %v286
        %v1143 = vpop.f32.mrf.mxu0
        %v1144 = vadd.f32 0.0, %v1143
        %1145 = vmatmul.f32.gmra.mxu0 %v289
        %v1146 = vpop.f32.mrf.mxu0
        %v1147 = vadd.f32 0.0, %v1146
        %1148 = vmatmul.f32.gmra.mxu0 %v292
        %v1149 = vpop.f32.mrf.mxu0
        %v1150 = vadd.f32 0.0, %v1149
        %1151 = vmatmul.f32.gmra.mxu0 %v295
        %v1152 = vpop.f32.mrf.mxu0
        %v1153 = vadd.f32 0.0, %v1152
        %1154 = vmatmul.f32.gmra.mxu0 %v298
        %v1155 = vpop.f32.mrf.mxu0
        %v1156 = vadd.f32 0.0, %v1155
        %1157 = vmatmul.f32.gmra.mxu0 %v301
        %v1158 = vpop.f32.mrf.mxu0
        %v1159 = vadd.f32 0.0, %v1158
        %1160 = vmatmul.f32.gmra.mxu0 %v304
        %v1161 = vpop.f32.mrf.mxu0
        %v1162 = vadd.f32 0.0, %v1161
        %1163 = vmatmul.f32.gmra.mxu0 %v307
        %v1164 = vpop.f32.mrf.mxu0
        %v1165 = vadd.f32 0.0, %v1164
        %1166 = vmatmul.f32.gmra.mxu0 %v310
        %v1167 = vpop.f32.mrf.mxu0
        %v1168 = vadd.f32 0.0, %v1167
        %1169 = vmatmul.f32.gmra.mxu0 %v313
        %v1170 = vpop.f32.mrf.mxu0
        %v1171 = vadd.f32 0.0, %v1170
        %1172 = vmatmul.f32.gmra.mxu0 %v316
        %v1173 = vpop.f32.mrf.mxu0
        %v1174 = vadd.f32 0.0, %v1173
        %1175 = vmatmul.f32.gmra.mxu0 %v319
        %v1176 = vpop.f32.mrf.mxu0
        %v1177 = vadd.f32 0.0, %v1176
        %1178 = vmatmul.f32.gmra.mxu0 %v322
        %v1179 = vpop.f32.mrf.mxu0
        %v1180 = vadd.f32 0.0, %v1179
        %1181 = vmatmul.f32.gmra.mxu0 %v325
        %v1182 = vpop.f32.mrf.mxu0
        %v1183 = vadd.f32 0.0, %v1182
        %1184 = vmatmul.f32.gmra.mxu0 %v328
        %v1185 = vpop.f32.mrf.mxu0
        %v1186 = vadd.f32 0.0, %v1185
        %1187 = vmatmul.f32.gmra.mxu0 %v331
        %v1188 = vpop.f32.mrf.mxu0
        %v1189 = vadd.f32 0.0, %v1188
        %1190 = vmatmul.f32.gmra.mxu0 %v334
        %v1191 = vpop.f32.mrf.mxu0
        %v1192 = vadd.f32 0.0, %v1191
        %1193 = vmatmul.f32.gmra.mxu0 %v337
        %v1194 = vpop.f32.mrf.mxu0
        %v1195 = vadd.f32 0.0, %v1194
        %1196 = vmatmul.f32.gmra.mxu0 %v340
        %v1197 = vpop.f32.mrf.mxu0
        %v1198 = vadd.f32 0.0, %v1197
        %1199 = vmatmul.f32.gmra.mxu0 %v343
        %v1200 = vpop.f32.mrf.mxu0
        %v1201 = vadd.f32 0.0, %v1200
        %1202 = vmatmul.f32.gmra.mxu0 %v346
        %v1203 = vpop.f32.mrf.mxu0
        %v1204 = vadd.f32 0.0, %v1203
        %1205 = vmatmul.f32.gmra.mxu0 %v349
        %v1206 = vpop.f32.mrf.mxu0
        %v1207 = vadd.f32 0.0, %v1206
        %1208 = vmatmul.f32.gmra.mxu0 %v352
        %v1209 = vpop.f32.mrf.mxu0
        %v1210 = vadd.f32 0.0, %v1209
        %1211 = vmatmul.f32.gmra.mxu0 %v355
        %v1212 = vpop.f32.mrf.mxu0
        %v1213 = vadd.f32 0.0, %v1212
        %1214 = vmatmul.f32.gmra.mxu0 %v358
        %v1215 = vpop.f32.mrf.mxu0
        %v1216 = vadd.f32 0.0, %v1215
        %1217 = vmatmul.f32.gmra.mxu0 %v361
        %v1218 = vpop.f32.mrf.mxu0
        %v1219 = vadd.f32 0.0, %v1218
        %1220 = vmatmul.f32.gmra.mxu0 %v364
        %v1221 = vpop.f32.mrf.mxu0
        %v1222 = vadd.f32 0.0, %v1221
        %1223 = vmatmul.f32.gmra.mxu0 %v367
        %v1224 = vpop.f32.mrf.mxu0
        %v1225 = vadd.f32 0.0, %v1224
        %1226 = vmatmul.f32.gmra.mxu0 %v370
        %v1227 = vpop.f32.mrf.mxu0
        %v1228 = vadd.f32 0.0, %v1227
        %1229 = vmatmul.f32.gmra.mxu0 %v373
        %v1230 = vpop.f32.mrf.mxu0
        %v1231 = vadd.f32 0.0, %v1230
        %1232 = vmatmul.f32.gmra.mxu0 %v376
        %v1233 = vpop.f32.mrf.mxu0
        %v1234 = vadd.f32 0.0, %v1233
        %1235 = vdwg.mxu0
        %s1236 = scalar_lea.vmem [#allocation2], 1280
        %1237 = vst.msk [vmem:[%s1236] sm:$0xff] %vm491, %v1141
        %1238 = vst.msk [vmem:[%s1236 + $0x8] sm:$0xff] %vm491, %v1144
        %1239 = vst.msk [vmem:[%s1236 + $0x10] sm:$0xff] %vm491, %v1147
        %1240 = vst.msk [vmem:[%s1236 + $0x18] sm:$0xff] %vm491, %v1150
        %1241 = vst.msk [vmem:[%s1236 + $0x20] sm:$0xff] %vm491, %v1153
        %1242 = vst.msk [vmem:[%s1236 + $0x28] sm:$0xff] %vm491, %v1156
        %1243 = vst.msk [vmem:[%s1236 + $0x30] sm:$0xff] %vm491, %v1159
        %1244 = vst.msk [vmem:[%s1236 + $0x38] sm:$0xff] %vm491, %v1162
        %1245 = vst.msk [vmem:[%s1236 + $0x40] sm:$0xff] %vm491, %v1165
        %1246 = vst.msk [vmem:[%s1236 + $0x48] sm:$0xff] %vm491, %v1168
        %1247 = vst.msk [vmem:[%s1236 + $0x50] sm:$0xff] %vm491, %v1171
        %1248 = vst.msk [vmem:[%s1236 + $0x58] sm:$0xff] %vm491, %v1174
        %1249 = vst.msk [vmem:[%s1236 + $0x60] sm:$0xff] %vm491, %v1177
        %1250 = vst.msk [vmem:[%s1236 + $0x68] sm:$0xff] %vm491, %v1180
        %1251 = vst.msk [vmem:[%s1236 + $0x70] sm:$0xff] %vm491, %v1183
        %1252 = vst.msk [vmem:[%s1236 + $0x78] sm:$0xff] %vm491, %v1186
        %1253 = vst.msk [vmem:[%s1236 + $0x80] sm:$0xff] %vm491, %v1189
        %1254 = vst.msk [vmem:[%s1236 + $0x88] sm:$0xff] %vm491, %v1192
        %1255 = vst.msk [vmem:[%s1236 + $0x90] sm:$0xff] %vm491, %v1195
        %1256 = vst.msk [vmem:[%s1236 + $0x98] sm:$0xff] %vm491, %v1198
        %1257 = vst.msk [vmem:[%s1236 + $0xa0] sm:$0xff] %vm491, %v1201
        %1258 = vst.msk [vmem:[%s1236 + $0xa8] sm:$0xff] %vm491, %v1204
        %1259 = vst.msk [vmem:[%s1236 + $0xb0] sm:$0xff] %vm491, %v1207
        %1260 = vst.msk [vmem:[%s1236 + $0xb8] sm:$0xff] %vm491, %v1210
        %1261 = vst.msk [vmem:[%s1236 + $0xc0] sm:$0xff] %vm491, %v1213
        %1262 = vst.msk [vmem:[%s1236 + $0xc8] sm:$0xff] %vm491, %v1216
        %1263 = vst.msk [vmem:[%s1236 + $0xd0] sm:$0xff] %vm491, %v1219
        %1264 = vst.msk [vmem:[%s1236 + $0xd8] sm:$0xff] %vm491, %v1222
        %1265 = vst.msk [vmem:[%s1236 + $0xe0] sm:$0xff] %vm491, %v1225
        %1266 = vst.msk [vmem:[%s1236 + $0xe8] sm:$0xff] %vm491, %v1228
        %1267 = vst.msk [vmem:[%s1236 + $0xf0] sm:$0xff] %vm491, %v1231
        %1268 = vst.msk [vmem:[%s1236 + $0xf8] sm:$0xff] %vm491, %v1234
        %s1269 = scalar_lea.vmem %s2, 96
        %v1270 = vld [vmem:[%s1269] sm:$0xff]
        %v1271 = vld [vmem:[%s1269 + $0x8] sm:$0xff]
        %1272 = vmatpush.msra.mxu0 0.0
        %1273 = vmatpush.msra.mxu0 0.0
        %1274 = vmatpush.msra.mxu0 0.0
        %1275 = vmatpush.msra.mxu0 0.0
        %1276 = vmatpush.msra.mxu0 0.0
        %1277 = vmatpush.msra.mxu0 0.0
        %1278 = vmatpush.msra.mxu0 0.0
        %1279 = vmatpush.msra.mxu0 0.0
        %1280 = vmatpush.msra.mxu0 0.0
        %1281 = vmatpush.msra.mxu0 0.0
        %1282 = vmatpush.msra.mxu0 0.0
        %1283 = vmatpush.msra.mxu0 0.0
        %1284 = vmatpush.msra.mxu0 0.0
        %1285 = vmatpush.msra.mxu0 0.0
        %1286 = vmatpush.msra.mxu0 %v1271
        %1287 = vmatpush.msra.mxu0 %v1270
        %1288 = vmatmul.f32.gmra.mxu0 %v283
        %v1289 = vpop.f32.mrf.mxu0
        %v1290 = vadd.f32 0.0, %v1289
        %1291 = vmatmul.f32.gmra.mxu0 %v286
        %v1292 = vpop.f32.mrf.mxu0
        %v1293 = vadd.f32 0.0, %v1292
        %1294 = vmatmul.f32.gmra.mxu0 %v289
        %v1295 = vpop.f32.mrf.mxu0
        %v1296 = vadd.f32 0.0, %v1295
        %1297 = vmatmul.f32.gmra.mxu0 %v292
        %v1298 = vpop.f32.mrf.mxu0
        %v1299 = vadd.f32 0.0, %v1298
        %1300 = vmatmul.f32.gmra.mxu0 %v295
        %v1301 = vpop.f32.mrf.mxu0
        %v1302 = vadd.f32 0.0, %v1301
        %1303 = vmatmul.f32.gmra.mxu0 %v298
        %v1304 = vpop.f32.mrf.mxu0
        %v1305 = vadd.f32 0.0, %v1304
        %1306 = vmatmul.f32.gmra.mxu0 %v301
        %v1307 = vpop.f32.mrf.mxu0
        %v1308 = vadd.f32 0.0, %v1307
        %1309 = vmatmul.f32.gmra.mxu0 %v304
        %v1310 = vpop.f32.mrf.mxu0
        %v1311 = vadd.f32 0.0, %v1310
        %1312 = vmatmul.f32.gmra.mxu0 %v307
        %v1313 = vpop.f32.mrf.mxu0
        %v1314 = vadd.f32 0.0, %v1313
        %1315 = vmatmul.f32.gmra.mxu0 %v310
        %v1316 = vpop.f32.mrf.mxu0
        %v1317 = vadd.f32 0.0, %v1316
        %1318 = vmatmul.f32.gmra.mxu0 %v313
        %v1319 = vpop.f32.mrf.mxu0
        %v1320 = vadd.f32 0.0, %v1319
        %1321 = vmatmul.f32.gmra.mxu0 %v316
        %v1322 = vpop.f32.mrf.mxu0
        %v1323 = vadd.f32 0.0, %v1322
        %1324 = vmatmul.f32.gmra.mxu0 %v319
        %v1325 = vpop.f32.mrf.mxu0
        %v1326 = vadd.f32 0.0, %v1325
        %1327 = vmatmul.f32.gmra.mxu0 %v322
        %v1328 = vpop.f32.mrf.mxu0
        %v1329 = vadd.f32 0.0, %v1328
        %1330 = vmatmul.f32.gmra.mxu0 %v325
        %v1331 = vpop.f32.mrf.mxu0
        %v1332 = vadd.f32 0.0, %v1331
        %1333 = vmatmul.f32.gmra.mxu0 %v328
        %v1334 = vpop.f32.mrf.mxu0
        %v1335 = vadd.f32 0.0, %v1334
        %1336 = vmatmul.f32.gmra.mxu0 %v331
        %v1337 = vpop.f32.mrf.mxu0
        %v1338 = vadd.f32 0.0, %v1337
        %1339 = vmatmul.f32.gmra.mxu0 %v334
        %v1340 = vpop.f32.mrf.mxu0
        %v1341 = vadd.f32 0.0, %v1340
        %1342 = vmatmul.f32.gmra.mxu0 %v337
        %v1343 = vpop.f32.mrf.mxu0
        %v1344 = vadd.f32 0.0, %v1343
        %1345 = vmatmul.f32.gmra.mxu0 %v340
        %v1346 = vpop.f32.mrf.mxu0
        %v1347 = vadd.f32 0.0, %v1346
        %1348 = vmatmul.f32.gmra.mxu0 %v343
        %v1349 = vpop.f32.mrf.mxu0
        %v1350 = vadd.f32 0.0, %v1349
        %1351 = vmatmul.f32.gmra.mxu0 %v346
        %v1352 = vpop.f32.mrf.mxu0
        %v1353 = vadd.f32 0.0, %v1352
        %1354 = vmatmul.f32.gmra.mxu0 %v349
        %v1355 = vpop.f32.mrf.mxu0
        %v1356 = vadd.f32 0.0, %v1355
        %1357 = vmatmul.f32.gmra.mxu0 %v352
        %v1358 = vpop.f32.mrf.mxu0
        %v1359 = vadd.f32 0.0, %v1358
        %1360 = vmatmul.f32.gmra.mxu0 %v355
        %v1361 = vpop.f32.mrf.mxu0
        %v1362 = vadd.f32 0.0, %v1361
        %1363 = vmatmul.f32.gmra.mxu0 %v358
        %v1364 = vpop.f32.mrf.mxu0
        %v1365 = vadd.f32 0.0, %v1364
        %1366 = vmatmul.f32.gmra.mxu0 %v361
        %v1367 = vpop.f32.mrf.mxu0
        %v1368 = vadd.f32 0.0, %v1367
        %1369 = vmatmul.f32.gmra.mxu0 %v364
        %v1370 = vpop.f32.mrf.mxu0
        %v1371 = vadd.f32 0.0, %v1370
        %1372 = vmatmul.f32.gmra.mxu0 %v367
        %v1373 = vpop.f32.mrf.mxu0
        %v1374 = vadd.f32 0.0, %v1373
        %1375 = vmatmul.f32.gmra.mxu0 %v370
        %v1376 = vpop.f32.mrf.mxu0
        %v1377 = vadd.f32 0.0, %v1376
        %1378 = vmatmul.f32.gmra.mxu0 %v373
        %v1379 = vpop.f32.mrf.mxu0
        %v1380 = vadd.f32 0.0, %v1379
        %1381 = vmatmul.f32.gmra.mxu0 %v376
        %v1382 = vpop.f32.mrf.mxu0
        %v1383 = vadd.f32 0.0, %v1382
        %1384 = vdwg.mxu0
        %s1385 = scalar_lea.vmem [#allocation2], 1536
        %1386 = vst.msk [vmem:[%s1385] sm:$0xff] %vm491, %v1290
        %1387 = vst.msk [vmem:[%s1385 + $0x8] sm:$0xff] %vm491, %v1293
        %1388 = vst.msk [vmem:[%s1385 + $0x10] sm:$0xff] %vm491, %v1296
        %1389 = vst.msk [vmem:[%s1385 + $0x18] sm:$0xff] %vm491, %v1299
        %1390 = vst.msk [vmem:[%s1385 + $0x20] sm:$0xff] %vm491, %v1302
        %1391 = vst.msk [vmem:[%s1385 + $0x28] sm:$0xff] %vm491, %v1305
        %1392 = vst.msk [vmem:[%s1385 + $0x30] sm:$0xff] %vm491, %v1308
        %1393 = vst.msk [vmem:[%s1385 + $0x38] sm:$0xff] %vm491, %v1311
        %1394 = vst.msk [vmem:[%s1385 + $0x40] sm:$0xff] %vm491, %v1314
        %1395 = vst.msk [vmem:[%s1385 + $0x48] sm:$0xff] %vm491, %v1317
        %1396 = vst.msk [vmem:[%s1385 + $0x50] sm:$0xff] %vm491, %v1320
        %1397 = vst.msk [vmem:[%s1385 + $0x58] sm:$0xff] %vm491, %v1323
        %1398 = vst.msk [vmem:[%s1385 + $0x60] sm:$0xff] %vm491, %v1326
        %1399 = vst.msk [vmem:[%s1385 + $0x68] sm:$0xff] %vm491, %v1329
        %1400 = vst.msk [vmem:[%s1385 + $0x70] sm:$0xff] %vm491, %v1332
        %1401 = vst.msk [vmem:[%s1385 + $0x78] sm:$0xff] %vm491, %v1335
        %1402 = vst.msk [vmem:[%s1385 + $0x80] sm:$0xff] %vm491, %v1338
        %1403 = vst.msk [vmem:[%s1385 + $0x88] sm:$0xff] %vm491, %v1341
        %1404 = vst.msk [vmem:[%s1385 + $0x90] sm:$0xff] %vm491, %v1344
        %1405 = vst.msk [vmem:[%s1385 + $0x98] sm:$0xff] %vm491, %v1347
        %1406 = vst.msk [vmem:[%s1385 + $0xa0] sm:$0xff] %vm491, %v1350
        %1407 = vst.msk [vmem:[%s1385 + $0xa8] sm:$0xff] %vm491, %v1353
        %1408 = vst.msk [vmem:[%s1385 + $0xb0] sm:$0xff] %vm491, %v1356
        %1409 = vst.msk [vmem:[%s1385 + $0xb8] sm:$0xff] %vm491, %v1359
        %1410 = vst.msk [vmem:[%s1385 + $0xc0] sm:$0xff] %vm491, %v1362
        %1411 = vst.msk [vmem:[%s1385 + $0xc8] sm:$0xff] %vm491, %v1365
        %1412 = vst.msk [vmem:[%s1385 + $0xd0] sm:$0xff] %vm491, %v1368
        %1413 = vst.msk [vmem:[%s1385 + $0xd8] sm:$0xff] %vm491, %v1371
        %1414 = vst.msk [vmem:[%s1385 + $0xe0] sm:$0xff] %vm491, %v1374
        %1415 = vst.msk [vmem:[%s1385 + $0xe8] sm:$0xff] %vm491, %v1377
        %1416 = vst.msk [vmem:[%s1385 + $0xf0] sm:$0xff] %vm491, %v1380
        %1417 = vst.msk [vmem:[%s1385 + $0xf8] sm:$0xff] %vm491, %v1383
        %s1418 = scalar_lea.vmem %s2, 112
        %v1419 = vld [vmem:[%s1418] sm:$0xff]
        %v1420 = vld [vmem:[%s1418 + $0x8] sm:$0xff]
        %1421 = vmatpush.msra.mxu0 0.0
        %1422 = vmatpush.msra.mxu0 0.0
        %1423 = vmatpush.msra.mxu0 0.0
        %1424 = vmatpush.msra.mxu0 0.0
        %1425 = vmatpush.msra.mxu0 0.0
        %1426 = vmatpush.msra.mxu0 0.0
        %1427 = vmatpush.msra.mxu0 0.0
        %1428 = vmatpush.msra.mxu0 0.0
        %1429 = vmatpush.msra.mxu0 0.0
        %1430 = vmatpush.msra.mxu0 0.0
        %1431 = vmatpush.msra.mxu0 0.0
        %1432 = vmatpush.msra.mxu0 0.0
        %1433 = vmatpush.msra.mxu0 0.0
        %1434 = vmatpush.msra.mxu0 0.0
        %1435 = vmatpush.msra.mxu0 %v1420
        %1436 = vmatpush.msra.mxu0 %v1419
        %1437 = vmatmul.f32.gmra.mxu0 %v283
        %v1438 = vpop.f32.mrf.mxu0
        %v1439 = vadd.f32 0.0, %v1438
        %1440 = vmatmul.f32.gmra.mxu0 %v286
        %v1441 = vpop.f32.mrf.mxu0
        %v1442 = vadd.f32 0.0, %v1441
        %1443 = vmatmul.f32.gmra.mxu0 %v289
        %v1444 = vpop.f32.mrf.mxu0
        %v1445 = vadd.f32 0.0, %v1444
        %1446 = vmatmul.f32.gmra.mxu0 %v292
        %v1447 = vpop.f32.mrf.mxu0
        %v1448 = vadd.f32 0.0, %v1447
        %1449 = vmatmul.f32.gmra.mxu0 %v295
        %v1450 = vpop.f32.mrf.mxu0
        %v1451 = vadd.f32 0.0, %v1450
        %1452 = vmatmul.f32.gmra.mxu0 %v298
        %v1453 = vpop.f32.mrf.mxu0
        %v1454 = vadd.f32 0.0, %v1453
        %1455 = vmatmul.f32.gmra.mxu0 %v301
        %v1456 = vpop.f32.mrf.mxu0
        %v1457 = vadd.f32 0.0, %v1456
        %1458 = vmatmul.f32.gmra.mxu0 %v304
        %v1459 = vpop.f32.mrf.mxu0
        %v1460 = vadd.f32 0.0, %v1459
        %1461 = vmatmul.f32.gmra.mxu0 %v307
        %v1462 = vpop.f32.mrf.mxu0
        %v1463 = vadd.f32 0.0, %v1462
        %1464 = vmatmul.f32.gmra.mxu0 %v310
        %v1465 = vpop.f32.mrf.mxu0
        %v1466 = vadd.f32 0.0, %v1465
        %1467 = vmatmul.f32.gmra.mxu0 %v313
        %v1468 = vpop.f32.mrf.mxu0
        %v1469 = vadd.f32 0.0, %v1468
        %1470 = vmatmul.f32.gmra.mxu0 %v316
        %v1471 = vpop.f32.mrf.mxu0
        %v1472 = vadd.f32 0.0, %v1471
        %1473 = vmatmul.f32.gmra.mxu0 %v319
        %v1474 = vpop.f32.mrf.mxu0
        %v1475 = vadd.f32 0.0, %v1474
        %1476 = vmatmul.f32.gmra.mxu0 %v322
        %v1477 = vpop.f32.mrf.mxu0
        %v1478 = vadd.f32 0.0, %v1477
        %1479 = vmatmul.f32.gmra.mxu0 %v325
        %v1480 = vpop.f32.mrf.mxu0
        %v1481 = vadd.f32 0.0, %v1480
        %1482 = vmatmul.f32.gmra.mxu0 %v328
        %v1483 = vpop.f32.mrf.mxu0
        %v1484 = vadd.f32 0.0, %v1483
        %1485 = vmatmul.f32.gmra.mxu0 %v331
        %v1486 = vpop.f32.mrf.mxu0
        %v1487 = vadd.f32 0.0, %v1486
        %1488 = vmatmul.f32.gmra.mxu0 %v334
        %v1489 = vpop.f32.mrf.mxu0
        %v1490 = vadd.f32 0.0, %v1489
        %1491 = vmatmul.f32.gmra.mxu0 %v337
        %v1492 = vpop.f32.mrf.mxu0
        %v1493 = vadd.f32 0.0, %v1492
        %1494 = vmatmul.f32.gmra.mxu0 %v340
        %v1495 = vpop.f32.mrf.mxu0
        %v1496 = vadd.f32 0.0, %v1495
        %1497 = vmatmul.f32.gmra.mxu0 %v343
        %v1498 = vpop.f32.mrf.mxu0
        %v1499 = vadd.f32 0.0, %v1498
        %1500 = vmatmul.f32.gmra.mxu0 %v346
        %v1501 = vpop.f32.mrf.mxu0
        %v1502 = vadd.f32 0.0, %v1501
        %1503 = vmatmul.f32.gmra.mxu0 %v349
        %v1504 = vpop.f32.mrf.mxu0
        %v1505 = vadd.f32 0.0, %v1504
        %1506 = vmatmul.f32.gmra.mxu0 %v352
        %v1507 = vpop.f32.mrf.mxu0
        %v1508 = vadd.f32 0.0, %v1507
        %1509 = vmatmul.f32.gmra.mxu0 %v355
        %v1510 = vpop.f32.mrf.mxu0
        %v1511 = vadd.f32 0.0, %v1510
        %1512 = vmatmul.f32.gmra.mxu0 %v358
        %v1513 = vpop.f32.mrf.mxu0
        %v1514 = vadd.f32 0.0, %v1513
        %1515 = vmatmul.f32.gmra.mxu0 %v361
        %v1516 = vpop.f32.mrf.mxu0
        %v1517 = vadd.f32 0.0, %v1516
        %1518 = vmatmul.f32.gmra.mxu0 %v364
        %v1519 = vpop.f32.mrf.mxu0
        %v1520 = vadd.f32 0.0, %v1519
        %1521 = vmatmul.f32.gmra.mxu0 %v367
        %v1522 = vpop.f32.mrf.mxu0
        %v1523 = vadd.f32 0.0, %v1522
        %1524 = vmatmul.f32.gmra.mxu0 %v370
        %v1525 = vpop.f32.mrf.mxu0
        %v1526 = vadd.f32 0.0, %v1525
        %1527 = vmatmul.f32.gmra.mxu0 %v373
        %v1528 = vpop.f32.mrf.mxu0
        %v1529 = vadd.f32 0.0, %v1528
        %1530 = vmatmul.f32.gmra.mxu0 %v376
        %v1531 = vpop.f32.mrf.mxu0
        %v1532 = vadd.f32 0.0, %v1531
        %1533 = vdwg.mxu0
        %s1534 = scalar_lea.vmem [#allocation2], 1792
        %1535 = vst.msk [vmem:[%s1534] sm:$0xff] %vm491, %v1439
        %1536 = vst.msk [vmem:[%s1534 + $0x8] sm:$0xff] %vm491, %v1442
        %1537 = vst.msk [vmem:[%s1534 + $0x10] sm:$0xff] %vm491, %v1445
        %1538 = vst.msk [vmem:[%s1534 + $0x18] sm:$0xff] %vm491, %v1448
        %1539 = vst.msk [vmem:[%s1534 + $0x20] sm:$0xff] %vm491, %v1451
        %1540 = vst.msk [vmem:[%s1534 + $0x28] sm:$0xff] %vm491, %v1454
        %1541 = vst.msk [vmem:[%s1534 + $0x30] sm:$0xff] %vm491, %v1457
        %1542 = vst.msk [vmem:[%s1534 + $0x38] sm:$0xff] %vm491, %v1460
        %1543 = vst.msk [vmem:[%s1534 + $0x40] sm:$0xff] %vm491, %v1463
        %1544 = vst.msk [vmem:[%s1534 + $0x48] sm:$0xff] %vm491, %v1466
        %1545 = vst.msk [vmem:[%s1534 + $0x50] sm:$0xff] %vm491, %v1469
        %1546 = vst.msk [vmem:[%s1534 + $0x58] sm:$0xff] %vm491, %v1472
        %1547 = vst.msk [vmem:[%s1534 + $0x60] sm:$0xff] %vm491, %v1475
        %1548 = vst.msk [vmem:[%s1534 + $0x68] sm:$0xff] %vm491, %v1478
        %1549 = vst.msk [vmem:[%s1534 + $0x70] sm:$0xff] %vm491, %v1481
        %1550 = vst.msk [vmem:[%s1534 + $0x78] sm:$0xff] %vm491, %v1484
        %1551 = vst.msk [vmem:[%s1534 + $0x80] sm:$0xff] %vm491, %v1487
        %1552 = vst.msk [vmem:[%s1534 + $0x88] sm:$0xff] %vm491, %v1490
        %1553 = vst.msk [vmem:[%s1534 + $0x90] sm:$0xff] %vm491, %v1493
        %1554 = vst.msk [vmem:[%s1534 + $0x98] sm:$0xff] %vm491, %v1496
        %1555 = vst.msk [vmem:[%s1534 + $0xa0] sm:$0xff] %vm491, %v1499
        %1556 = vst.msk [vmem:[%s1534 + $0xa8] sm:$0xff] %vm491, %v1502
        %1557 = vst.msk [vmem:[%s1534 + $0xb0] sm:$0xff] %vm491, %v1505
        %1558 = vst.msk [vmem:[%s1534 + $0xb8] sm:$0xff] %vm491, %v1508
        %1559 = vst.msk [vmem:[%s1534 + $0xc0] sm:$0xff] %vm491, %v1511
        %1560 = vst.msk [vmem:[%s1534 + $0xc8] sm:$0xff] %vm491, %v1514
        %1561 = vst.msk [vmem:[%s1534 + $0xd0] sm:$0xff] %vm491, %v1517
        %1562 = vst.msk [vmem:[%s1534 + $0xd8] sm:$0xff] %vm491, %v1520
        %1563 = vst.msk [vmem:[%s1534 + $0xe0] sm:$0xff] %vm491, %v1523
        %1564 = vst.msk [vmem:[%s1534 + $0xe8] sm:$0xff] %vm491, %v1526
        %1565 = vst.msk [vmem:[%s1534 + $0xf0] sm:$0xff] %vm491, %v1529
        %1566 = vst.msk [vmem:[%s1534 + $0xf8] sm:$0xff] %vm491, %v1532
        %s1567 = scalar_lea.vmem %s2, 128
        %v1568 = vld [vmem:[%s1567] sm:$0xff]
        %v1569 = vld [vmem:[%s1567 + $0x8] sm:$0xff]
        %1570 = vmatpush.msra.mxu0 0.0
        %1571 = vmatpush.msra.mxu0 0.0
        %1572 = vmatpush.msra.mxu0 0.0
        %1573 = vmatpush.msra.mxu0 0.0
        %1574 = vmatpush.msra.mxu0 0.0
        %1575 = vmatpush.msra.mxu0 0.0
        %1576 = vmatpush.msra.mxu0 0.0
        %1577 = vmatpush.msra.mxu0 0.0
        %1578 = vmatpush.msra.mxu0 0.0
        %1579 = vmatpush.msra.mxu0 0.0
        %1580 = vmatpush.msra.mxu0 0.0
        %1581 = vmatpush.msra.mxu0 0.0
        %1582 = vmatpush.msra.mxu0 0.0
        %1583 = vmatpush.msra.mxu0 0.0
        %1584 = vmatpush.msra.mxu0 %v1569
        %1585 = vmatpush.msra.mxu0 %v1568
        %1586 = vmatmul.f32.gmra.mxu0 %v283
        %v1587 = vpop.f32.mrf.mxu0
        %v1588 = vadd.f32 0.0, %v1587
        %1589 = vmatmul.f32.gmra.mxu0 %v286
        %v1590 = vpop.f32.mrf.mxu0
        %v1591 = vadd.f32 0.0, %v1590
        %1592 = vmatmul.f32.gmra.mxu0 %v289
        %v1593 = vpop.f32.mrf.mxu0
        %v1594 = vadd.f32 0.0, %v1593
        %1595 = vmatmul.f32.gmra.mxu0 %v292
        %v1596 = vpop.f32.mrf.mxu0
        %v1597 = vadd.f32 0.0, %v1596
        %1598 = vmatmul.f32.gmra.mxu0 %v295
        %v1599 = vpop.f32.mrf.mxu0
        %v1600 = vadd.f32 0.0, %v1599
        %1601 = vmatmul.f32.gmra.mxu0 %v298
        %v1602 = vpop.f32.mrf.mxu0
        %v1603 = vadd.f32 0.0, %v1602
        %1604 = vmatmul.f32.gmra.mxu0 %v301
        %v1605 = vpop.f32.mrf.mxu0
        %v1606 = vadd.f32 0.0, %v1605
        %1607 = vmatmul.f32.gmra.mxu0 %v304
        %v1608 = vpop.f32.mrf.mxu0
        %v1609 = vadd.f32 0.0, %v1608
        %1610 = vmatmul.f32.gmra.mxu0 %v307
        %v1611 = vpop.f32.mrf.mxu0
        %v1612 = vadd.f32 0.0, %v1611
        %1613 = vmatmul.f32.gmra.mxu0 %v310
        %v1614 = vpop.f32.mrf.mxu0
        %v1615 = vadd.f32 0.0, %v1614
        %1616 = vmatmul.f32.gmra.mxu0 %v313
        %v1617 = vpop.f32.mrf.mxu0
        %v1618 = vadd.f32 0.0, %v1617
        %1619 = vmatmul.f32.gmra.mxu0 %v316
        %v1620 = vpop.f32.mrf.mxu0
        %v1621 = vadd.f32 0.0, %v1620
        %1622 = vmatmul.f32.gmra.mxu0 %v319
        %v1623 = vpop.f32.mrf.mxu0
        %v1624 = vadd.f32 0.0, %v1623
        %1625 = vmatmul.f32.gmra.mxu0 %v322
        %v1626 = vpop.f32.mrf.mxu0
        %v1627 = vadd.f32 0.0, %v1626
        %1628 = vmatmul.f32.gmra.mxu0 %v325
        %v1629 = vpop.f32.mrf.mxu0
        %v1630 = vadd.f32 0.0, %v1629
        %1631 = vmatmul.f32.gmra.mxu0 %v328
        %v1632 = vpop.f32.mrf.mxu0
        %v1633 = vadd.f32 0.0, %v1632
        %1634 = vmatmul.f32.gmra.mxu0 %v331
        %v1635 = vpop.f32.mrf.mxu0
        %v1636 = vadd.f32 0.0, %v1635
        %1637 = vmatmul.f32.gmra.mxu0 %v334
        %v1638 = vpop.f32.mrf.mxu0
        %v1639 = vadd.f32 0.0, %v1638
        %1640 = vmatmul.f32.gmra.mxu0 %v337
        %v1641 = vpop.f32.mrf.mxu0
        %v1642 = vadd.f32 0.0, %v1641
        %1643 = vmatmul.f32.gmra.mxu0 %v340
        %v1644 = vpop.f32.mrf.mxu0
        %v1645 = vadd.f32 0.0, %v1644
        %1646 = vmatmul.f32.gmra.mxu0 %v343
        %v1647 = vpop.f32.mrf.mxu0
        %v1648 = vadd.f32 0.0, %v1647
        %1649 = vmatmul.f32.gmra.mxu0 %v346
        %v1650 = vpop.f32.mrf.mxu0
        %v1651 = vadd.f32 0.0, %v1650
        %1652 = vmatmul.f32.gmra.mxu0 %v349
        %v1653 = vpop.f32.mrf.mxu0
        %v1654 = vadd.f32 0.0, %v1653
        %1655 = vmatmul.f32.gmra.mxu0 %v352
        %v1656 = vpop.f32.mrf.mxu0
        %v1657 = vadd.f32 0.0, %v1656
        %1658 = vmatmul.f32.gmra.mxu0 %v355
        %v1659 = vpop.f32.mrf.mxu0
        %v1660 = vadd.f32 0.0, %v1659
        %1661 = vmatmul.f32.gmra.mxu0 %v358
        %v1662 = vpop.f32.mrf.mxu0
        %v1663 = vadd.f32 0.0, %v1662
        %1664 = vmatmul.f32.gmra.mxu0 %v361
        %v1665 = vpop.f32.mrf.mxu0
        %v1666 = vadd.f32 0.0, %v1665
        %1667 = vmatmul.f32.gmra.mxu0 %v364
        %v1668 = vpop.f32.mrf.mxu0
        %v1669 = vadd.f32 0.0, %v1668
        %1670 = vmatmul.f32.gmra.mxu0 %v367
        %v1671 = vpop.f32.mrf.mxu0
        %v1672 = vadd.f32 0.0, %v1671
        %1673 = vmatmul.f32.gmra.mxu0 %v370
        %v1674 = vpop.f32.mrf.mxu0
        %v1675 = vadd.f32 0.0, %v1674
        %1676 = vmatmul.f32.gmra.mxu0 %v373
        %v1677 = vpop.f32.mrf.mxu0
        %v1678 = vadd.f32 0.0, %v1677
        %1679 = vmatmul.f32.gmra.mxu0 %v376
        %v1680 = vpop.f32.mrf.mxu0
        %v1681 = vadd.f32 0.0, %v1680
        %1682 = vdwg.mxu0
        %s1683 = scalar_lea.vmem [#allocation2], 2048
        %1684 = vst.msk [vmem:[%s1683] sm:$0xff] %vm491, %v1588
        %1685 = vst.msk [vmem:[%s1683 + $0x8] sm:$0xff] %vm491, %v1591
        %1686 = vst.msk [vmem:[%s1683 + $0x10] sm:$0xff] %vm491, %v1594
        %1687 = vst.msk [vmem:[%s1683 + $0x18] sm:$0xff] %vm491, %v1597
        %1688 = vst.msk [vmem:[%s1683 + $0x20] sm:$0xff] %vm491, %v1600
        %1689 = vst.msk [vmem:[%s1683 + $0x28] sm:$0xff] %vm491, %v1603
        %1690 = vst.msk [vmem:[%s1683 + $0x30] sm:$0xff] %vm491, %v1606
        %1691 = vst.msk [vmem:[%s1683 + $0x38] sm:$0xff] %vm491, %v1609
        %1692 = vst.msk [vmem:[%s1683 + $0x40] sm:$0xff] %vm491, %v1612
        %1693 = vst.msk [vmem:[%s1683 + $0x48] sm:$0xff] %vm491, %v1615
        %1694 = vst.msk [vmem:[%s1683 + $0x50] sm:$0xff] %vm491, %v1618
        %1695 = vst.msk [vmem:[%s1683 + $0x58] sm:$0xff] %vm491, %v1621
        %1696 = vst.msk [vmem:[%s1683 + $0x60] sm:$0xff] %vm491, %v1624
        %1697 = vst.msk [vmem:[%s1683 + $0x68] sm:$0xff] %vm491, %v1627
        %1698 = vst.msk [vmem:[%s1683 + $0x70] sm:$0xff] %vm491, %v1630
        %1699 = vst.msk [vmem:[%s1683 + $0x78] sm:$0xff] %vm491, %v1633
        %1700 = vst.msk [vmem:[%s1683 + $0x80] sm:$0xff] %vm491, %v1636
        %1701 = vst.msk [vmem:[%s1683 + $0x88] sm:$0xff] %vm491, %v1639
        %1702 = vst.msk [vmem:[%s1683 + $0x90] sm:$0xff] %vm491, %v1642
        %1703 = vst.msk [vmem:[%s1683 + $0x98] sm:$0xff] %vm491, %v1645
        %1704 = vst.msk [vmem:[%s1683 + $0xa0] sm:$0xff] %vm491, %v1648
        %1705 = vst.msk [vmem:[%s1683 + $0xa8] sm:$0xff] %vm491, %v1651
        %1706 = vst.msk [vmem:[%s1683 + $0xb0] sm:$0xff] %vm491, %v1654
        %1707 = vst.msk [vmem:[%s1683 + $0xb8] sm:$0xff] %vm491, %v1657
        %1708 = vst.msk [vmem:[%s1683 + $0xc0] sm:$0xff] %vm491, %v1660
        %1709 = vst.msk [vmem:[%s1683 + $0xc8] sm:$0xff] %vm491, %v1663
        %1710 = vst.msk [vmem:[%s1683 + $0xd0] sm:$0xff] %vm491, %v1666
        %1711 = vst.msk [vmem:[%s1683 + $0xd8] sm:$0xff] %vm491, %v1669
        %1712 = vst.msk [vmem:[%s1683 + $0xe0] sm:$0xff] %vm491, %v1672
        %1713 = vst.msk [vmem:[%s1683 + $0xe8] sm:$0xff] %vm491, %v1675
        %1714 = vst.msk [vmem:[%s1683 + $0xf0] sm:$0xff] %vm491, %v1678
        %1715 = vst.msk [vmem:[%s1683 + $0xf8] sm:$0xff] %vm491, %v1681
        %s1716 = scalar_lea.vmem %s2, 144
        %v1717 = vld [vmem:[%s1716] sm:$0xff]
        %v1718 = vld [vmem:[%s1716 + $0x8] sm:$0xff]
        %1719 = vmatpush.msra.mxu0 0.0
        %1720 = vmatpush.msra.mxu0 0.0
        %1721 = vmatpush.msra.mxu0 0.0
        %1722 = vmatpush.msra.mxu0 0.0
        %1723 = vmatpush.msra.mxu0 0.0
        %1724 = vmatpush.msra.mxu0 0.0
        %1725 = vmatpush.msra.mxu0 0.0
        %1726 = vmatpush.msra.mxu0 0.0
        %1727 = vmatpush.msra.mxu0 0.0
        %1728 = vmatpush.msra.mxu0 0.0
        %1729 = vmatpush.msra.mxu0 0.0
        %1730 = vmatpush.msra.mxu0 0.0
        %1731 = vmatpush.msra.mxu0 0.0
        %1732 = vmatpush.msra.mxu0 0.0
        %1733 = vmatpush.msra.mxu0 %v1718
        %1734 = vmatpush.msra.mxu0 %v1717
        %1735 = vmatmul.f32.gmra.mxu0 %v283
        %v1736 = vpop.f32.mrf.mxu0
        %v1737 = vadd.f32 0.0, %v1736
        %1738 = vmatmul.f32.gmra.mxu0 %v286
        %v1739 = vpop.f32.mrf.mxu0
        %v1740 = vadd.f32 0.0, %v1739
        %1741 = vmatmul.f32.gmra.mxu0 %v289
        %v1742 = vpop.f32.mrf.mxu0
        %v1743 = vadd.f32 0.0, %v1742
        %1744 = vmatmul.f32.gmra.mxu0 %v292
        %v1745 = vpop.f32.mrf.mxu0
        %v1746 = vadd.f32 0.0, %v1745
        %1747 = vmatmul.f32.gmra.mxu0 %v295
        %v1748 = vpop.f32.mrf.mxu0
        %v1749 = vadd.f32 0.0, %v1748
        %1750 = vmatmul.f32.gmra.mxu0 %v298
        %v1751 = vpop.f32.mrf.mxu0
        %v1752 = vadd.f32 0.0, %v1751
        %1753 = vmatmul.f32.gmra.mxu0 %v301
        %v1754 = vpop.f32.mrf.mxu0
        %v1755 = vadd.f32 0.0, %v1754
        %1756 = vmatmul.f32.gmra.mxu0 %v304
        %v1757 = vpop.f32.mrf.mxu0
        %v1758 = vadd.f32 0.0, %v1757
        %1759 = vmatmul.f32.gmra.mxu0 %v307
        %v1760 = vpop.f32.mrf.mxu0
        %v1761 = vadd.f32 0.0, %v1760
        %1762 = vmatmul.f32.gmra.mxu0 %v310
        %v1763 = vpop.f32.mrf.mxu0
        %v1764 = vadd.f32 0.0, %v1763
        %1765 = vmatmul.f32.gmra.mxu0 %v313
        %v1766 = vpop.f32.mrf.mxu0
        %v1767 = vadd.f32 0.0, %v1766
        %1768 = vmatmul.f32.gmra.mxu0 %v316
        %v1769 = vpop.f32.mrf.mxu0
        %v1770 = vadd.f32 0.0, %v1769
        %1771 = vmatmul.f32.gmra.mxu0 %v319
        %v1772 = vpop.f32.mrf.mxu0
        %v1773 = vadd.f32 0.0, %v1772
        %1774 = vmatmul.f32.gmra.mxu0 %v322
        %v1775 = vpop.f32.mrf.mxu0
        %v1776 = vadd.f32 0.0, %v1775
        %1777 = vmatmul.f32.gmra.mxu0 %v325
        %v1778 = vpop.f32.mrf.mxu0
        %v1779 = vadd.f32 0.0, %v1778
        %1780 = vmatmul.f32.gmra.mxu0 %v328
        %v1781 = vpop.f32.mrf.mxu0
        %v1782 = vadd.f32 0.0, %v1781
        %1783 = vmatmul.f32.gmra.mxu0 %v331
        %v1784 = vpop.f32.mrf.mxu0
        %v1785 = vadd.f32 0.0, %v1784
        %1786 = vmatmul.f32.gmra.mxu0 %v334
        %v1787 = vpop.f32.mrf.mxu0
        %v1788 = vadd.f32 0.0, %v1787
        %1789 = vmatmul.f32.gmra.mxu0 %v337
        %v1790 = vpop.f32.mrf.mxu0
        %v1791 = vadd.f32 0.0, %v1790
        %1792 = vmatmul.f32.gmra.mxu0 %v340
        %v1793 = vpop.f32.mrf.mxu0
        %v1794 = vadd.f32 0.0, %v1793
        %1795 = vmatmul.f32.gmra.mxu0 %v343
        %v1796 = vpop.f32.mrf.mxu0
        %v1797 = vadd.f32 0.0, %v1796
        %1798 = vmatmul.f32.gmra.mxu0 %v346
        %v1799 = vpop.f32.mrf.mxu0
        %v1800 = vadd.f32 0.0, %v1799
        %1801 = vmatmul.f32.gmra.mxu0 %v349
        %v1802 = vpop.f32.mrf.mxu0
        %v1803 = vadd.f32 0.0, %v1802
        %1804 = vmatmul.f32.gmra.mxu0 %v352
        %v1805 = vpop.f32.mrf.mxu0
        %v1806 = vadd.f32 0.0, %v1805
        %1807 = vmatmul.f32.gmra.mxu0 %v355
        %v1808 = vpop.f32.mrf.mxu0
        %v1809 = vadd.f32 0.0, %v1808
        %1810 = vmatmul.f32.gmra.mxu0 %v358
        %v1811 = vpop.f32.mrf.mxu0
        %v1812 = vadd.f32 0.0, %v1811
        %1813 = vmatmul.f32.gmra.mxu0 %v361
        %v1814 = vpop.f32.mrf.mxu0
        %v1815 = vadd.f32 0.0, %v1814
        %1816 = vmatmul.f32.gmra.mxu0 %v364
        %v1817 = vpop.f32.mrf.mxu0
        %v1818 = vadd.f32 0.0, %v1817
        %1819 = vmatmul.f32.gmra.mxu0 %v367
        %v1820 = vpop.f32.mrf.mxu0
        %v1821 = vadd.f32 0.0, %v1820
        %1822 = vmatmul.f32.gmra.mxu0 %v370
        %v1823 = vpop.f32.mrf.mxu0
        %v1824 = vadd.f32 0.0, %v1823
        %1825 = vmatmul.f32.gmra.mxu0 %v373
        %v1826 = vpop.f32.mrf.mxu0
        %v1827 = vadd.f32 0.0, %v1826
        %1828 = vmatmul.f32.gmra.mxu0 %v376
        %v1829 = vpop.f32.mrf.mxu0
        %v1830 = vadd.f32 0.0, %v1829
        %1831 = vdwg.mxu0
        %s1832 = scalar_lea.vmem [#allocation2], 2304
        %1833 = vst.msk [vmem:[%s1832] sm:$0xff] %vm491, %v1737
        %1834 = vst.msk [vmem:[%s1832 + $0x8] sm:$0xff] %vm491, %v1740
        %1835 = vst.msk [vmem:[%s1832 + $0x10] sm:$0xff] %vm491, %v1743
        %1836 = vst.msk [vmem:[%s1832 + $0x18] sm:$0xff] %vm491, %v1746
        %1837 = vst.msk [vmem:[%s1832 + $0x20] sm:$0xff] %vm491, %v1749
        %1838 = vst.msk [vmem:[%s1832 + $0x28] sm:$0xff] %vm491, %v1752
        %1839 = vst.msk [vmem:[%s1832 + $0x30] sm:$0xff] %vm491, %v1755
        %1840 = vst.msk [vmem:[%s1832 + $0x38] sm:$0xff] %vm491, %v1758
        %1841 = vst.msk [vmem:[%s1832 + $0x40] sm:$0xff] %vm491, %v1761
        %1842 = vst.msk [vmem:[%s1832 + $0x48] sm:$0xff] %vm491, %v1764
        %1843 = vst.msk [vmem:[%s1832 + $0x50] sm:$0xff] %vm491, %v1767
        %1844 = vst.msk [vmem:[%s1832 + $0x58] sm:$0xff] %vm491, %v1770
        %1845 = vst.msk [vmem:[%s1832 + $0x60] sm:$0xff] %vm491, %v1773
        %1846 = vst.msk [vmem:[%s1832 + $0x68] sm:$0xff] %vm491, %v1776
        %1847 = vst.msk [vmem:[%s1832 + $0x70] sm:$0xff] %vm491, %v1779
        %1848 = vst.msk [vmem:[%s1832 + $0x78] sm:$0xff] %vm491, %v1782
        %1849 = vst.msk [vmem:[%s1832 + $0x80] sm:$0xff] %vm491, %v1785
        %1850 = vst.msk [vmem:[%s1832 + $0x88] sm:$0xff] %vm491, %v1788
        %1851 = vst.msk [vmem:[%s1832 + $0x90] sm:$0xff] %vm491, %v1791
        %1852 = vst.msk [vmem:[%s1832 + $0x98] sm:$0xff] %vm491, %v1794
        %1853 = vst.msk [vmem:[%s1832 + $0xa0] sm:$0xff] %vm491, %v1797
        %1854 = vst.msk [vmem:[%s1832 + $0xa8] sm:$0xff] %vm491, %v1800
        %1855 = vst.msk [vmem:[%s1832 + $0xb0] sm:$0xff] %vm491, %v1803
        %1856 = vst.msk [vmem:[%s1832 + $0xb8] sm:$0xff] %vm491, %v1806
        %1857 = vst.msk [vmem:[%s1832 + $0xc0] sm:$0xff] %vm491, %v1809
        %1858 = vst.msk [vmem:[%s1832 + $0xc8] sm:$0xff] %vm491, %v1812
        %1859 = vst.msk [vmem:[%s1832 + $0xd0] sm:$0xff] %vm491, %v1815
        %1860 = vst.msk [vmem:[%s1832 + $0xd8] sm:$0xff] %vm491, %v1818
        %1861 = vst.msk [vmem:[%s1832 + $0xe0] sm:$0xff] %vm491, %v1821
        %1862 = vst.msk [vmem:[%s1832 + $0xe8] sm:$0xff] %vm491, %v1824
        %1863 = vst.msk [vmem:[%s1832 + $0xf0] sm:$0xff] %vm491, %v1827
        %1864 = vst.msk [vmem:[%s1832 + $0xf8] sm:$0xff] %vm491, %v1830
        %s1865 = scalar_lea.vmem %s2, 160
        %v1866 = vld [vmem:[%s1865] sm:$0xff]
        %v1867 = vld [vmem:[%s1865 + $0x8] sm:$0xff]
        %1868 = vmatpush.msra.mxu0 0.0
        %1869 = vmatpush.msra.mxu0 0.0
        %1870 = vmatpush.msra.mxu0 0.0
        %1871 = vmatpush.msra.mxu0 0.0
        %1872 = vmatpush.msra.mxu0 0.0
        %1873 = vmatpush.msra.mxu0 0.0
        %1874 = vmatpush.msra.mxu0 0.0
        %1875 = vmatpush.msra.mxu0 0.0
        %1876 = vmatpush.msra.mxu0 0.0
        %1877 = vmatpush.msra.mxu0 0.0
        %1878 = vmatpush.msra.mxu0 0.0
        %1879 = vmatpush.msra.mxu0 0.0
        %1880 = vmatpush.msra.mxu0 0.0
        %1881 = vmatpush.msra.mxu0 0.0
        %1882 = vmatpush.msra.mxu0 %v1867
        %1883 = vmatpush.msra.mxu0 %v1866
        %1884 = vmatmul.f32.gmra.mxu0 %v283
        %v1885 = vpop.f32.mrf.mxu0
        %v1886 = vadd.f32 0.0, %v1885
        %1887 = vmatmul.f32.gmra.mxu0 %v286
        %v1888 = vpop.f32.mrf.mxu0
        %v1889 = vadd.f32 0.0, %v1888
        %1890 = vmatmul.f32.gmra.mxu0 %v289
        %v1891 = vpop.f32.mrf.mxu0
        %v1892 = vadd.f32 0.0, %v1891
        %1893 = vmatmul.f32.gmra.mxu0 %v292
        %v1894 = vpop.f32.mrf.mxu0
        %v1895 = vadd.f32 0.0, %v1894
        %1896 = vmatmul.f32.gmra.mxu0 %v295
        %v1897 = vpop.f32.mrf.mxu0
        %v1898 = vadd.f32 0.0, %v1897
        %1899 = vmatmul.f32.gmra.mxu0 %v298
        %v1900 = vpop.f32.mrf.mxu0
        %v1901 = vadd.f32 0.0, %v1900
        %1902 = vmatmul.f32.gmra.mxu0 %v301
        %v1903 = vpop.f32.mrf.mxu0
        %v1904 = vadd.f32 0.0, %v1903
        %1905 = vmatmul.f32.gmra.mxu0 %v304
        %v1906 = vpop.f32.mrf.mxu0
        %v1907 = vadd.f32 0.0, %v1906
        %1908 = vmatmul.f32.gmra.mxu0 %v307
        %v1909 = vpop.f32.mrf.mxu0
        %v1910 = vadd.f32 0.0, %v1909
        %1911 = vmatmul.f32.gmra.mxu0 %v310
        %v1912 = vpop.f32.mrf.mxu0
        %v1913 = vadd.f32 0.0, %v1912
        %1914 = vmatmul.f32.gmra.mxu0 %v313
        %v1915 = vpop.f32.mrf.mxu0
        %v1916 = vadd.f32 0.0, %v1915
        %1917 = vmatmul.f32.gmra.mxu0 %v316
        %v1918 = vpop.f32.mrf.mxu0
        %v1919 = vadd.f32 0.0, %v1918
        %1920 = vmatmul.f32.gmra.mxu0 %v319
        %v1921 = vpop.f32.mrf.mxu0
        %v1922 = vadd.f32 0.0, %v1921
        %1923 = vmatmul.f32.gmra.mxu0 %v322
        %v1924 = vpop.f32.mrf.mxu0
        %v1925 = vadd.f32 0.0, %v1924
        %1926 = vmatmul.f32.gmra.mxu0 %v325
        %v1927 = vpop.f32.mrf.mxu0
        %v1928 = vadd.f32 0.0, %v1927
        %1929 = vmatmul.f32.gmra.mxu0 %v328
        %v1930 = vpop.f32.mrf.mxu0
        %v1931 = vadd.f32 0.0, %v1930
        %1932 = vmatmul.f32.gmra.mxu0 %v331
        %v1933 = vpop.f32.mrf.mxu0
        %v1934 = vadd.f32 0.0, %v1933
        %1935 = vmatmul.f32.gmra.mxu0 %v334
        %v1936 = vpop.f32.mrf.mxu0
        %v1937 = vadd.f32 0.0, %v1936
        %1938 = vmatmul.f32.gmra.mxu0 %v337
        %v1939 = vpop.f32.mrf.mxu0
        %v1940 = vadd.f32 0.0, %v1939
        %1941 = vmatmul.f32.gmra.mxu0 %v340
        %v1942 = vpop.f32.mrf.mxu0
        %v1943 = vadd.f32 0.0, %v1942
        %1944 = vmatmul.f32.gmra.mxu0 %v343
        %v1945 = vpop.f32.mrf.mxu0
        %v1946 = vadd.f32 0.0, %v1945
        %1947 = vmatmul.f32.gmra.mxu0 %v346
        %v1948 = vpop.f32.mrf.mxu0
        %v1949 = vadd.f32 0.0, %v1948
        %1950 = vmatmul.f32.gmra.mxu0 %v349
        %v1951 = vpop.f32.mrf.mxu0
        %v1952 = vadd.f32 0.0, %v1951
        %1953 = vmatmul.f32.gmra.mxu0 %v352
        %v1954 = vpop.f32.mrf.mxu0
        %v1955 = vadd.f32 0.0, %v1954
        %1956 = vmatmul.f32.gmra.mxu0 %v355
        %v1957 = vpop.f32.mrf.mxu0
        %v1958 = vadd.f32 0.0, %v1957
        %1959 = vmatmul.f32.gmra.mxu0 %v358
        %v1960 = vpop.f32.mrf.mxu0
        %v1961 = vadd.f32 0.0, %v1960
        %1962 = vmatmul.f32.gmra.mxu0 %v361
        %v1963 = vpop.f32.mrf.mxu0
        %v1964 = vadd.f32 0.0, %v1963
        %1965 = vmatmul.f32.gmra.mxu0 %v364
        %v1966 = vpop.f32.mrf.mxu0
        %v1967 = vadd.f32 0.0, %v1966
        %1968 = vmatmul.f32.gmra.mxu0 %v367
        %v1969 = vpop.f32.mrf.mxu0
        %v1970 = vadd.f32 0.0, %v1969
        %1971 = vmatmul.f32.gmra.mxu0 %v370
        %v1972 = vpop.f32.mrf.mxu0
        %v1973 = vadd.f32 0.0, %v1972
        %1974 = vmatmul.f32.gmra.mxu0 %v373
        %v1975 = vpop.f32.mrf.mxu0
        %v1976 = vadd.f32 0.0, %v1975
        %1977 = vmatmul.f32.gmra.mxu0 %v376
        %v1978 = vpop.f32.mrf.mxu0
        %v1979 = vadd.f32 0.0, %v1978
        %1980 = vdwg.mxu0
        %s1981 = scalar_lea.vmem [#allocation2], 2560
        %1982 = vst.msk [vmem:[%s1981] sm:$0xff] %vm491, %v1886
        %1983 = vst.msk [vmem:[%s1981 + $0x8] sm:$0xff] %vm491, %v1889
        %1984 = vst.msk [vmem:[%s1981 + $0x10] sm:$0xff] %vm491, %v1892
        %1985 = vst.msk [vmem:[%s1981 + $0x18] sm:$0xff] %vm491, %v1895
        %1986 = vst.msk [vmem:[%s1981 + $0x20] sm:$0xff] %vm491, %v1898
        %1987 = vst.msk [vmem:[%s1981 + $0x28] sm:$0xff] %vm491, %v1901
        %1988 = vst.msk [vmem:[%s1981 + $0x30] sm:$0xff] %vm491, %v1904
        %1989 = vst.msk [vmem:[%s1981 + $0x38] sm:$0xff] %vm491, %v1907
        %1990 = vst.msk [vmem:[%s1981 + $0x40] sm:$0xff] %vm491, %v1910
        %1991 = vst.msk [vmem:[%s1981 + $0x48] sm:$0xff] %vm491, %v1913
        %1992 = vst.msk [vmem:[%s1981 + $0x50] sm:$0xff] %vm491, %v1916
        %1993 = vst.msk [vmem:[%s1981 + $0x58] sm:$0xff] %vm491, %v1919
        %1994 = vst.msk [vmem:[%s1981 + $0x60] sm:$0xff] %vm491, %v1922
        %1995 = vst.msk [vmem:[%s1981 + $0x68] sm:$0xff] %vm491, %v1925
        %1996 = vst.msk [vmem:[%s1981 + $0x70] sm:$0xff] %vm491, %v1928
        %1997 = vst.msk [vmem:[%s1981 + $0x78] sm:$0xff] %vm491, %v1931
        %1998 = vst.msk [vmem:[%s1981 + $0x80] sm:$0xff] %vm491, %v1934
        %1999 = vst.msk [vmem:[%s1981 + $0x88] sm:$0xff] %vm491, %v1937
        %2000 = vst.msk [vmem:[%s1981 + $0x90] sm:$0xff] %vm491, %v1940
        %2001 = vst.msk [vmem:[%s1981 + $0x98] sm:$0xff] %vm491, %v1943
        %2002 = vst.msk [vmem:[%s1981 + $0xa0] sm:$0xff] %vm491, %v1946
        %2003 = vst.msk [vmem:[%s1981 + $0xa8] sm:$0xff] %vm491, %v1949
        %2004 = vst.msk [vmem:[%s1981 + $0xb0] sm:$0xff] %vm491, %v1952
        %2005 = vst.msk [vmem:[%s1981 + $0xb8] sm:$0xff] %vm491, %v1955
        %2006 = vst.msk [vmem:[%s1981 + $0xc0] sm:$0xff] %vm491, %v1958
        %2007 = vst.msk [vmem:[%s1981 + $0xc8] sm:$0xff] %vm491, %v1961
        %2008 = vst.msk [vmem:[%s1981 + $0xd0] sm:$0xff] %vm491, %v1964
        %2009 = vst.msk [vmem:[%s1981 + $0xd8] sm:$0xff] %vm491, %v1967
        %2010 = vst.msk [vmem:[%s1981 + $0xe0] sm:$0xff] %vm491, %v1970
        %2011 = vst.msk [vmem:[%s1981 + $0xe8] sm:$0xff] %vm491, %v1973
        %2012 = vst.msk [vmem:[%s1981 + $0xf0] sm:$0xff] %vm491, %v1976
        %2013 = vst.msk [vmem:[%s1981 + $0xf8] sm:$0xff] %vm491, %v1979
        %s2014 = scalar_lea.vmem %s2, 176
        %v2015 = vld [vmem:[%s2014] sm:$0xff]
        %v2016 = vld [vmem:[%s2014 + $0x8] sm:$0xff]
        %2017 = vmatpush.msra.mxu0 0.0
        %2018 = vmatpush.msra.mxu0 0.0
        %2019 = vmatpush.msra.mxu0 0.0
        %2020 = vmatpush.msra.mxu0 0.0
        %2021 = vmatpush.msra.mxu0 0.0
        %2022 = vmatpush.msra.mxu0 0.0
        %2023 = vmatpush.msra.mxu0 0.0
        %2024 = vmatpush.msra.mxu0 0.0
        %2025 = vmatpush.msra.mxu0 0.0
        %2026 = vmatpush.msra.mxu0 0.0
        %2027 = vmatpush.msra.mxu0 0.0
        %2028 = vmatpush.msra.mxu0 0.0
        %2029 = vmatpush.msra.mxu0 0.0
        %2030 = vmatpush.msra.mxu0 0.0
        %2031 = vmatpush.msra.mxu0 %v2016
        %2032 = vmatpush.msra.mxu0 %v2015
        %2033 = vmatmul.f32.gmra.mxu0 %v283
        %v2034 = vpop.f32.mrf.mxu0
        %v2035 = vadd.f32 0.0, %v2034
        %2036 = vmatmul.f32.gmra.mxu0 %v286
        %v2037 = vpop.f32.mrf.mxu0
        %v2038 = vadd.f32 0.0, %v2037
        %2039 = vmatmul.f32.gmra.mxu0 %v289
        %v2040 = vpop.f32.mrf.mxu0
        %v2041 = vadd.f32 0.0, %v2040
        %2042 = vmatmul.f32.gmra.mxu0 %v292
        %v2043 = vpop.f32.mrf.mxu0
        %v2044 = vadd.f32 0.0, %v2043
        %2045 = vmatmul.f32.gmra.mxu0 %v295
        %v2046 = vpop.f32.mrf.mxu0
        %v2047 = vadd.f32 0.0, %v2046
        %2048 = vmatmul.f32.gmra.mxu0 %v298
        %v2049 = vpop.f32.mrf.mxu0
        %v2050 = vadd.f32 0.0, %v2049
        %2051 = vmatmul.f32.gmra.mxu0 %v301
        %v2052 = vpop.f32.mrf.mxu0
        %v2053 = vadd.f32 0.0, %v2052
        %2054 = vmatmul.f32.gmra.mxu0 %v304
        %v2055 = vpop.f32.mrf.mxu0
        %v2056 = vadd.f32 0.0, %v2055
        %2057 = vmatmul.f32.gmra.mxu0 %v307
        %v2058 = vpop.f32.mrf.mxu0
        %v2059 = vadd.f32 0.0, %v2058
        %2060 = vmatmul.f32.gmra.mxu0 %v310
        %v2061 = vpop.f32.mrf.mxu0
        %v2062 = vadd.f32 0.0, %v2061
        %2063 = vmatmul.f32.gmra.mxu0 %v313
        %v2064 = vpop.f32.mrf.mxu0
        %v2065 = vadd.f32 0.0, %v2064
        %2066 = vmatmul.f32.gmra.mxu0 %v316
        %v2067 = vpop.f32.mrf.mxu0
        %v2068 = vadd.f32 0.0, %v2067
        %2069 = vmatmul.f32.gmra.mxu0 %v319
        %v2070 = vpop.f32.mrf.mxu0
        %v2071 = vadd.f32 0.0, %v2070
        %2072 = vmatmul.f32.gmra.mxu0 %v322
        %v2073 = vpop.f32.mrf.mxu0
        %v2074 = vadd.f32 0.0, %v2073
        %2075 = vmatmul.f32.gmra.mxu0 %v325
        %v2076 = vpop.f32.mrf.mxu0
        %v2077 = vadd.f32 0.0, %v2076
        %2078 = vmatmul.f32.gmra.mxu0 %v328
        %v2079 = vpop.f32.mrf.mxu0
        %v2080 = vadd.f32 0.0, %v2079
        %2081 = vmatmul.f32.gmra.mxu0 %v331
        %v2082 = vpop.f32.mrf.mxu0
        %v2083 = vadd.f32 0.0, %v2082
        %2084 = vmatmul.f32.gmra.mxu0 %v334
        %v2085 = vpop.f32.mrf.mxu0
        %v2086 = vadd.f32 0.0, %v2085
        %2087 = vmatmul.f32.gmra.mxu0 %v337
        %v2088 = vpop.f32.mrf.mxu0
        %v2089 = vadd.f32 0.0, %v2088
        %2090 = vmatmul.f32.gmra.mxu0 %v340
        %v2091 = vpop.f32.mrf.mxu0
        %v2092 = vadd.f32 0.0, %v2091
        %2093 = vmatmul.f32.gmra.mxu0 %v343
        %v2094 = vpop.f32.mrf.mxu0
        %v2095 = vadd.f32 0.0, %v2094
        %2096 = vmatmul.f32.gmra.mxu0 %v346
        %v2097 = vpop.f32.mrf.mxu0
        %v2098 = vadd.f32 0.0, %v2097
        %2099 = vmatmul.f32.gmra.mxu0 %v349
        %v2100 = vpop.f32.mrf.mxu0
        %v2101 = vadd.f32 0.0, %v2100
        %2102 = vmatmul.f32.gmra.mxu0 %v352
        %v2103 = vpop.f32.mrf.mxu0
        %v2104 = vadd.f32 0.0, %v2103
        %2105 = vmatmul.f32.gmra.mxu0 %v355
        %v2106 = vpop.f32.mrf.mxu0
        %v2107 = vadd.f32 0.0, %v2106
        %2108 = vmatmul.f32.gmra.mxu0 %v358
        %v2109 = vpop.f32.mrf.mxu0
        %v2110 = vadd.f32 0.0, %v2109
        %2111 = vmatmul.f32.gmra.mxu0 %v361
        %v2112 = vpop.f32.mrf.mxu0
        %v2113 = vadd.f32 0.0, %v2112
        %2114 = vmatmul.f32.gmra.mxu0 %v364
        %v2115 = vpop.f32.mrf.mxu0
        %v2116 = vadd.f32 0.0, %v2115
        %2117 = vmatmul.f32.gmra.mxu0 %v367
        %v2118 = vpop.f32.mrf.mxu0
        %v2119 = vadd.f32 0.0, %v2118
        %2120 = vmatmul.f32.gmra.mxu0 %v370
        %v2121 = vpop.f32.mrf.mxu0
        %v2122 = vadd.f32 0.0, %v2121
        %2123 = vmatmul.f32.gmra.mxu0 %v373
        %v2124 = vpop.f32.mrf.mxu0
        %v2125 = vadd.f32 0.0, %v2124
        %2126 = vmatmul.f32.gmra.mxu0 %v376
        %v2127 = vpop.f32.mrf.mxu0
        %v2128 = vadd.f32 0.0, %v2127
        %2129 = vdwg.mxu0
        %s2130 = scalar_lea.vmem [#allocation2], 2816
        %2131 = vst.msk [vmem:[%s2130] sm:$0xff] %vm491, %v2035
        %2132 = vst.msk [vmem:[%s2130 + $0x8] sm:$0xff] %vm491, %v2038
        %2133 = vst.msk [vmem:[%s2130 + $0x10] sm:$0xff] %vm491, %v2041
        %2134 = vst.msk [vmem:[%s2130 + $0x18] sm:$0xff] %vm491, %v2044
        %2135 = vst.msk [vmem:[%s2130 + $0x20] sm:$0xff] %vm491, %v2047
        %2136 = vst.msk [vmem:[%s2130 + $0x28] sm:$0xff] %vm491, %v2050
        %2137 = vst.msk [vmem:[%s2130 + $0x30] sm:$0xff] %vm491, %v2053
        %2138 = vst.msk [vmem:[%s2130 + $0x38] sm:$0xff] %vm491, %v2056
        %2139 = vst.msk [vmem:[%s2130 + $0x40] sm:$0xff] %vm491, %v2059
        %2140 = vst.msk [vmem:[%s2130 + $0x48] sm:$0xff] %vm491, %v2062
        %2141 = vst.msk [vmem:[%s2130 + $0x50] sm:$0xff] %vm491, %v2065
        %2142 = vst.msk [vmem:[%s2130 + $0x58] sm:$0xff] %vm491, %v2068
        %2143 = vst.msk [vmem:[%s2130 + $0x60] sm:$0xff] %vm491, %v2071
        %2144 = vst.msk [vmem:[%s2130 + $0x68] sm:$0xff] %vm491, %v2074
        %2145 = vst.msk [vmem:[%s2130 + $0x70] sm:$0xff] %vm491, %v2077
        %2146 = vst.msk [vmem:[%s2130 + $0x78] sm:$0xff] %vm491, %v2080
        %2147 = vst.msk [vmem:[%s2130 + $0x80] sm:$0xff] %vm491, %v2083
        %2148 = vst.msk [vmem:[%s2130 + $0x88] sm:$0xff] %vm491, %v2086
        %2149 = vst.msk [vmem:[%s2130 + $0x90] sm:$0xff] %vm491, %v2089
        %2150 = vst.msk [vmem:[%s2130 + $0x98] sm:$0xff] %vm491, %v2092
        %2151 = vst.msk [vmem:[%s2130 + $0xa0] sm:$0xff] %vm491, %v2095
        %2152 = vst.msk [vmem:[%s2130 + $0xa8] sm:$0xff] %vm491, %v2098
        %2153 = vst.msk [vmem:[%s2130 + $0xb0] sm:$0xff] %vm491, %v2101
        %2154 = vst.msk [vmem:[%s2130 + $0xb8] sm:$0xff] %vm491, %v2104
        %2155 = vst.msk [vmem:[%s2130 + $0xc0] sm:$0xff] %vm491, %v2107
        %2156 = vst.msk [vmem:[%s2130 + $0xc8] sm:$0xff] %vm491, %v2110
        %2157 = vst.msk [vmem:[%s2130 + $0xd0] sm:$0xff] %vm491, %v2113
        %2158 = vst.msk [vmem:[%s2130 + $0xd8] sm:$0xff] %vm491, %v2116
        %2159 = vst.msk [vmem:[%s2130 + $0xe0] sm:$0xff] %vm491, %v2119
        %2160 = vst.msk [vmem:[%s2130 + $0xe8] sm:$0xff] %vm491, %v2122
        %2161 = vst.msk [vmem:[%s2130 + $0xf0] sm:$0xff] %vm491, %v2125
        %2162 = vst.msk [vmem:[%s2130 + $0xf8] sm:$0xff] %vm491, %v2128
        %s2163 = scalar_lea.vmem %s2, 192
        %v2164 = vld [vmem:[%s2163] sm:$0xff]
        %v2165 = vld [vmem:[%s2163 + $0x8] sm:$0xff]
        %2166 = vmatpush.msra.mxu0 0.0
        %2167 = vmatpush.msra.mxu0 0.0
        %2168 = vmatpush.msra.mxu0 0.0
        %2169 = vmatpush.msra.mxu0 0.0
        %2170 = vmatpush.msra.mxu0 0.0
        %2171 = vmatpush.msra.mxu0 0.0
        %2172 = vmatpush.msra.mxu0 0.0
        %2173 = vmatpush.msra.mxu0 0.0
        %2174 = vmatpush.msra.mxu0 0.0
        %2175 = vmatpush.msra.mxu0 0.0
        %2176 = vmatpush.msra.mxu0 0.0
        %2177 = vmatpush.msra.mxu0 0.0
        %2178 = vmatpush.msra.mxu0 0.0
        %2179 = vmatpush.msra.mxu0 0.0
        %2180 = vmatpush.msra.mxu0 %v2165
        %2181 = vmatpush.msra.mxu0 %v2164
        %2182 = vmatmul.f32.gmra.mxu0 %v283
        %v2183 = vpop.f32.mrf.mxu0
        %v2184 = vadd.f32 0.0, %v2183
        %2185 = vmatmul.f32.gmra.mxu0 %v286
        %v2186 = vpop.f32.mrf.mxu0
        %v2187 = vadd.f32 0.0, %v2186
        %2188 = vmatmul.f32.gmra.mxu0 %v289
        %v2189 = vpop.f32.mrf.mxu0
        %v2190 = vadd.f32 0.0, %v2189
        %2191 = vmatmul.f32.gmra.mxu0 %v292
        %v2192 = vpop.f32.mrf.mxu0
        %v2193 = vadd.f32 0.0, %v2192
        %2194 = vmatmul.f32.gmra.mxu0 %v295
        %v2195 = vpop.f32.mrf.mxu0
        %v2196 = vadd.f32 0.0, %v2195
        %2197 = vmatmul.f32.gmra.mxu0 %v298
        %v2198 = vpop.f32.mrf.mxu0
        %v2199 = vadd.f32 0.0, %v2198
        %2200 = vmatmul.f32.gmra.mxu0 %v301
        %v2201 = vpop.f32.mrf.mxu0
        %v2202 = vadd.f32 0.0, %v2201
        %2203 = vmatmul.f32.gmra.mxu0 %v304
        %v2204 = vpop.f32.mrf.mxu0
        %v2205 = vadd.f32 0.0, %v2204
        %2206 = vmatmul.f32.gmra.mxu0 %v307
        %v2207 = vpop.f32.mrf.mxu0
        %v2208 = vadd.f32 0.0, %v2207
        %2209 = vmatmul.f32.gmra.mxu0 %v310
        %v2210 = vpop.f32.mrf.mxu0
        %v2211 = vadd.f32 0.0, %v2210
        %2212 = vmatmul.f32.gmra.mxu0 %v313
        %v2213 = vpop.f32.mrf.mxu0
        %v2214 = vadd.f32 0.0, %v2213
        %2215 = vmatmul.f32.gmra.mxu0 %v316
        %v2216 = vpop.f32.mrf.mxu0
        %v2217 = vadd.f32 0.0, %v2216
        %2218 = vmatmul.f32.gmra.mxu0 %v319
        %v2219 = vpop.f32.mrf.mxu0
        %v2220 = vadd.f32 0.0, %v2219
        %2221 = vmatmul.f32.gmra.mxu0 %v322
        %v2222 = vpop.f32.mrf.mxu0
        %v2223 = vadd.f32 0.0, %v2222
        %2224 = vmatmul.f32.gmra.mxu0 %v325
        %v2225 = vpop.f32.mrf.mxu0
        %v2226 = vadd.f32 0.0, %v2225
        %2227 = vmatmul.f32.gmra.mxu0 %v328
        %v2228 = vpop.f32.mrf.mxu0
        %v2229 = vadd.f32 0.0, %v2228
        %2230 = vmatmul.f32.gmra.mxu0 %v331
        %v2231 = vpop.f32.mrf.mxu0
        %v2232 = vadd.f32 0.0, %v2231
        %2233 = vmatmul.f32.gmra.mxu0 %v334
        %v2234 = vpop.f32.mrf.mxu0
        %v2235 = vadd.f32 0.0, %v2234
        %2236 = vmatmul.f32.gmra.mxu0 %v337
        %v2237 = vpop.f32.mrf.mxu0
        %v2238 = vadd.f32 0.0, %v2237
        %2239 = vmatmul.f32.gmra.mxu0 %v340
        %v2240 = vpop.f32.mrf.mxu0
        %v2241 = vadd.f32 0.0, %v2240
        %2242 = vmatmul.f32.gmra.mxu0 %v343
        %v2243 = vpop.f32.mrf.mxu0
        %v2244 = vadd.f32 0.0, %v2243
        %2245 = vmatmul.f32.gmra.mxu0 %v346
        %v2246 = vpop.f32.mrf.mxu0
        %v2247 = vadd.f32 0.0, %v2246
        %2248 = vmatmul.f32.gmra.mxu0 %v349
        %v2249 = vpop.f32.mrf.mxu0
        %v2250 = vadd.f32 0.0, %v2249
        %2251 = vmatmul.f32.gmra.mxu0 %v352
        %v2252 = vpop.f32.mrf.mxu0
        %v2253 = vadd.f32 0.0, %v2252
        %2254 = vmatmul.f32.gmra.mxu0 %v355
        %v2255 = vpop.f32.mrf.mxu0
        %v2256 = vadd.f32 0.0, %v2255
        %2257 = vmatmul.f32.gmra.mxu0 %v358
        %v2258 = vpop.f32.mrf.mxu0
        %v2259 = vadd.f32 0.0, %v2258
        %2260 = vmatmul.f32.gmra.mxu0 %v361
        %v2261 = vpop.f32.mrf.mxu0
        %v2262 = vadd.f32 0.0, %v2261
        %2263 = vmatmul.f32.gmra.mxu0 %v364
        %v2264 = vpop.f32.mrf.mxu0
        %v2265 = vadd.f32 0.0, %v2264
        %2266 = vmatmul.f32.gmra.mxu0 %v367
        %v2267 = vpop.f32.mrf.mxu0
        %v2268 = vadd.f32 0.0, %v2267
        %2269 = vmatmul.f32.gmra.mxu0 %v370
        %v2270 = vpop.f32.mrf.mxu0
        %v2271 = vadd.f32 0.0, %v2270
        %2272 = vmatmul.f32.gmra.mxu0 %v373
        %v2273 = vpop.f32.mrf.mxu0
        %v2274 = vadd.f32 0.0, %v2273
        %2275 = vmatmul.f32.gmra.mxu0 %v376
        %v2276 = vpop.f32.mrf.mxu0
        %v2277 = vadd.f32 0.0, %v2276
        %2278 = vdwg.mxu0
        %s2279 = scalar_lea.vmem [#allocation2], 3072
        %2280 = vst.msk [vmem:[%s2279] sm:$0xff] %vm491, %v2184
        %2281 = vst.msk [vmem:[%s2279 + $0x8] sm:$0xff] %vm491, %v2187
        %2282 = vst.msk [vmem:[%s2279 + $0x10] sm:$0xff] %vm491, %v2190
        %2283 = vst.msk [vmem:[%s2279 + $0x18] sm:$0xff] %vm491, %v2193
        %2284 = vst.msk [vmem:[%s2279 + $0x20] sm:$0xff] %vm491, %v2196
        %2285 = vst.msk [vmem:[%s2279 + $0x28] sm:$0xff] %vm491, %v2199
        %2286 = vst.msk [vmem:[%s2279 + $0x30] sm:$0xff] %vm491, %v2202
        %2287 = vst.msk [vmem:[%s2279 + $0x38] sm:$0xff] %vm491, %v2205
        %2288 = vst.msk [vmem:[%s2279 + $0x40] sm:$0xff] %vm491, %v2208
        %2289 = vst.msk [vmem:[%s2279 + $0x48] sm:$0xff] %vm491, %v2211
        %2290 = vst.msk [vmem:[%s2279 + $0x50] sm:$0xff] %vm491, %v2214
        %2291 = vst.msk [vmem:[%s2279 + $0x58] sm:$0xff] %vm491, %v2217
        %2292 = vst.msk [vmem:[%s2279 + $0x60] sm:$0xff] %vm491, %v2220
        %2293 = vst.msk [vmem:[%s2279 + $0x68] sm:$0xff] %vm491, %v2223
        %2294 = vst.msk [vmem:[%s2279 + $0x70] sm:$0xff] %vm491, %v2226
        %2295 = vst.msk [vmem:[%s2279 + $0x78] sm:$0xff] %vm491, %v2229
        %2296 = vst.msk [vmem:[%s2279 + $0x80] sm:$0xff] %vm491, %v2232
        %2297 = vst.msk [vmem:[%s2279 + $0x88] sm:$0xff] %vm491, %v2235
        %2298 = vst.msk [vmem:[%s2279 + $0x90] sm:$0xff] %vm491, %v2238
        %2299 = vst.msk [vmem:[%s2279 + $0x98] sm:$0xff] %vm491, %v2241
        %2300 = vst.msk [vmem:[%s2279 + $0xa0] sm:$0xff] %vm491, %v2244
        %2301 = vst.msk [vmem:[%s2279 + $0xa8] sm:$0xff] %vm491, %v2247
        %2302 = vst.msk [vmem:[%s2279 + $0xb0] sm:$0xff] %vm491, %v2250
        %2303 = vst.msk [vmem:[%s2279 + $0xb8] sm:$0xff] %vm491, %v2253
        %2304 = vst.msk [vmem:[%s2279 + $0xc0] sm:$0xff] %vm491, %v2256
        %2305 = vst.msk [vmem:[%s2279 + $0xc8] sm:$0xff] %vm491, %v2259
        %2306 = vst.msk [vmem:[%s2279 + $0xd0] sm:$0xff] %vm491, %v2262
        %2307 = vst.msk [vmem:[%s2279 + $0xd8] sm:$0xff] %vm491, %v2265
        %2308 = vst.msk [vmem:[%s2279 + $0xe0] sm:$0xff] %vm491, %v2268
        %2309 = vst.msk [vmem:[%s2279 + $0xe8] sm:$0xff] %vm491, %v2271
        %2310 = vst.msk [vmem:[%s2279 + $0xf0] sm:$0xff] %vm491, %v2274
        %2311 = vst.msk [vmem:[%s2279 + $0xf8] sm:$0xff] %vm491, %v2277
        %s2312 = scalar_lea.vmem %s2, 208
        %v2313 = vld [vmem:[%s2312] sm:$0xff]
        %v2314 = vld [vmem:[%s2312 + $0x8] sm:$0xff]
        %2315 = vmatpush.msra.mxu0 0.0
        %2316 = vmatpush.msra.mxu0 0.0
        %2317 = vmatpush.msra.mxu0 0.0
        %2318 = vmatpush.msra.mxu0 0.0
        %2319 = vmatpush.msra.mxu0 0.0
        %2320 = vmatpush.msra.mxu0 0.0
        %2321 = vmatpush.msra.mxu0 0.0
        %2322 = vmatpush.msra.mxu0 0.0
        %2323 = vmatpush.msra.mxu0 0.0
        %2324 = vmatpush.msra.mxu0 0.0
        %2325 = vmatpush.msra.mxu0 0.0
        %2326 = vmatpush.msra.mxu0 0.0
        %2327 = vmatpush.msra.mxu0 0.0
        %2328 = vmatpush.msra.mxu0 0.0
        %2329 = vmatpush.msra.mxu0 %v2314
        %2330 = vmatpush.msra.mxu0 %v2313
        %2331 = vmatmul.f32.gmra.mxu0 %v283
        %v2332 = vpop.f32.mrf.mxu0
        %v2333 = vadd.f32 0.0, %v2332
        %2334 = vmatmul.f32.gmra.mxu0 %v286
        %v2335 = vpop.f32.mrf.mxu0
        %v2336 = vadd.f32 0.0, %v2335
        %2337 = vmatmul.f32.gmra.mxu0 %v289
        %v2338 = vpop.f32.mrf.mxu0
        %v2339 = vadd.f32 0.0, %v2338
        %2340 = vmatmul.f32.gmra.mxu0 %v292
        %v2341 = vpop.f32.mrf.mxu0
        %v2342 = vadd.f32 0.0, %v2341
        %2343 = vmatmul.f32.gmra.mxu0 %v295
        %v2344 = vpop.f32.mrf.mxu0
        %v2345 = vadd.f32 0.0, %v2344
        %2346 = vmatmul.f32.gmra.mxu0 %v298
        %v2347 = vpop.f32.mrf.mxu0
        %v2348 = vadd.f32 0.0, %v2347
        %2349 = vmatmul.f32.gmra.mxu0 %v301
        %v2350 = vpop.f32.mrf.mxu0
        %v2351 = vadd.f32 0.0, %v2350
        %2352 = vmatmul.f32.gmra.mxu0 %v304
        %v2353 = vpop.f32.mrf.mxu0
        %v2354 = vadd.f32 0.0, %v2353
        %2355 = vmatmul.f32.gmra.mxu0 %v307
        %v2356 = vpop.f32.mrf.mxu0
        %v2357 = vadd.f32 0.0, %v2356
        %2358 = vmatmul.f32.gmra.mxu0 %v310
        %v2359 = vpop.f32.mrf.mxu0
        %v2360 = vadd.f32 0.0, %v2359
        %2361 = vmatmul.f32.gmra.mxu0 %v313
        %v2362 = vpop.f32.mrf.mxu0
        %v2363 = vadd.f32 0.0, %v2362
        %2364 = vmatmul.f32.gmra.mxu0 %v316
        %v2365 = vpop.f32.mrf.mxu0
        %v2366 = vadd.f32 0.0, %v2365
        %2367 = vmatmul.f32.gmra.mxu0 %v319
        %v2368 = vpop.f32.mrf.mxu0
        %v2369 = vadd.f32 0.0, %v2368
        %2370 = vmatmul.f32.gmra.mxu0 %v322
        %v2371 = vpop.f32.mrf.mxu0
        %v2372 = vadd.f32 0.0, %v2371
        %2373 = vmatmul.f32.gmra.mxu0 %v325
        %v2374 = vpop.f32.mrf.mxu0
        %v2375 = vadd.f32 0.0, %v2374
        %2376 = vmatmul.f32.gmra.mxu0 %v328
        %v2377 = vpop.f32.mrf.mxu0
        %v2378 = vadd.f32 0.0, %v2377
        %2379 = vmatmul.f32.gmra.mxu0 %v331
        %v2380 = vpop.f32.mrf.mxu0
        %v2381 = vadd.f32 0.0, %v2380
        %2382 = vmatmul.f32.gmra.mxu0 %v334
        %v2383 = vpop.f32.mrf.mxu0
        %v2384 = vadd.f32 0.0, %v2383
        %2385 = vmatmul.f32.gmra.mxu0 %v337
        %v2386 = vpop.f32.mrf.mxu0
        %v2387 = vadd.f32 0.0, %v2386
        %2388 = vmatmul.f32.gmra.mxu0 %v340
        %v2389 = vpop.f32.mrf.mxu0
        %v2390 = vadd.f32 0.0, %v2389
        %2391 = vmatmul.f32.gmra.mxu0 %v343
        %v2392 = vpop.f32.mrf.mxu0
        %v2393 = vadd.f32 0.0, %v2392
        %2394 = vmatmul.f32.gmra.mxu0 %v346
        %v2395 = vpop.f32.mrf.mxu0
        %v2396 = vadd.f32 0.0, %v2395
        %2397 = vmatmul.f32.gmra.mxu0 %v349
        %v2398 = vpop.f32.mrf.mxu0
        %v2399 = vadd.f32 0.0, %v2398
        %2400 = vmatmul.f32.gmra.mxu0 %v352
        %v2401 = vpop.f32.mrf.mxu0
        %v2402 = vadd.f32 0.0, %v2401
        %2403 = vmatmul.f32.gmra.mxu0 %v355
        %v2404 = vpop.f32.mrf.mxu0
        %v2405 = vadd.f32 0.0, %v2404
        %2406 = vmatmul.f32.gmra.mxu0 %v358
        %v2407 = vpop.f32.mrf.mxu0
        %v2408 = vadd.f32 0.0, %v2407
        %2409 = vmatmul.f32.gmra.mxu0 %v361
        %v2410 = vpop.f32.mrf.mxu0
        %v2411 = vadd.f32 0.0, %v2410
        %2412 = vmatmul.f32.gmra.mxu0 %v364
        %v2413 = vpop.f32.mrf.mxu0
        %v2414 = vadd.f32 0.0, %v2413
        %2415 = vmatmul.f32.gmra.mxu0 %v367
        %v2416 = vpop.f32.mrf.mxu0
        %v2417 = vadd.f32 0.0, %v2416
        %2418 = vmatmul.f32.gmra.mxu0 %v370
        %v2419 = vpop.f32.mrf.mxu0
        %v2420 = vadd.f32 0.0, %v2419
        %2421 = vmatmul.f32.gmra.mxu0 %v373
        %v2422 = vpop.f32.mrf.mxu0
        %v2423 = vadd.f32 0.0, %v2422
        %2424 = vmatmul.f32.gmra.mxu0 %v376
        %v2425 = vpop.f32.mrf.mxu0
        %v2426 = vadd.f32 0.0, %v2425
        %2427 = vdwg.mxu0
        %s2428 = scalar_lea.vmem [#allocation2], 3328
        %2429 = vst.msk [vmem:[%s2428] sm:$0xff] %vm491, %v2333
        %2430 = vst.msk [vmem:[%s2428 + $0x8] sm:$0xff] %vm491, %v2336
        %2431 = vst.msk [vmem:[%s2428 + $0x10] sm:$0xff] %vm491, %v2339
        %2432 = vst.msk [vmem:[%s2428 + $0x18] sm:$0xff] %vm491, %v2342
        %2433 = vst.msk [vmem:[%s2428 + $0x20] sm:$0xff] %vm491, %v2345
        %2434 = vst.msk [vmem:[%s2428 + $0x28] sm:$0xff] %vm491, %v2348
        %2435 = vst.msk [vmem:[%s2428 + $0x30] sm:$0xff] %vm491, %v2351
        %2436 = vst.msk [vmem:[%s2428 + $0x38] sm:$0xff] %vm491, %v2354
        %2437 = vst.msk [vmem:[%s2428 + $0x40] sm:$0xff] %vm491, %v2357
        %2438 = vst.msk [vmem:[%s2428 + $0x48] sm:$0xff] %vm491, %v2360
        %2439 = vst.msk [vmem:[%s2428 + $0x50] sm:$0xff] %vm491, %v2363
        %2440 = vst.msk [vmem:[%s2428 + $0x58] sm:$0xff] %vm491, %v2366
        %2441 = vst.msk [vmem:[%s2428 + $0x60] sm:$0xff] %vm491, %v2369
        %2442 = vst.msk [vmem:[%s2428 + $0x68] sm:$0xff] %vm491, %v2372
        %2443 = vst.msk [vmem:[%s2428 + $0x70] sm:$0xff] %vm491, %v2375
        %2444 = vst.msk [vmem:[%s2428 + $0x78] sm:$0xff] %vm491, %v2378
        %2445 = vst.msk [vmem:[%s2428 + $0x80] sm:$0xff] %vm491, %v2381
        %2446 = vst.msk [vmem:[%s2428 + $0x88] sm:$0xff] %vm491, %v2384
        %2447 = vst.msk [vmem:[%s2428 + $0x90] sm:$0xff] %vm491, %v2387
        %2448 = vst.msk [vmem:[%s2428 + $0x98] sm:$0xff] %vm491, %v2390
        %2449 = vst.msk [vmem:[%s2428 + $0xa0] sm:$0xff] %vm491, %v2393
        %2450 = vst.msk [vmem:[%s2428 + $0xa8] sm:$0xff] %vm491, %v2396
        %2451 = vst.msk [vmem:[%s2428 + $0xb0] sm:$0xff] %vm491, %v2399
        %2452 = vst.msk [vmem:[%s2428 + $0xb8] sm:$0xff] %vm491, %v2402
        %2453 = vst.msk [vmem:[%s2428 + $0xc0] sm:$0xff] %vm491, %v2405
        %2454 = vst.msk [vmem:[%s2428 + $0xc8] sm:$0xff] %vm491, %v2408
        %2455 = vst.msk [vmem:[%s2428 + $0xd0] sm:$0xff] %vm491, %v2411
        %2456 = vst.msk [vmem:[%s2428 + $0xd8] sm:$0xff] %vm491, %v2414
        %2457 = vst.msk [vmem:[%s2428 + $0xe0] sm:$0xff] %vm491, %v2417
        %2458 = vst.msk [vmem:[%s2428 + $0xe8] sm:$0xff] %vm491, %v2420
        %2459 = vst.msk [vmem:[%s2428 + $0xf0] sm:$0xff] %vm491, %v2423
        %2460 = vst.msk [vmem:[%s2428 + $0xf8] sm:$0xff] %vm491, %v2426
        %s2461 = scalar_lea.vmem %s2, 224
        %v2462 = vld [vmem:[%s2461] sm:$0xff]
        %v2463 = vld [vmem:[%s2461 + $0x8] sm:$0xff]
        %2464 = vmatpush.msra.mxu0 0.0
        %2465 = vmatpush.msra.mxu0 0.0
        %2466 = vmatpush.msra.mxu0 0.0
        %2467 = vmatpush.msra.mxu0 0.0
        %2468 = vmatpush.msra.mxu0 0.0
        %2469 = vmatpush.msra.mxu0 0.0
        %2470 = vmatpush.msra.mxu0 0.0
        %2471 = vmatpush.msra.mxu0 0.0
        %2472 = vmatpush.msra.mxu0 0.0
        %2473 = vmatpush.msra.mxu0 0.0
        %2474 = vmatpush.msra.mxu0 0.0
        %2475 = vmatpush.msra.mxu0 0.0
        %2476 = vmatpush.msra.mxu0 0.0
        %2477 = vmatpush.msra.mxu0 0.0
        %2478 = vmatpush.msra.mxu0 %v2463
        %2479 = vmatpush.msra.mxu0 %v2462
        %2480 = vmatmul.f32.gmra.mxu0 %v283
        %v2481 = vpop.f32.mrf.mxu0
        %v2482 = vadd.f32 0.0, %v2481
        %2483 = vmatmul.f32.gmra.mxu0 %v286
        %v2484 = vpop.f32.mrf.mxu0
        %v2485 = vadd.f32 0.0, %v2484
        %2486 = vmatmul.f32.gmra.mxu0 %v289
        %v2487 = vpop.f32.mrf.mxu0
        %v2488 = vadd.f32 0.0, %v2487
        %2489 = vmatmul.f32.gmra.mxu0 %v292
        %v2490 = vpop.f32.mrf.mxu0
        %v2491 = vadd.f32 0.0, %v2490
        %2492 = vmatmul.f32.gmra.mxu0 %v295
        %v2493 = vpop.f32.mrf.mxu0
        %v2494 = vadd.f32 0.0, %v2493
        %2495 = vmatmul.f32.gmra.mxu0 %v298
        %v2496 = vpop.f32.mrf.mxu0
        %v2497 = vadd.f32 0.0, %v2496
        %2498 = vmatmul.f32.gmra.mxu0 %v301
        %v2499 = vpop.f32.mrf.mxu0
        %v2500 = vadd.f32 0.0, %v2499
        %2501 = vmatmul.f32.gmra.mxu0 %v304
        %v2502 = vpop.f32.mrf.mxu0
        %v2503 = vadd.f32 0.0, %v2502
        %2504 = vmatmul.f32.gmra.mxu0 %v307
        %v2505 = vpop.f32.mrf.mxu0
        %v2506 = vadd.f32 0.0, %v2505
        %2507 = vmatmul.f32.gmra.mxu0 %v310
        %v2508 = vpop.f32.mrf.mxu0
        %v2509 = vadd.f32 0.0, %v2508
        %2510 = vmatmul.f32.gmra.mxu0 %v313
        %v2511 = vpop.f32.mrf.mxu0
        %v2512 = vadd.f32 0.0, %v2511
        %2513 = vmatmul.f32.gmra.mxu0 %v316
        %v2514 = vpop.f32.mrf.mxu0
        %v2515 = vadd.f32 0.0, %v2514
        %2516 = vmatmul.f32.gmra.mxu0 %v319
        %v2517 = vpop.f32.mrf.mxu0
        %v2518 = vadd.f32 0.0, %v2517
        %2519 = vmatmul.f32.gmra.mxu0 %v322
        %v2520 = vpop.f32.mrf.mxu0
        %v2521 = vadd.f32 0.0, %v2520
        %2522 = vmatmul.f32.gmra.mxu0 %v325
        %v2523 = vpop.f32.mrf.mxu0
        %v2524 = vadd.f32 0.0, %v2523
        %2525 = vmatmul.f32.gmra.mxu0 %v328
        %v2526 = vpop.f32.mrf.mxu0
        %v2527 = vadd.f32 0.0, %v2526
        %2528 = vmatmul.f32.gmra.mxu0 %v331
        %v2529 = vpop.f32.mrf.mxu0
        %v2530 = vadd.f32 0.0, %v2529
        %2531 = vmatmul.f32.gmra.mxu0 %v334
        %v2532 = vpop.f32.mrf.mxu0
        %v2533 = vadd.f32 0.0, %v2532
        %2534 = vmatmul.f32.gmra.mxu0 %v337
        %v2535 = vpop.f32.mrf.mxu0
        %v2536 = vadd.f32 0.0, %v2535
        %2537 = vmatmul.f32.gmra.mxu0 %v340
        %v2538 = vpop.f32.mrf.mxu0
        %v2539 = vadd.f32 0.0, %v2538
        %2540 = vmatmul.f32.gmra.mxu0 %v343
        %v2541 = vpop.f32.mrf.mxu0
        %v2542 = vadd.f32 0.0, %v2541
        %2543 = vmatmul.f32.gmra.mxu0 %v346
        %v2544 = vpop.f32.mrf.mxu0
        %v2545 = vadd.f32 0.0, %v2544
        %2546 = vmatmul.f32.gmra.mxu0 %v349
        %v2547 = vpop.f32.mrf.mxu0
        %v2548 = vadd.f32 0.0, %v2547
        %2549 = vmatmul.f32.gmra.mxu0 %v352
        %v2550 = vpop.f32.mrf.mxu0
        %v2551 = vadd.f32 0.0, %v2550
        %2552 = vmatmul.f32.gmra.mxu0 %v355
        %v2553 = vpop.f32.mrf.mxu0
        %v2554 = vadd.f32 0.0, %v2553
        %2555 = vmatmul.f32.gmra.mxu0 %v358
        %v2556 = vpop.f32.mrf.mxu0
        %v2557 = vadd.f32 0.0, %v2556
        %2558 = vmatmul.f32.gmra.mxu0 %v361
        %v2559 = vpop.f32.mrf.mxu0
        %v2560 = vadd.f32 0.0, %v2559
        %2561 = vmatmul.f32.gmra.mxu0 %v364
        %v2562 = vpop.f32.mrf.mxu0
        %v2563 = vadd.f32 0.0, %v2562
        %2564 = vmatmul.f32.gmra.mxu0 %v367
        %v2565 = vpop.f32.mrf.mxu0
        %v2566 = vadd.f32 0.0, %v2565
        %2567 = vmatmul.f32.gmra.mxu0 %v370
        %v2568 = vpop.f32.mrf.mxu0
        %v2569 = vadd.f32 0.0, %v2568
        %2570 = vmatmul.f32.gmra.mxu0 %v373
        %v2571 = vpop.f32.mrf.mxu0
        %v2572 = vadd.f32 0.0, %v2571
        %2573 = vmatmul.f32.gmra.mxu0 %v376
        %v2574 = vpop.f32.mrf.mxu0
        %v2575 = vadd.f32 0.0, %v2574
        %2576 = vdwg.mxu0
        %s2577 = scalar_lea.vmem [#allocation2], 3584
        %2578 = vst.msk [vmem:[%s2577] sm:$0xff] %vm491, %v2482
        %2579 = vst.msk [vmem:[%s2577 + $0x8] sm:$0xff] %vm491, %v2485
        %2580 = vst.msk [vmem:[%s2577 + $0x10] sm:$0xff] %vm491, %v2488
        %2581 = vst.msk [vmem:[%s2577 + $0x18] sm:$0xff] %vm491, %v2491
        %2582 = vst.msk [vmem:[%s2577 + $0x20] sm:$0xff] %vm491, %v2494
        %2583 = vst.msk [vmem:[%s2577 + $0x28] sm:$0xff] %vm491, %v2497
        %2584 = vst.msk [vmem:[%s2577 + $0x30] sm:$0xff] %vm491, %v2500
        %2585 = vst.msk [vmem:[%s2577 + $0x38] sm:$0xff] %vm491, %v2503
        %2586 = vst.msk [vmem:[%s2577 + $0x40] sm:$0xff] %vm491, %v2506
        %2587 = vst.msk [vmem:[%s2577 + $0x48] sm:$0xff] %vm491, %v2509
        %2588 = vst.msk [vmem:[%s2577 + $0x50] sm:$0xff] %vm491, %v2512
        %2589 = vst.msk [vmem:[%s2577 + $0x58] sm:$0xff] %vm491, %v2515
        %2590 = vst.msk [vmem:[%s2577 + $0x60] sm:$0xff] %vm491, %v2518
        %2591 = vst.msk [vmem:[%s2577 + $0x68] sm:$0xff] %vm491, %v2521
        %2592 = vst.msk [vmem:[%s2577 + $0x70] sm:$0xff] %vm491, %v2524
        %2593 = vst.msk [vmem:[%s2577 + $0x78] sm:$0xff] %vm491, %v2527
        %2594 = vst.msk [vmem:[%s2577 + $0x80] sm:$0xff] %vm491, %v2530
        %2595 = vst.msk [vmem:[%s2577 + $0x88] sm:$0xff] %vm491, %v2533
        %2596 = vst.msk [vmem:[%s2577 + $0x90] sm:$0xff] %vm491, %v2536
        %2597 = vst.msk [vmem:[%s2577 + $0x98] sm:$0xff] %vm491, %v2539
        %2598 = vst.msk [vmem:[%s2577 + $0xa0] sm:$0xff] %vm491, %v2542
        %2599 = vst.msk [vmem:[%s2577 + $0xa8] sm:$0xff] %vm491, %v2545
        %2600 = vst.msk [vmem:[%s2577 + $0xb0] sm:$0xff] %vm491, %v2548
        %2601 = vst.msk [vmem:[%s2577 + $0xb8] sm:$0xff] %vm491, %v2551
        %2602 = vst.msk [vmem:[%s2577 + $0xc0] sm:$0xff] %vm491, %v2554
        %2603 = vst.msk [vmem:[%s2577 + $0xc8] sm:$0xff] %vm491, %v2557
        %2604 = vst.msk [vmem:[%s2577 + $0xd0] sm:$0xff] %vm491, %v2560
        %2605 = vst.msk [vmem:[%s2577 + $0xd8] sm:$0xff] %vm491, %v2563
        %2606 = vst.msk [vmem:[%s2577 + $0xe0] sm:$0xff] %vm491, %v2566
        %2607 = vst.msk [vmem:[%s2577 + $0xe8] sm:$0xff] %vm491, %v2569
        %2608 = vst.msk [vmem:[%s2577 + $0xf0] sm:$0xff] %vm491, %v2572
        %2609 = vst.msk [vmem:[%s2577 + $0xf8] sm:$0xff] %vm491, %v2575
        %s2610 = scalar_lea.vmem %s2, 240
        %v2611 = vld [vmem:[%s2610] sm:$0xff]
        %v2612 = vld [vmem:[%s2610 + $0x8] sm:$0xff]
        %2613 = vmatpush.msra.mxu0 0.0
        %2614 = vmatpush.msra.mxu0 0.0
        %2615 = vmatpush.msra.mxu0 0.0
        %2616 = vmatpush.msra.mxu0 0.0
        %2617 = vmatpush.msra.mxu0 0.0
        %2618 = vmatpush.msra.mxu0 0.0
        %2619 = vmatpush.msra.mxu0 0.0
        %2620 = vmatpush.msra.mxu0 0.0
        %2621 = vmatpush.msra.mxu0 0.0
        %2622 = vmatpush.msra.mxu0 0.0
        %2623 = vmatpush.msra.mxu0 0.0
        %2624 = vmatpush.msra.mxu0 0.0
        %2625 = vmatpush.msra.mxu0 0.0
        %2626 = vmatpush.msra.mxu0 0.0
        %2627 = vmatpush.msra.mxu0 %v2612
        %2628 = vmatpush.msra.mxu0 %v2611
        %2629 = vmatmul.f32.gmra.mxu0 %v283
        %v2630 = vpop.f32.mrf.mxu0
        %v2631 = vadd.f32 0.0, %v2630
        %2632 = vmatmul.f32.gmra.mxu0 %v286
        %v2633 = vpop.f32.mrf.mxu0
        %v2634 = vadd.f32 0.0, %v2633
        %2635 = vmatmul.f32.gmra.mxu0 %v289
        %v2636 = vpop.f32.mrf.mxu0
        %v2637 = vadd.f32 0.0, %v2636
        %2638 = vmatmul.f32.gmra.mxu0 %v292
        %v2639 = vpop.f32.mrf.mxu0
        %v2640 = vadd.f32 0.0, %v2639
        %2641 = vmatmul.f32.gmra.mxu0 %v295
        %v2642 = vpop.f32.mrf.mxu0
        %v2643 = vadd.f32 0.0, %v2642
        %2644 = vmatmul.f32.gmra.mxu0 %v298
        %v2645 = vpop.f32.mrf.mxu0
        %v2646 = vadd.f32 0.0, %v2645
        %2647 = vmatmul.f32.gmra.mxu0 %v301
        %v2648 = vpop.f32.mrf.mxu0
        %v2649 = vadd.f32 0.0, %v2648
        %2650 = vmatmul.f32.gmra.mxu0 %v304
        %v2651 = vpop.f32.mrf.mxu0
        %v2652 = vadd.f32 0.0, %v2651
        %2653 = vmatmul.f32.gmra.mxu0 %v307
        %v2654 = vpop.f32.mrf.mxu0
        %v2655 = vadd.f32 0.0, %v2654
        %2656 = vmatmul.f32.gmra.mxu0 %v310
        %v2657 = vpop.f32.mrf.mxu0
        %v2658 = vadd.f32 0.0, %v2657
        %2659 = vmatmul.f32.gmra.mxu0 %v313
        %v2660 = vpop.f32.mrf.mxu0
        %v2661 = vadd.f32 0.0, %v2660
        %2662 = vmatmul.f32.gmra.mxu0 %v316
        %v2663 = vpop.f32.mrf.mxu0
        %v2664 = vadd.f32 0.0, %v2663
        %2665 = vmatmul.f32.gmra.mxu0 %v319
        %v2666 = vpop.f32.mrf.mxu0
        %v2667 = vadd.f32 0.0, %v2666
        %2668 = vmatmul.f32.gmra.mxu0 %v322
        %v2669 = vpop.f32.mrf.mxu0
        %v2670 = vadd.f32 0.0, %v2669
        %2671 = vmatmul.f32.gmra.mxu0 %v325
        %v2672 = vpop.f32.mrf.mxu0
        %v2673 = vadd.f32 0.0, %v2672
        %2674 = vmatmul.f32.gmra.mxu0 %v328
        %v2675 = vpop.f32.mrf.mxu0
        %v2676 = vadd.f32 0.0, %v2675
        %2677 = vmatmul.f32.gmra.mxu0 %v331
        %v2678 = vpop.f32.mrf.mxu0
        %v2679 = vadd.f32 0.0, %v2678
        %2680 = vmatmul.f32.gmra.mxu0 %v334
        %v2681 = vpop.f32.mrf.mxu0
        %v2682 = vadd.f32 0.0, %v2681
        %2683 = vmatmul.f32.gmra.mxu0 %v337
        %v2684 = vpop.f32.mrf.mxu0
        %v2685 = vadd.f32 0.0, %v2684
        %2686 = vmatmul.f32.gmra.mxu0 %v340
        %v2687 = vpop.f32.mrf.mxu0
        %v2688 = vadd.f32 0.0, %v2687
        %2689 = vmatmul.f32.gmra.mxu0 %v343
        %v2690 = vpop.f32.mrf.mxu0
        %v2691 = vadd.f32 0.0, %v2690
        %2692 = vmatmul.f32.gmra.mxu0 %v346
        %v2693 = vpop.f32.mrf.mxu0
        %v2694 = vadd.f32 0.0, %v2693
        %2695 = vmatmul.f32.gmra.mxu0 %v349
        %v2696 = vpop.f32.mrf.mxu0
        %v2697 = vadd.f32 0.0, %v2696
        %2698 = vmatmul.f32.gmra.mxu0 %v352
        %v2699 = vpop.f32.mrf.mxu0
        %v2700 = vadd.f32 0.0, %v2699
        %2701 = vmatmul.f32.gmra.mxu0 %v355
        %v2702 = vpop.f32.mrf.mxu0
        %v2703 = vadd.f32 0.0, %v2702
        %2704 = vmatmul.f32.gmra.mxu0 %v358
        %v2705 = vpop.f32.mrf.mxu0
        %v2706 = vadd.f32 0.0, %v2705
        %2707 = vmatmul.f32.gmra.mxu0 %v361
        %v2708 = vpop.f32.mrf.mxu0
        %v2709 = vadd.f32 0.0, %v2708
        %2710 = vmatmul.f32.gmra.mxu0 %v364
        %v2711 = vpop.f32.mrf.mxu0
        %v2712 = vadd.f32 0.0, %v2711
        %2713 = vmatmul.f32.gmra.mxu0 %v367
        %v2714 = vpop.f32.mrf.mxu0
        %v2715 = vadd.f32 0.0, %v2714
        %2716 = vmatmul.f32.gmra.mxu0 %v370
        %v2717 = vpop.f32.mrf.mxu0
        %v2718 = vadd.f32 0.0, %v2717
        %2719 = vmatmul.f32.gmra.mxu0 %v373
        %v2720 = vpop.f32.mrf.mxu0
        %v2721 = vadd.f32 0.0, %v2720
        %2722 = vmatmul.f32.gmra.mxu0 %v376
        %v2723 = vpop.f32.mrf.mxu0
        %v2724 = vadd.f32 0.0, %v2723
        %2725 = vdwg.mxu0
        %s2726 = scalar_lea.vmem [#allocation2], 3840
        %2727 = vst.msk [vmem:[%s2726] sm:$0xff] %vm491, %v2631
        %2728 = vst.msk [vmem:[%s2726 + $0x8] sm:$0xff] %vm491, %v2634
        %2729 = vst.msk [vmem:[%s2726 + $0x10] sm:$0xff] %vm491, %v2637
        %2730 = vst.msk [vmem:[%s2726 + $0x18] sm:$0xff] %vm491, %v2640
        %2731 = vst.msk [vmem:[%s2726 + $0x20] sm:$0xff] %vm491, %v2643
        %2732 = vst.msk [vmem:[%s2726 + $0x28] sm:$0xff] %vm491, %v2646
        %2733 = vst.msk [vmem:[%s2726 + $0x30] sm:$0xff] %vm491, %v2649
        %2734 = vst.msk [vmem:[%s2726 + $0x38] sm:$0xff] %vm491, %v2652
        %2735 = vst.msk [vmem:[%s2726 + $0x40] sm:$0xff] %vm491, %v2655
        %2736 = vst.msk [vmem:[%s2726 + $0x48] sm:$0xff] %vm491, %v2658
        %2737 = vst.msk [vmem:[%s2726 + $0x50] sm:$0xff] %vm491, %v2661
        %2738 = vst.msk [vmem:[%s2726 + $0x58] sm:$0xff] %vm491, %v2664
        %2739 = vst.msk [vmem:[%s2726 + $0x60] sm:$0xff] %vm491, %v2667
        %2740 = vst.msk [vmem:[%s2726 + $0x68] sm:$0xff] %vm491, %v2670
        %2741 = vst.msk [vmem:[%s2726 + $0x70] sm:$0xff] %vm491, %v2673
        %2742 = vst.msk [vmem:[%s2726 + $0x78] sm:$0xff] %vm491, %v2676
        %2743 = vst.msk [vmem:[%s2726 + $0x80] sm:$0xff] %vm491, %v2679
        %2744 = vst.msk [vmem:[%s2726 + $0x88] sm:$0xff] %vm491, %v2682
        %2745 = vst.msk [vmem:[%s2726 + $0x90] sm:$0xff] %vm491, %v2685
        %2746 = vst.msk [vmem:[%s2726 + $0x98] sm:$0xff] %vm491, %v2688
        %2747 = vst.msk [vmem:[%s2726 + $0xa0] sm:$0xff] %vm491, %v2691
        %2748 = vst.msk [vmem:[%s2726 + $0xa8] sm:$0xff] %vm491, %v2694
        %2749 = vst.msk [vmem:[%s2726 + $0xb0] sm:$0xff] %vm491, %v2697
        %2750 = vst.msk [vmem:[%s2726 + $0xb8] sm:$0xff] %vm491, %v2700
        %2751 = vst.msk [vmem:[%s2726 + $0xc0] sm:$0xff] %vm491, %v2703
        %2752 = vst.msk [vmem:[%s2726 + $0xc8] sm:$0xff] %vm491, %v2706
        %2753 = vst.msk [vmem:[%s2726 + $0xd0] sm:$0xff] %vm491, %v2709
        %2754 = vst.msk [vmem:[%s2726 + $0xd8] sm:$0xff] %vm491, %v2712
        %2755 = vst.msk [vmem:[%s2726 + $0xe0] sm:$0xff] %vm491, %v2715
        %2756 = vst.msk [vmem:[%s2726 + $0xe8] sm:$0xff] %vm491, %v2718
        %2757 = vst.msk [vmem:[%s2726 + $0xf0] sm:$0xff] %vm491, %v2721
        %2758 = vst.msk [vmem:[%s2726 + $0xf8] sm:$0xff] %vm491, %v2724
        %v2759 = vld [vmem:[%s245] sm:$0xff]
        %v2760 = vld [vmem:[%s245 + $0x8] sm:$0xff]
        %v2761 = vld [vmem:[%s245 + $0x10] sm:$0xff]
        %v2762 = vld [vmem:[%s245 + $0x18] sm:$0xff]
        %v2763 = vld [vmem:[%s3] sm:$0x1]
        %v2764 = vld [vmem:[#allocation2] sm:$0xff]
        %v2765 = vld [vmem:[#allocation2 + $0x8] sm:$0xff]
        %v2766 = vld [vmem:[#allocation2 + $0x100] sm:$0xff]
        %v2767 = vld [vmem:[#allocation2 + $0x108] sm:$0xff]
        %v2768 = vld [vmem:[#allocation2 + $0x200] sm:$0xff]
        %v2769 = vld [vmem:[#allocation2 + $0x208] sm:$0xff]
        %v2770 = vld [vmem:[#allocation2 + $0x300] sm:$0xff]
        %v2771 = vld [vmem:[#allocation2 + $0x308] sm:$0xff]
        %v2772 = vld [vmem:[#allocation2 + $0x400] sm:$0xff]
        %v2773 = vld [vmem:[#allocation2 + $0x408] sm:$0xff]
        %v2774 = vld [vmem:[#allocation2 + $0x500] sm:$0xff]
        %v2775 = vld [vmem:[#allocation2 + $0x508] sm:$0xff]
        %v2776 = vld [vmem:[#allocation2 + $0x600] sm:$0xff]
        %v2777 = vld [vmem:[#allocation2 + $0x608] sm:$0xff]
        %v2778 = vld [vmem:[#allocation2 + $0x700] sm:$0xff]
        %v2779 = vld [vmem:[#allocation2 + $0x708] sm:$0xff]
        %v2780 = vld [vmem:[#allocation2 + $0x800] sm:$0xff]
        %v2781 = vld [vmem:[#allocation2 + $0x808] sm:$0xff]
        %v2782 = vld [vmem:[#allocation2 + $0x900] sm:$0xff]
        %v2783 = vld [vmem:[#allocation2 + $0x908] sm:$0xff]
        %v2784 = vld [vmem:[#allocation2 + $0xa00] sm:$0xff]
        %v2785 = vld [vmem:[#allocation2 + $0xa08] sm:$0xff]
        %v2786 = vld [vmem:[#allocation2 + $0xb00] sm:$0xff]
        %v2787 = vld [vmem:[#allocation2 + $0xb08] sm:$0xff]
        %v2788 = vld [vmem:[#allocation2 + $0xc00] sm:$0xff]
        %v2789 = vld [vmem:[#allocation2 + $0xc08] sm:$0xff]
        %v2790 = vld [vmem:[#allocation2 + $0xd00] sm:$0xff]
        %v2791 = vld [vmem:[#allocation2 + $0xd08] sm:$0xff]
        %v2792 = vld [vmem:[#allocation2 + $0xe00] sm:$0xff]
        %v2793 = vld [vmem:[#allocation2 + $0xe08] sm:$0xff]
        %v2794 = vld [vmem:[#allocation2 + $0xf00] sm:$0xff]
        %v2795 = vld [vmem:[#allocation2 + $0xf08] sm:$0xff]
        %v2797 = vperm.slane %v2763, 0
        %2799 = vmatpush.msra.mxu0 %v2779
        %2800 = vmatpush.msra.mxu0 %v2778
        %2801 = vmatpush.msra.mxu0 %v2777
        %2802 = vmatpush.msra.mxu0 %v2776
        %2803 = vmatpush.msra.mxu0 %v2775
        %2804 = vmatpush.msra.mxu0 %v2774
        %2805 = vmatpush.msra.mxu0 %v2773
        %2806 = vmatpush.msra.mxu0 %v2772
        %2807 = vmatpush.msra.mxu0 %v2771
        %2808 = vmatpush.msra.mxu0 %v2770
        %2809 = vmatpush.msra.mxu0 %v2769
        %2810 = vmatpush.msra.mxu0 %v2768
        %2811 = vmatpush.msra.mxu0 %v2767
        %2812 = vmatpush.msra.mxu0 %v2766
        %2813 = vmatpush.msra.mxu0 %v2765
        %2814 = vmatpush.msra.mxu0 %v2764
        %2815 = vmatmul.f32.gmra.mxu0 %v2759
        %v2816 = vpop.f32.mrf.mxu0
        %v2817 = vadd.f32 %v2797, %v2816
        %2818 = vmatmul.f32.gmra.mxu0 %v2761
        %v2819 = vpop.f32.mrf.mxu0
        %v2820 = vadd.f32 %v2797, %v2819
        %2821 = vdwg.mxu0
        %2822 = vmatpush.msra.mxu0 %v2795
        %2823 = vmatpush.msra.mxu0 %v2794
        %2824 = vmatpush.msra.mxu0 %v2793
        %2825 = vmatpush.msra.mxu0 %v2792
        %2826 = vmatpush.msra.mxu0 %v2791
        %2827 = vmatpush.msra.mxu0 %v2790
        %2828 = vmatpush.msra.mxu0 %v2789
        %2829 = vmatpush.msra.mxu0 %v2788
        %2830 = vmatpush.msra.mxu0 %v2787
        %2831 = vmatpush.msra.mxu0 %v2786
        %2832 = vmatpush.msra.mxu0 %v2785
        %2833 = vmatpush.msra.mxu0 %v2784
        %2834 = vmatpush.msra.mxu0 %v2783
        %2835 = vmatpush.msra.mxu0 %v2782
        %2836 = vmatpush.msra.mxu0 %v2781
        %2837 = vmatpush.msra.mxu0 %v2780
        %2838 = vmatmul.f32.gmra.mxu0 %v2760
        %v2839 = vpop.f32.mrf.mxu0
        %v2840 = vadd.f32 %v2817, %v2839
        %2841 = vmatmul.f32.gmra.mxu0 %v2762
        %v2842 = vpop.f32.mrf.mxu0
        %v2843 = vadd.f32 %v2820, %v2842
        %2844 = vdwg.mxu0
        %2845 = vst.msk [vmem:[%s230] sm:$0xff] %vm491, %v2840
        %2846 = vst.msk [vmem:[%s230 + $0x8] sm:$0xff] %vm491, %v2843
        %v2847 = vld [vmem:[#allocation2 + $0x10] sm:$0xff]
        %v2848 = vld [vmem:[#allocation2 + $0x18] sm:$0xff]
        %v2849 = vld [vmem:[#allocation2 + $0x110] sm:$0xff]
        %v2850 = vld [vmem:[#allocation2 + $0x118] sm:$0xff]
        %v2851 = vld [vmem:[#allocation2 + $0x210] sm:$0xff]
        %v2852 = vld [vmem:[#allocation2 + $0x218] sm:$0xff]
        %v2853 = vld [vmem:[#allocation2 + $0x310] sm:$0xff]
        %v2854 = vld [vmem:[#allocation2 + $0x318] sm:$0xff]
        %v2855 = vld [vmem:[#allocation2 + $0x410] sm:$0xff]
        %v2856 = vld [vmem:[#allocation2 + $0x418] sm:$0xff]
        %v2857 = vld [vmem:[#allocation2 + $0x510] sm:$0xff]
        %v2858 = vld [vmem:[#allocation2 + $0x518] sm:$0xff]
        %v2859 = vld [vmem:[#allocation2 + $0x610] sm:$0xff]
        %v2860 = vld [vmem:[#allocation2 + $0x618] sm:$0xff]
        %v2861 = vld [vmem:[#allocation2 + $0x710] sm:$0xff]
        %v2862 = vld [vmem:[#allocation2 + $0x718] sm:$0xff]
        %v2863 = vld [vmem:[#allocation2 + $0x810] sm:$0xff]
        %v2864 = vld [vmem:[#allocation2 + $0x818] sm:$0xff]
        %v2865 = vld [vmem:[#allocation2 + $0x910] sm:$0xff]
        %v2866 = vld [vmem:[#allocation2 + $0x918] sm:$0xff]
        %v2867 = vld [vmem:[#allocation2 + $0xa10] sm:$0xff]
        %v2868 = vld [vmem:[#allocation2 + $0xa18] sm:$0xff]
        %v2869 = vld [vmem:[#allocation2 + $0xb10] sm:$0xff]
        %v2870 = vld [vmem:[#allocation2 + $0xb18] sm:$0xff]
        %v2871 = vld [vmem:[#allocation2 + $0xc10] sm:$0xff]
        %v2872 = vld [vmem:[#allocation2 + $0xc18] sm:$0xff]
        %v2873 = vld [vmem:[#allocation2 + $0xd10] sm:$0xff]
        %v2874 = vld [vmem:[#allocation2 + $0xd18] sm:$0xff]
        %v2875 = vld [vmem:[#allocation2 + $0xe10] sm:$0xff]
        %v2876 = vld [vmem:[#allocation2 + $0xe18] sm:$0xff]
        %v2877 = vld [vmem:[#allocation2 + $0xf10] sm:$0xff]
        %v2878 = vld [vmem:[#allocation2 + $0xf18] sm:$0xff]
        %2879 = vmatpush.msra.mxu0 %v2862
        %2880 = vmatpush.msra.mxu0 %v2861
        %2881 = vmatpush.msra.mxu0 %v2860
        %2882 = vmatpush.msra.mxu0 %v2859
        %2883 = vmatpush.msra.mxu0 %v2858
        %2884 = vmatpush.msra.mxu0 %v2857
        %2885 = vmatpush.msra.mxu0 %v2856
        %2886 = vmatpush.msra.mxu0 %v2855
        %2887 = vmatpush.msra.mxu0 %v2854
        %2888 = vmatpush.msra.mxu0 %v2853
        %2889 = vmatpush.msra.mxu0 %v2852
        %2890 = vmatpush.msra.mxu0 %v2851
        %2891 = vmatpush.msra.mxu0 %v2850
        %2892 = vmatpush.msra.mxu0 %v2849
        %2893 = vmatpush.msra.mxu0 %v2848
        %2894 = vmatpush.msra.mxu0 %v2847
        %2895 = vmatmul.f32.gmra.mxu0 %v2759
        %v2896 = vpop.f32.mrf.mxu0
        %v2897 = vadd.f32 %v2797, %v2896
        %2898 = vmatmul.f32.gmra.mxu0 %v2761
        %v2899 = vpop.f32.mrf.mxu0
        %v2900 = vadd.f32 %v2797, %v2899
        %2901 = vdwg.mxu0
        %2902 = vmatpush.msra.mxu0 %v2878
        %2903 = vmatpush.msra.mxu0 %v2877
        %2904 = vmatpush.msra.mxu0 %v2876
        %2905 = vmatpush.msra.mxu0 %v2875
        %2906 = vmatpush.msra.mxu0 %v2874
        %2907 = vmatpush.msra.mxu0 %v2873
        %2908 = vmatpush.msra.mxu0 %v2872
        %2909 = vmatpush.msra.mxu0 %v2871
        %2910 = vmatpush.msra.mxu0 %v2870
        %2911 = vmatpush.msra.mxu0 %v2869
        %2912 = vmatpush.msra.mxu0 %v2868
        %2913 = vmatpush.msra.mxu0 %v2867
        %2914 = vmatpush.msra.mxu0 %v2866
        %2915 = vmatpush.msra.mxu0 %v2865
        %2916 = vmatpush.msra.mxu0 %v2864
        %2917 = vmatpush.msra.mxu0 %v2863
        %2918 = vmatmul.f32.gmra.mxu0 %v2760
        %v2919 = vpop.f32.mrf.mxu0
        %v2920 = vadd.f32 %v2897, %v2919
        %2921 = vmatmul.f32.gmra.mxu0 %v2762
        %v2922 = vpop.f32.mrf.mxu0
        %v2923 = vadd.f32 %v2900, %v2922
        %2924 = vdwg.mxu0
        %s2925 = scalar_lea.vmem %s230, 16 [#allocation3]
        %2926 = vst.msk [vmem:[%s2925] sm:$0xff] %vm491, %v2920
        %2927 = vst.msk [vmem:[%s2925 + $0x8] sm:$0xff] %vm491, %v2923
        %v2928 = vld [vmem:[#allocation2 + $0x20] sm:$0xff]
        %v2929 = vld [vmem:[#allocation2 + $0x28] sm:$0xff]
        %v2930 = vld [vmem:[#allocation2 + $0x120] sm:$0xff]
        %v2931 = vld [vmem:[#allocation2 + $0x128] sm:$0xff]
        %v2932 = vld [vmem:[#allocation2 + $0x220] sm:$0xff]
        %v2933 = vld [vmem:[#allocation2 + $0x228] sm:$0xff]
        %v2934 = vld [vmem:[#allocation2 + $0x320] sm:$0xff]
        %v2935 = vld [vmem:[#allocation2 + $0x328] sm:$0xff]
        %v2936 = vld [vmem:[#allocation2 + $0x420] sm:$0xff]
        %v2937 = vld [vmem:[#allocation2 + $0x428] sm:$0xff]
        %v2938 = vld [vmem:[#allocation2 + $0x520] sm:$0xff]
        %v2939 = vld [vmem:[#allocation2 + $0x528] sm:$0xff]
        %v2940 = vld [vmem:[#allocation2 + $0x620] sm:$0xff]
        %v2941 = vld [vmem:[#allocation2 + $0x628] sm:$0xff]
        %v2942 = vld [vmem:[#allocation2 + $0x720] sm:$0xff]
        %v2943 = vld [vmem:[#allocation2 + $0x728] sm:$0xff]
        %v2944 = vld [vmem:[#allocation2 + $0x820] sm:$0xff]
        %v2945 = vld [vmem:[#allocation2 + $0x828] sm:$0xff]
        %v2946 = vld [vmem:[#allocation2 + $0x920] sm:$0xff]
        %v2947 = vld [vmem:[#allocation2 + $0x928] sm:$0xff]
        %v2948 = vld [vmem:[#allocation2 + $0xa20] sm:$0xff]
        %v2949 = vld [vmem:[#allocation2 + $0xa28] sm:$0xff]
        %v2950 = vld [vmem:[#allocation2 + $0xb20] sm:$0xff]
        %v2951 = vld [vmem:[#allocation2 + $0xb28] sm:$0xff]
        %v2952 = vld [vmem:[#allocation2 + $0xc20] sm:$0xff]
        %v2953 = vld [vmem:[#allocation2 + $0xc28] sm:$0xff]
        %v2954 = vld [vmem:[#allocation2 + $0xd20] sm:$0xff]
        %v2955 = vld [vmem:[#allocation2 + $0xd28] sm:$0xff]
        %v2956 = vld [vmem:[#allocation2 + $0xe20] sm:$0xff]
        %v2957 = vld [vmem:[#allocation2 + $0xe28] sm:$0xff]
        %v2958 = vld [vmem:[#allocation2 + $0xf20] sm:$0xff]
        %v2959 = vld [vmem:[#allocation2 + $0xf28] sm:$0xff]
        %2960 = vmatpush.msra.mxu0 %v2943
        %2961 = vmatpush.msra.mxu0 %v2942
        %2962 = vmatpush.msra.mxu0 %v2941
        %2963 = vmatpush.msra.mxu0 %v2940
        %2964 = vmatpush.msra.mxu0 %v2939
        %2965 = vmatpush.msra.mxu0 %v2938
        %2966 = vmatpush.msra.mxu0 %v2937
        %2967 = vmatpush.msra.mxu0 %v2936
        %2968 = vmatpush.msra.mxu0 %v2935
        %2969 = vmatpush.msra.mxu0 %v2934
        %2970 = vmatpush.msra.mxu0 %v2933
        %2971 = vmatpush.msra.mxu0 %v2932
        %2972 = vmatpush.msra.mxu0 %v2931
        %2973 = vmatpush.msra.mxu0 %v2930
        %2974 = vmatpush.msra.mxu0 %v2929
        %2975 = vmatpush.msra.mxu0 %v2928
        %2976 = vmatmul.f32.gmra.mxu0 %v2759
        %v2977 = vpop.f32.mrf.mxu0
        %v2978 = vadd.f32 %v2797, %v2977
        %2979 = vmatmul.f32.gmra.mxu0 %v2761
        %v2980 = vpop.f32.mrf.mxu0
        %v2981 = vadd.f32 %v2797, %v2980
        %2982 = vdwg.mxu0
        %2983 = vmatpush.msra.mxu0 %v2959
        %2984 = vmatpush.msra.mxu0 %v2958
        %2985 = vmatpush.msra.mxu0 %v2957
        %2986 = vmatpush.msra.mxu0 %v2956
        %2987 = vmatpush.msra.mxu0 %v2955
        %2988 = vmatpush.msra.mxu0 %v2954
        %2989 = vmatpush.msra.mxu0 %v2953
        %2990 = vmatpush.msra.mxu0 %v2952
        %2991 = vmatpush.msra.mxu0 %v2951
        %2992 = vmatpush.msra.mxu0 %v2950
        %2993 = vmatpush.msra.mxu0 %v2949
        %2994 = vmatpush.msra.mxu0 %v2948
        %2995 = vmatpush.msra.mxu0 %v2947
        %2996 = vmatpush.msra.mxu0 %v2946
        %2997 = vmatpush.msra.mxu0 %v2945
        %2998 = vmatpush.msra.mxu0 %v2944
        %2999 = vmatmul.f32.gmra.mxu0 %v2760
        %v3000 = vpop.f32.mrf.mxu0
        %v3001 = vadd.f32 %v2978, %v3000
        %3002 = vmatmul.f32.gmra.mxu0 %v2762
        %v3003 = vpop.f32.mrf.mxu0
        %v3004 = vadd.f32 %v2981, %v3003
        %3005 = vdwg.mxu0
        %s3006 = scalar_lea.vmem %s230, 32 [#allocation3]
        %3007 = vst.msk [vmem:[%s3006] sm:$0xff] %vm491, %v3001
        %3008 = vst.msk [vmem:[%s3006 + $0x8] sm:$0xff] %vm491, %v3004
        %v3009 = vld [vmem:[#allocation2 + $0x30] sm:$0xff]
        %v3010 = vld [vmem:[#allocation2 + $0x38] sm:$0xff]
        %v3011 = vld [vmem:[#allocation2 + $0x130] sm:$0xff]
        %v3012 = vld [vmem:[#allocation2 + $0x138] sm:$0xff]
        %v3013 = vld [vmem:[#allocation2 + $0x230] sm:$0xff]
        %v3014 = vld [vmem:[#allocation2 + $0x238] sm:$0xff]
        %v3015 = vld [vmem:[#allocation2 + $0x330] sm:$0xff]
        %v3016 = vld [vmem:[#allocation2 + $0x338] sm:$0xff]
        %v3017 = vld [vmem:[#allocation2 + $0x430] sm:$0xff]
        %v3018 = vld [vmem:[#allocation2 + $0x438] sm:$0xff]
        %v3019 = vld [vmem:[#allocation2 + $0x530] sm:$0xff]
        %v3020 = vld [vmem:[#allocation2 + $0x538] sm:$0xff]
        %v3021 = vld [vmem:[#allocation2 + $0x630] sm:$0xff]
        %v3022 = vld [vmem:[#allocation2 + $0x638] sm:$0xff]
        %v3023 = vld [vmem:[#allocation2 + $0x730] sm:$0xff]
        %v3024 = vld [vmem:[#allocation2 + $0x738] sm:$0xff]
        %v3025 = vld [vmem:[#allocation2 + $0x830] sm:$0xff]
        %v3026 = vld [vmem:[#allocation2 + $0x838] sm:$0xff]
        %v3027 = vld [vmem:[#allocation2 + $0x930] sm:$0xff]
        %v3028 = vld [vmem:[#allocation2 + $0x938] sm:$0xff]
        %v3029 = vld [vmem:[#allocation2 + $0xa30] sm:$0xff]
        %v3030 = vld [vmem:[#allocation2 + $0xa38] sm:$0xff]
        %v3031 = vld [vmem:[#allocation2 + $0xb30] sm:$0xff]
        %v3032 = vld [vmem:[#allocation2 + $0xb38] sm:$0xff]
        %v3033 = vld [vmem:[#allocation2 + $0xc30] sm:$0xff]
        %v3034 = vld [vmem:[#allocation2 + $0xc38] sm:$0xff]
        %v3035 = vld [vmem:[#allocation2 + $0xd30] sm:$0xff]
        %v3036 = vld [vmem:[#allocation2 + $0xd38] sm:$0xff]
        %v3037 = vld [vmem:[#allocation2 + $0xe30] sm:$0xff]
        %v3038 = vld [vmem:[#allocation2 + $0xe38] sm:$0xff]
        %v3039 = vld [vmem:[#allocation2 + $0xf30] sm:$0xff]
        %v3040 = vld [vmem:[#allocation2 + $0xf38] sm:$0xff]
        %3041 = vmatpush.msra.mxu0 %v3024
        %3042 = vmatpush.msra.mxu0 %v3023
        %3043 = vmatpush.msra.mxu0 %v3022
        %3044 = vmatpush.msra.mxu0 %v3021
        %3045 = vmatpush.msra.mxu0 %v3020
        %3046 = vmatpush.msra.mxu0 %v3019
        %3047 = vmatpush.msra.mxu0 %v3018
        %3048 = vmatpush.msra.mxu0 %v3017
        %3049 = vmatpush.msra.mxu0 %v3016
        %3050 = vmatpush.msra.mxu0 %v3015
        %3051 = vmatpush.msra.mxu0 %v3014
        %3052 = vmatpush.msra.mxu0 %v3013
        %3053 = vmatpush.msra.mxu0 %v3012
        %3054 = vmatpush.msra.mxu0 %v3011
        %3055 = vmatpush.msra.mxu0 %v3010
        %3056 = vmatpush.msra.mxu0 %v3009
        %3057 = vmatmul.f32.gmra.mxu0 %v2759
        %v3058 = vpop.f32.mrf.mxu0
        %v3059 = vadd.f32 %v2797, %v3058
        %3060 = vmatmul.f32.gmra.mxu0 %v2761
        %v3061 = vpop.f32.mrf.mxu0
        %v3062 = vadd.f32 %v2797, %v3061
        %3063 = vdwg.mxu0
        %3064 = vmatpush.msra.mxu0 %v3040
        %3065 = vmatpush.msra.mxu0 %v3039
        %3066 = vmatpush.msra.mxu0 %v3038
        %3067 = vmatpush.msra.mxu0 %v3037
        %3068 = vmatpush.msra.mxu0 %v3036
        %3069 = vmatpush.msra.mxu0 %v3035
        %3070 = vmatpush.msra.mxu0 %v3034
        %3071 = vmatpush.msra.mxu0 %v3033
        %3072 = vmatpush.msra.mxu0 %v3032
        %3073 = vmatpush.msra.mxu0 %v3031
        %3074 = vmatpush.msra.mxu0 %v3030
        %3075 = vmatpush.msra.mxu0 %v3029
        %3076 = vmatpush.msra.mxu0 %v3028
        %3077 = vmatpush.msra.mxu0 %v3027
        %3078 = vmatpush.msra.mxu0 %v3026
        %3079 = vmatpush.msra.mxu0 %v3025
        %3080 = vmatmul.f32.gmra.mxu0 %v2760
        %v3081 = vpop.f32.mrf.mxu0
        %v3082 = vadd.f32 %v3059, %v3081
        %3083 = vmatmul.f32.gmra.mxu0 %v2762
        %v3084 = vpop.f32.mrf.mxu0
        %v3085 = vadd.f32 %v3062, %v3084
        %3086 = vdwg.mxu0
        %s3087 = scalar_lea.vmem %s230, 48 [#allocation3]
        %3088 = vst.msk [vmem:[%s3087] sm:$0xff] %vm491, %v3082
        %3089 = vst.msk [vmem:[%s3087 + $0x8] sm:$0xff] %vm491, %v3085
        %v3090 = vld [vmem:[#allocation2 + $0x40] sm:$0xff]
        %v3091 = vld [vmem:[#allocation2 + $0x48] sm:$0xff]
        %v3092 = vld [vmem:[#allocation2 + $0x140] sm:$0xff]
        %v3093 = vld [vmem:[#allocation2 + $0x148] sm:$0xff]
        %v3094 = vld [vmem:[#allocation2 + $0x240] sm:$0xff]
        %v3095 = vld [vmem:[#allocation2 + $0x248] sm:$0xff]
        %v3096 = vld [vmem:[#allocation2 + $0x340] sm:$0xff]
        %v3097 = vld [vmem:[#allocation2 + $0x348] sm:$0xff]
        %v3098 = vld [vmem:[#allocation2 + $0x440] sm:$0xff]
        %v3099 = vld [vmem:[#allocation2 + $0x448] sm:$0xff]
        %v3100 = vld [vmem:[#allocation2 + $0x540] sm:$0xff]
        %v3101 = vld [vmem:[#allocation2 + $0x548] sm:$0xff]
        %v3102 = vld [vmem:[#allocation2 + $0x640] sm:$0xff]
        %v3103 = vld [vmem:[#allocation2 + $0x648] sm:$0xff]
        %v3104 = vld [vmem:[#allocation2 + $0x740] sm:$0xff]
        %v3105 = vld [vmem:[#allocation2 + $0x748] sm:$0xff]
        %v3106 = vld [vmem:[#allocation2 + $0x840] sm:$0xff]
        %v3107 = vld [vmem:[#allocation2 + $0x848] sm:$0xff]
        %v3108 = vld [vmem:[#allocation2 + $0x940] sm:$0xff]
        %v3109 = vld [vmem:[#allocation2 + $0x948] sm:$0xff]
        %v3110 = vld [vmem:[#allocation2 + $0xa40] sm:$0xff]
        %v3111 = vld [vmem:[#allocation2 + $0xa48] sm:$0xff]
        %v3112 = vld [vmem:[#allocation2 + $0xb40] sm:$0xff]
        %v3113 = vld [vmem:[#allocation2 + $0xb48] sm:$0xff]
        %v3114 = vld [vmem:[#allocation2 + $0xc40] sm:$0xff]
        %v3115 = vld [vmem:[#allocation2 + $0xc48] sm:$0xff]
        %v3116 = vld [vmem:[#allocation2 + $0xd40] sm:$0xff]
        %v3117 = vld [vmem:[#allocation2 + $0xd48] sm:$0xff]
        %v3118 = vld [vmem:[#allocation2 + $0xe40] sm:$0xff]
        %v3119 = vld [vmem:[#allocation2 + $0xe48] sm:$0xff]
        %v3120 = vld [vmem:[#allocation2 + $0xf40] sm:$0xff]
        %v3121 = vld [vmem:[#allocation2 + $0xf48] sm:$0xff]
        %3122 = vmatpush.msra.mxu0 %v3105
        %3123 = vmatpush.msra.mxu0 %v3104
        %3124 = vmatpush.msra.mxu0 %v3103
        %3125 = vmatpush.msra.mxu0 %v3102
        %3126 = vmatpush.msra.mxu0 %v3101
        %3127 = vmatpush.msra.mxu0 %v3100
        %3128 = vmatpush.msra.mxu0 %v3099
        %3129 = vmatpush.msra.mxu0 %v3098
        %3130 = vmatpush.msra.mxu0 %v3097
        %3131 = vmatpush.msra.mxu0 %v3096
        %3132 = vmatpush.msra.mxu0 %v3095
        %3133 = vmatpush.msra.mxu0 %v3094
        %3134 = vmatpush.msra.mxu0 %v3093
        %3135 = vmatpush.msra.mxu0 %v3092
        %3136 = vmatpush.msra.mxu0 %v3091
        %3137 = vmatpush.msra.mxu0 %v3090
        %3138 = vmatmul.f32.gmra.mxu0 %v2759
        %v3139 = vpop.f32.mrf.mxu0
        %v3140 = vadd.f32 %v2797, %v3139
        %3141 = vmatmul.f32.gmra.mxu0 %v2761
        %v3142 = vpop.f32.mrf.mxu0
        %v3143 = vadd.f32 %v2797, %v3142
        %3144 = vdwg.mxu0
        %3145 = vmatpush.msra.mxu0 %v3121
        %3146 = vmatpush.msra.mxu0 %v3120
        %3147 = vmatpush.msra.mxu0 %v3119
        %3148 = vmatpush.msra.mxu0 %v3118
        %3149 = vmatpush.msra.mxu0 %v3117
        %3150 = vmatpush.msra.mxu0 %v3116
        %3151 = vmatpush.msra.mxu0 %v3115
        %3152 = vmatpush.msra.mxu0 %v3114
        %3153 = vmatpush.msra.mxu0 %v3113
        %3154 = vmatpush.msra.mxu0 %v3112
        %3155 = vmatpush.msra.mxu0 %v3111
        %3156 = vmatpush.msra.mxu0 %v3110
        %3157 = vmatpush.msra.mxu0 %v3109
        %3158 = vmatpush.msra.mxu0 %v3108
        %3159 = vmatpush.msra.mxu0 %v3107
        %3160 = vmatpush.msra.mxu0 %v3106
        %3161 = vmatmul.f32.gmra.mxu0 %v2760
        %v3162 = vpop.f32.mrf.mxu0
        %v3163 = vadd.f32 %v3140, %v3162
        %3164 = vmatmul.f32.gmra.mxu0 %v2762
        %v3165 = vpop.f32.mrf.mxu0
        %v3166 = vadd.f32 %v3143, %v3165
        %3167 = vdwg.mxu0
        %s3168 = scalar_lea.vmem %s230, 64 [#allocation3]
        %3169 = vst.msk [vmem:[%s3168] sm:$0xff] %vm491, %v3163
        %3170 = vst.msk [vmem:[%s3168 + $0x8] sm:$0xff] %vm491, %v3166
        %v3171 = vld [vmem:[#allocation2 + $0x50] sm:$0xff]
        %v3172 = vld [vmem:[#allocation2 + $0x58] sm:$0xff]
        %v3173 = vld [vmem:[#allocation2 + $0x150] sm:$0xff]
        %v3174 = vld [vmem:[#allocation2 + $0x158] sm:$0xff]
        %v3175 = vld [vmem:[#allocation2 + $0x250] sm:$0xff]
        %v3176 = vld [vmem:[#allocation2 + $0x258] sm:$0xff]
        %v3177 = vld [vmem:[#allocation2 + $0x350] sm:$0xff]
        %v3178 = vld [vmem:[#allocation2 + $0x358] sm:$0xff]
        %v3179 = vld [vmem:[#allocation2 + $0x450] sm:$0xff]
        %v3180 = vld [vmem:[#allocation2 + $0x458] sm:$0xff]
        %v3181 = vld [vmem:[#allocation2 + $0x550] sm:$0xff]
        %v3182 = vld [vmem:[#allocation2 + $0x558] sm:$0xff]
        %v3183 = vld [vmem:[#allocation2 + $0x650] sm:$0xff]
        %v3184 = vld [vmem:[#allocation2 + $0x658] sm:$0xff]
        %v3185 = vld [vmem:[#allocation2 + $0x750] sm:$0xff]
        %v3186 = vld [vmem:[#allocation2 + $0x758] sm:$0xff]
        %v3187 = vld [vmem:[#allocation2 + $0x850] sm:$0xff]
        %v3188 = vld [vmem:[#allocation2 + $0x858] sm:$0xff]
        %v3189 = vld [vmem:[#allocation2 + $0x950] sm:$0xff]
        %v3190 = vld [vmem:[#allocation2 + $0x958] sm:$0xff]
        %v3191 = vld [vmem:[#allocation2 + $0xa50] sm:$0xff]
        %v3192 = vld [vmem:[#allocation2 + $0xa58] sm:$0xff]
        %v3193 = vld [vmem:[#allocation2 + $0xb50] sm:$0xff]
        %v3194 = vld [vmem:[#allocation2 + $0xb58] sm:$0xff]
        %v3195 = vld [vmem:[#allocation2 + $0xc50] sm:$0xff]
        %v3196 = vld [vmem:[#allocation2 + $0xc58] sm:$0xff]
        %v3197 = vld [vmem:[#allocation2 + $0xd50] sm:$0xff]
        %v3198 = vld [vmem:[#allocation2 + $0xd58] sm:$0xff]
        %v3199 = vld [vmem:[#allocation2 + $0xe50] sm:$0xff]
        %v3200 = vld [vmem:[#allocation2 + $0xe58] sm:$0xff]
        %v3201 = vld [vmem:[#allocation2 + $0xf50] sm:$0xff]
        %v3202 = vld [vmem:[#allocation2 + $0xf58] sm:$0xff]
        %3203 = vmatpush.msra.mxu0 %v3186
        %3204 = vmatpush.msra.mxu0 %v3185
        %3205 = vmatpush.msra.mxu0 %v3184
        %3206 = vmatpush.msra.mxu0 %v3183
        %3207 = vmatpush.msra.mxu0 %v3182
        %3208 = vmatpush.msra.mxu0 %v3181
        %3209 = vmatpush.msra.mxu0 %v3180
        %3210 = vmatpush.msra.mxu0 %v3179
        %3211 = vmatpush.msra.mxu0 %v3178
        %3212 = vmatpush.msra.mxu0 %v3177
        %3213 = vmatpush.msra.mxu0 %v3176
        %3214 = vmatpush.msra.mxu0 %v3175
        %3215 = vmatpush.msra.mxu0 %v3174
        %3216 = vmatpush.msra.mxu0 %v3173
        %3217 = vmatpush.msra.mxu0 %v3172
        %3218 = vmatpush.msra.mxu0 %v3171
        %3219 = vmatmul.f32.gmra.mxu0 %v2759
        %v3220 = vpop.f32.mrf.mxu0
        %v3221 = vadd.f32 %v2797, %v3220
        %3222 = vmatmul.f32.gmra.mxu0 %v2761
        %v3223 = vpop.f32.mrf.mxu0
        %v3224 = vadd.f32 %v2797, %v3223
        %3225 = vdwg.mxu0
        %3226 = vmatpush.msra.mxu0 %v3202
        %3227 = vmatpush.msra.mxu0 %v3201
        %3228 = vmatpush.msra.mxu0 %v3200
        %3229 = vmatpush.msra.mxu0 %v3199
        %3230 = vmatpush.msra.mxu0 %v3198
        %3231 = vmatpush.msra.mxu0 %v3197
        %3232 = vmatpush.msra.mxu0 %v3196
        %3233 = vmatpush.msra.mxu0 %v3195
        %3234 = vmatpush.msra.mxu0 %v3194
        %3235 = vmatpush.msra.mxu0 %v3193
        %3236 = vmatpush.msra.mxu0 %v3192
        %3237 = vmatpush.msra.mxu0 %v3191
        %3238 = vmatpush.msra.mxu0 %v3190
        %3239 = vmatpush.msra.mxu0 %v3189
        %3240 = vmatpush.msra.mxu0 %v3188
        %3241 = vmatpush.msra.mxu0 %v3187
        %3242 = vmatmul.f32.gmra.mxu0 %v2760
        %v3243 = vpop.f32.mrf.mxu0
        %v3244 = vadd.f32 %v3221, %v3243
        %3245 = vmatmul.f32.gmra.mxu0 %v2762
        %v3246 = vpop.f32.mrf.mxu0
        %v3247 = vadd.f32 %v3224, %v3246
        %3248 = vdwg.mxu0
        %s3249 = scalar_lea.vmem %s230, 80 [#allocation3]
        %3250 = vst.msk [vmem:[%s3249] sm:$0xff] %vm491, %v3244
        %3251 = vst.msk [vmem:[%s3249 + $0x8] sm:$0xff] %vm491, %v3247
        %v3252 = vld [vmem:[#allocation2 + $0x60] sm:$0xff]
        %v3253 = vld [vmem:[#allocation2 + $0x68] sm:$0xff]
        %v3254 = vld [vmem:[#allocation2 + $0x160] sm:$0xff]
        %v3255 = vld [vmem:[#allocation2 + $0x168] sm:$0xff]
        %v3256 = vld [vmem:[#allocation2 + $0x260] sm:$0xff]
        %v3257 = vld [vmem:[#allocation2 + $0x268] sm:$0xff]
        %v3258 = vld [vmem:[#allocation2 + $0x360] sm:$0xff]
        %v3259 = vld [vmem:[#allocation2 + $0x368] sm:$0xff]
        %v3260 = vld [vmem:[#allocation2 + $0x460] sm:$0xff]
        %v3261 = vld [vmem:[#allocation2 + $0x468] sm:$0xff]
        %v3262 = vld [vmem:[#allocation2 + $0x560] sm:$0xff]
        %v3263 = vld [vmem:[#allocation2 + $0x568] sm:$0xff]
        %v3264 = vld [vmem:[#allocation2 + $0x660] sm:$0xff]
        %v3265 = vld [vmem:[#allocation2 + $0x668] sm:$0xff]
        %v3266 = vld [vmem:[#allocation2 + $0x760] sm:$0xff]
        %v3267 = vld [vmem:[#allocation2 + $0x768] sm:$0xff]
        %v3268 = vld [vmem:[#allocation2 + $0x860] sm:$0xff]
        %v3269 = vld [vmem:[#allocation2 + $0x868] sm:$0xff]
        %v3270 = vld [vmem:[#allocation2 + $0x960] sm:$0xff]
        %v3271 = vld [vmem:[#allocation2 + $0x968] sm:$0xff]
        %v3272 = vld [vmem:[#allocation2 + $0xa60] sm:$0xff]
        %v3273 = vld [vmem:[#allocation2 + $0xa68] sm:$0xff]
        %v3274 = vld [vmem:[#allocation2 + $0xb60] sm:$0xff]
        %v3275 = vld [vmem:[#allocation2 + $0xb68] sm:$0xff]
        %v3276 = vld [vmem:[#allocation2 + $0xc60] sm:$0xff]
        %v3277 = vld [vmem:[#allocation2 + $0xc68] sm:$0xff]
        %v3278 = vld [vmem:[#allocation2 + $0xd60] sm:$0xff]
        %v3279 = vld [vmem:[#allocation2 + $0xd68] sm:$0xff]
        %v3280 = vld [vmem:[#allocation2 + $0xe60] sm:$0xff]
        %v3281 = vld [vmem:[#allocation2 + $0xe68] sm:$0xff]
        %v3282 = vld [vmem:[#allocation2 + $0xf60] sm:$0xff]
        %v3283 = vld [vmem:[#allocation2 + $0xf68] sm:$0xff]
        %3284 = vmatpush.msra.mxu0 %v3267
        %3285 = vmatpush.msra.mxu0 %v3266
        %3286 = vmatpush.msra.mxu0 %v3265
        %3287 = vmatpush.msra.mxu0 %v3264
        %3288 = vmatpush.msra.mxu0 %v3263
        %3289 = vmatpush.msra.mxu0 %v3262
        %3290 = vmatpush.msra.mxu0 %v3261
        %3291 = vmatpush.msra.mxu0 %v3260
        %3292 = vmatpush.msra.mxu0 %v3259
        %3293 = vmatpush.msra.mxu0 %v3258
        %3294 = vmatpush.msra.mxu0 %v3257
        %3295 = vmatpush.msra.mxu0 %v3256
        %3296 = vmatpush.msra.mxu0 %v3255
        %3297 = vmatpush.msra.mxu0 %v3254
        %3298 = vmatpush.msra.mxu0 %v3253
        %3299 = vmatpush.msra.mxu0 %v3252
        %3300 = vmatmul.f32.gmra.mxu0 %v2759
        %v3301 = vpop.f32.mrf.mxu0
        %v3302 = vadd.f32 %v2797, %v3301
        %3303 = vmatmul.f32.gmra.mxu0 %v2761
        %v3304 = vpop.f32.mrf.mxu0
        %v3305 = vadd.f32 %v2797, %v3304
        %3306 = vdwg.mxu0
        %3307 = vmatpush.msra.mxu0 %v3283
        %3308 = vmatpush.msra.mxu0 %v3282
        %3309 = vmatpush.msra.mxu0 %v3281
        %3310 = vmatpush.msra.mxu0 %v3280
        %3311 = vmatpush.msra.mxu0 %v3279
        %3312 = vmatpush.msra.mxu0 %v3278
        %3313 = vmatpush.msra.mxu0 %v3277
        %3314 = vmatpush.msra.mxu0 %v3276
        %3315 = vmatpush.msra.mxu0 %v3275
        %3316 = vmatpush.msra.mxu0 %v3274
        %3317 = vmatpush.msra.mxu0 %v3273
        %3318 = vmatpush.msra.mxu0 %v3272
        %3319 = vmatpush.msra.mxu0 %v3271
        %3320 = vmatpush.msra.mxu0 %v3270
        %3321 = vmatpush.msra.mxu0 %v3269
        %3322 = vmatpush.msra.mxu0 %v3268
        %3323 = vmatmul.f32.gmra.mxu0 %v2760
        %v3324 = vpop.f32.mrf.mxu0
        %v3325 = vadd.f32 %v3302, %v3324
        %3326 = vmatmul.f32.gmra.mxu0 %v2762
        %v3327 = vpop.f32.mrf.mxu0
        %v3328 = vadd.f32 %v3305, %v3327
        %3329 = vdwg.mxu0
        %s3330 = scalar_lea.vmem %s230, 96 [#allocation3]
        %3331 = vst.msk [vmem:[%s3330] sm:$0xff] %vm491, %v3325
        %3332 = vst.msk [vmem:[%s3330 + $0x8] sm:$0xff] %vm491, %v3328
        %v3333 = vld [vmem:[#allocation2 + $0x70] sm:$0xff]
        %v3334 = vld [vmem:[#allocation2 + $0x78] sm:$0xff]
        %v3335 = vld [vmem:[#allocation2 + $0x170] sm:$0xff]
        %v3336 = vld [vmem:[#allocation2 + $0x178] sm:$0xff]
        %v3337 = vld [vmem:[#allocation2 + $0x270] sm:$0xff]
        %v3338 = vld [vmem:[#allocation2 + $0x278] sm:$0xff]
        %v3339 = vld [vmem:[#allocation2 + $0x370] sm:$0xff]
        %v3340 = vld [vmem:[#allocation2 + $0x378] sm:$0xff]
        %v3341 = vld [vmem:[#allocation2 + $0x470] sm:$0xff]
        %v3342 = vld [vmem:[#allocation2 + $0x478] sm:$0xff]
        %v3343 = vld [vmem:[#allocation2 + $0x570] sm:$0xff]
        %v3344 = vld [vmem:[#allocation2 + $0x578] sm:$0xff]
        %v3345 = vld [vmem:[#allocation2 + $0x670] sm:$0xff]
        %v3346 = vld [vmem:[#allocation2 + $0x678] sm:$0xff]
        %v3347 = vld [vmem:[#allocation2 + $0x770] sm:$0xff]
        %v3348 = vld [vmem:[#allocation2 + $0x778] sm:$0xff]
        %v3349 = vld [vmem:[#allocation2 + $0x870] sm:$0xff]
        %v3350 = vld [vmem:[#allocation2 + $0x878] sm:$0xff]
        %v3351 = vld [vmem:[#allocation2 + $0x970] sm:$0xff]
        %v3352 = vld [vmem:[#allocation2 + $0x978] sm:$0xff]
        %v3353 = vld [vmem:[#allocation2 + $0xa70] sm:$0xff]
        %v3354 = vld [vmem:[#allocation2 + $0xa78] sm:$0xff]
        %v3355 = vld [vmem:[#allocation2 + $0xb70] sm:$0xff]
        %v3356 = vld [vmem:[#allocation2 + $0xb78] sm:$0xff]
        %v3357 = vld [vmem:[#allocation2 + $0xc70] sm:$0xff]
        %v3358 = vld [vmem:[#allocation2 + $0xc78] sm:$0xff]
        %v3359 = vld [vmem:[#allocation2 + $0xd70] sm:$0xff]
        %v3360 = vld [vmem:[#allocation2 + $0xd78] sm:$0xff]
        %v3361 = vld [vmem:[#allocation2 + $0xe70] sm:$0xff]
        %v3362 = vld [vmem:[#allocation2 + $0xe78] sm:$0xff]
        %v3363 = vld [vmem:[#allocation2 + $0xf70] sm:$0xff]
        %v3364 = vld [vmem:[#allocation2 + $0xf78] sm:$0xff]
        %3365 = vmatpush.msra.mxu0 %v3348
        %3366 = vmatpush.msra.mxu0 %v3347
        %3367 = vmatpush.msra.mxu0 %v3346
        %3368 = vmatpush.msra.mxu0 %v3345
        %3369 = vmatpush.msra.mxu0 %v3344
        %3370 = vmatpush.msra.mxu0 %v3343
        %3371 = vmatpush.msra.mxu0 %v3342
        %3372 = vmatpush.msra.mxu0 %v3341
        %3373 = vmatpush.msra.mxu0 %v3340
        %3374 = vmatpush.msra.mxu0 %v3339
        %3375 = vmatpush.msra.mxu0 %v3338
        %3376 = vmatpush.msra.mxu0 %v3337
        %3377 = vmatpush.msra.mxu0 %v3336
        %3378 = vmatpush.msra.mxu0 %v3335
        %3379 = vmatpush.msra.mxu0 %v3334
        %3380 = vmatpush.msra.mxu0 %v3333
        %3381 = vmatmul.f32.gmra.mxu0 %v2759
        %v3382 = vpop.f32.mrf.mxu0
        %v3383 = vadd.f32 %v2797, %v3382
        %3384 = vmatmul.f32.gmra.mxu0 %v2761
        %v3385 = vpop.f32.mrf.mxu0
        %v3386 = vadd.f32 %v2797, %v3385
        %3387 = vdwg.mxu0
        %3388 = vmatpush.msra.mxu0 %v3364
        %3389 = vmatpush.msra.mxu0 %v3363
        %3390 = vmatpush.msra.mxu0 %v3362
        %3391 = vmatpush.msra.mxu0 %v3361
        %3392 = vmatpush.msra.mxu0 %v3360
        %3393 = vmatpush.msra.mxu0 %v3359
        %3394 = vmatpush.msra.mxu0 %v3358
        %3395 = vmatpush.msra.mxu0 %v3357
        %3396 = vmatpush.msra.mxu0 %v3356
        %3397 = vmatpush.msra.mxu0 %v3355
        %3398 = vmatpush.msra.mxu0 %v3354
        %3399 = vmatpush.msra.mxu0 %v3353
        %3400 = vmatpush.msra.mxu0 %v3352
        %3401 = vmatpush.msra.mxu0 %v3351
        %3402 = vmatpush.msra.mxu0 %v3350
        %3403 = vmatpush.msra.mxu0 %v3349
        %3404 = vmatmul.f32.gmra.mxu0 %v2760
        %v3405 = vpop.f32.mrf.mxu0
        %v3406 = vadd.f32 %v3383, %v3405
        %3407 = vmatmul.f32.gmra.mxu0 %v2762
        %v3408 = vpop.f32.mrf.mxu0
        %v3409 = vadd.f32 %v3386, %v3408
        %3410 = vdwg.mxu0
        %s3411 = scalar_lea.vmem %s230, 112 [#allocation3]
        %3412 = vst.msk [vmem:[%s3411] sm:$0xff] %vm491, %v3406
        %3413 = vst.msk [vmem:[%s3411 + $0x8] sm:$0xff] %vm491, %v3409
        %v3414 = vld [vmem:[#allocation2 + $0x80] sm:$0xff]
        %v3415 = vld [vmem:[#allocation2 + $0x88] sm:$0xff]
        %v3416 = vld [vmem:[#allocation2 + $0x180] sm:$0xff]
        %v3417 = vld [vmem:[#allocation2 + $0x188] sm:$0xff]
        %v3418 = vld [vmem:[#allocation2 + $0x280] sm:$0xff]
        %v3419 = vld [vmem:[#allocation2 + $0x288] sm:$0xff]
        %v3420 = vld [vmem:[#allocation2 + $0x380] sm:$0xff]
        %v3421 = vld [vmem:[#allocation2 + $0x388] sm:$0xff]
        %v3422 = vld [vmem:[#allocation2 + $0x480] sm:$0xff]
        %v3423 = vld [vmem:[#allocation2 + $0x488] sm:$0xff]
        %v3424 = vld [vmem:[#allocation2 + $0x580] sm:$0xff]
        %v3425 = vld [vmem:[#allocation2 + $0x588] sm:$0xff]
        %v3426 = vld [vmem:[#allocation2 + $0x680] sm:$0xff]
        %v3427 = vld [vmem:[#allocation2 + $0x688] sm:$0xff]
        %v3428 = vld [vmem:[#allocation2 + $0x780] sm:$0xff]
        %v3429 = vld [vmem:[#allocation2 + $0x788] sm:$0xff]
        %v3430 = vld [vmem:[#allocation2 + $0x880] sm:$0xff]
        %v3431 = vld [vmem:[#allocation2 + $0x888] sm:$0xff]
        %v3432 = vld [vmem:[#allocation2 + $0x980] sm:$0xff]
        %v3433 = vld [vmem:[#allocation2 + $0x988] sm:$0xff]
        %v3434 = vld [vmem:[#allocation2 + $0xa80] sm:$0xff]
        %v3435 = vld [vmem:[#allocation2 + $0xa88] sm:$0xff]
        %v3436 = vld [vmem:[#allocation2 + $0xb80] sm:$0xff]
        %v3437 = vld [vmem:[#allocation2 + $0xb88] sm:$0xff]
        %v3438 = vld [vmem:[#allocation2 + $0xc80] sm:$0xff]
        %v3439 = vld [vmem:[#allocation2 + $0xc88] sm:$0xff]
        %v3440 = vld [vmem:[#allocation2 + $0xd80] sm:$0xff]
        %v3441 = vld [vmem:[#allocation2 + $0xd88] sm:$0xff]
        %v3442 = vld [vmem:[#allocation2 + $0xe80] sm:$0xff]
        %v3443 = vld [vmem:[#allocation2 + $0xe88] sm:$0xff]
        %v3444 = vld [vmem:[#allocation2 + $0xf80] sm:$0xff]
        %v3445 = vld [vmem:[#allocation2 + $0xf88] sm:$0xff]
        %3446 = vmatpush.msra.mxu0 %v3429
        %3447 = vmatpush.msra.mxu0 %v3428
        %3448 = vmatpush.msra.mxu0 %v3427
        %3449 = vmatpush.msra.mxu0 %v3426
        %3450 = vmatpush.msra.mxu0 %v3425
        %3451 = vmatpush.msra.mxu0 %v3424
        %3452 = vmatpush.msra.mxu0 %v3423
        %3453 = vmatpush.msra.mxu0 %v3422
        %3454 = vmatpush.msra.mxu0 %v3421
        %3455 = vmatpush.msra.mxu0 %v3420
        %3456 = vmatpush.msra.mxu0 %v3419
        %3457 = vmatpush.msra.mxu0 %v3418
        %3458 = vmatpush.msra.mxu0 %v3417
        %3459 = vmatpush.msra.mxu0 %v3416
        %3460 = vmatpush.msra.mxu0 %v3415
        %3461 = vmatpush.msra.mxu0 %v3414
        %3462 = vmatmul.f32.gmra.mxu0 %v2759
        %v3463 = vpop.f32.mrf.mxu0
        %v3464 = vadd.f32 %v2797, %v3463
        %3465 = vmatmul.f32.gmra.mxu0 %v2761
        %v3466 = vpop.f32.mrf.mxu0
        %v3467 = vadd.f32 %v2797, %v3466
        %3468 = vdwg.mxu0
        %3469 = vmatpush.msra.mxu0 %v3445
        %3470 = vmatpush.msra.mxu0 %v3444
        %3471 = vmatpush.msra.mxu0 %v3443
        %3472 = vmatpush.msra.mxu0 %v3442
        %3473 = vmatpush.msra.mxu0 %v3441
        %3474 = vmatpush.msra.mxu0 %v3440
        %3475 = vmatpush.msra.mxu0 %v3439
        %3476 = vmatpush.msra.mxu0 %v3438
        %3477 = vmatpush.msra.mxu0 %v3437
        %3478 = vmatpush.msra.mxu0 %v3436
        %3479 = vmatpush.msra.mxu0 %v3435
        %3480 = vmatpush.msra.mxu0 %v3434
        %3481 = vmatpush.msra.mxu0 %v3433
        %3482 = vmatpush.msra.mxu0 %v3432
        %3483 = vmatpush.msra.mxu0 %v3431
        %3484 = vmatpush.msra.mxu0 %v3430
        %3485 = vmatmul.f32.gmra.mxu0 %v2760
        %v3486 = vpop.f32.mrf.mxu0
        %v3487 = vadd.f32 %v3464, %v3486
        %3488 = vmatmul.f32.gmra.mxu0 %v2762
        %v3489 = vpop.f32.mrf.mxu0
        %v3490 = vadd.f32 %v3467, %v3489
        %3491 = vdwg.mxu0
        %s3492 = scalar_lea.vmem %s230, 128 [#allocation3]
        %3493 = vst.msk [vmem:[%s3492] sm:$0xff] %vm491, %v3487
        %3494 = vst.msk [vmem:[%s3492 + $0x8] sm:$0xff] %vm491, %v3490
        %v3495 = vld [vmem:[#allocation2 + $0x90] sm:$0xff]
        %v3496 = vld [vmem:[#allocation2 + $0x98] sm:$0xff]
        %v3497 = vld [vmem:[#allocation2 + $0x190] sm:$0xff]
        %v3498 = vld [vmem:[#allocation2 + $0x198] sm:$0xff]
        %v3499 = vld [vmem:[#allocation2 + $0x290] sm:$0xff]
        %v3500 = vld [vmem:[#allocation2 + $0x298] sm:$0xff]
        %v3501 = vld [vmem:[#allocation2 + $0x390] sm:$0xff]
        %v3502 = vld [vmem:[#allocation2 + $0x398] sm:$0xff]
        %v3503 = vld [vmem:[#allocation2 + $0x490] sm:$0xff]
        %v3504 = vld [vmem:[#allocation2 + $0x498] sm:$0xff]
        %v3505 = vld [vmem:[#allocation2 + $0x590] sm:$0xff]
        %v3506 = vld [vmem:[#allocation2 + $0x598] sm:$0xff]
        %v3507 = vld [vmem:[#allocation2 + $0x690] sm:$0xff]
        %v3508 = vld [vmem:[#allocation2 + $0x698] sm:$0xff]
        %v3509 = vld [vmem:[#allocation2 + $0x790] sm:$0xff]
        %v3510 = vld [vmem:[#allocation2 + $0x798] sm:$0xff]
        %v3511 = vld [vmem:[#allocation2 + $0x890] sm:$0xff]
        %v3512 = vld [vmem:[#allocation2 + $0x898] sm:$0xff]
        %v3513 = vld [vmem:[#allocation2 + $0x990] sm:$0xff]
        %v3514 = vld [vmem:[#allocation2 + $0x998] sm:$0xff]
        %v3515 = vld [vmem:[#allocation2 + $0xa90] sm:$0xff]
        %v3516 = vld [vmem:[#allocation2 + $0xa98] sm:$0xff]
        %v3517 = vld [vmem:[#allocation2 + $0xb90] sm:$0xff]
        %v3518 = vld [vmem:[#allocation2 + $0xb98] sm:$0xff]
        %v3519 = vld [vmem:[#allocation2 + $0xc90] sm:$0xff]
        %v3520 = vld [vmem:[#allocation2 + $0xc98] sm:$0xff]
        %v3521 = vld [vmem:[#allocation2 + $0xd90] sm:$0xff]
        %v3522 = vld [vmem:[#allocation2 + $0xd98] sm:$0xff]
        %v3523 = vld [vmem:[#allocation2 + $0xe90] sm:$0xff]
        %v3524 = vld [vmem:[#allocation2 + $0xe98] sm:$0xff]
        %v3525 = vld [vmem:[#allocation2 + $0xf90] sm:$0xff]
        %v3526 = vld [vmem:[#allocation2 + $0xf98] sm:$0xff]
        %3527 = vmatpush.msra.mxu0 %v3510
        %3528 = vmatpush.msra.mxu0 %v3509
        %3529 = vmatpush.msra.mxu0 %v3508
        %3530 = vmatpush.msra.mxu0 %v3507
        %3531 = vmatpush.msra.mxu0 %v3506
        %3532 = vmatpush.msra.mxu0 %v3505
        %3533 = vmatpush.msra.mxu0 %v3504
        %3534 = vmatpush.msra.mxu0 %v3503
        %3535 = vmatpush.msra.mxu0 %v3502
        %3536 = vmatpush.msra.mxu0 %v3501
        %3537 = vmatpush.msra.mxu0 %v3500
        %3538 = vmatpush.msra.mxu0 %v3499
        %3539 = vmatpush.msra.mxu0 %v3498
        %3540 = vmatpush.msra.mxu0 %v3497
        %3541 = vmatpush.msra.mxu0 %v3496
        %3542 = vmatpush.msra.mxu0 %v3495
        %3543 = vmatmul.f32.gmra.mxu0 %v2759
        %v3544 = vpop.f32.mrf.mxu0
        %v3545 = vadd.f32 %v2797, %v3544
        %3546 = vmatmul.f32.gmra.mxu0 %v2761
        %v3547 = vpop.f32.mrf.mxu0
        %v3548 = vadd.f32 %v2797, %v3547
        %3549 = vdwg.mxu0
        %3550 = vmatpush.msra.mxu0 %v3526
        %3551 = vmatpush.msra.mxu0 %v3525
        %3552 = vmatpush.msra.mxu0 %v3524
        %3553 = vmatpush.msra.mxu0 %v3523
        %3554 = vmatpush.msra.mxu0 %v3522
        %3555 = vmatpush.msra.mxu0 %v3521
        %3556 = vmatpush.msra.mxu0 %v3520
        %3557 = vmatpush.msra.mxu0 %v3519
        %3558 = vmatpush.msra.mxu0 %v3518
        %3559 = vmatpush.msra.mxu0 %v3517
        %3560 = vmatpush.msra.mxu0 %v3516
        %3561 = vmatpush.msra.mxu0 %v3515
        %3562 = vmatpush.msra.mxu0 %v3514
        %3563 = vmatpush.msra.mxu0 %v3513
        %3564 = vmatpush.msra.mxu0 %v3512
        %3565 = vmatpush.msra.mxu0 %v3511
        %3566 = vmatmul.f32.gmra.mxu0 %v2760
        %v3567 = vpop.f32.mrf.mxu0
        %v3568 = vadd.f32 %v3545, %v3567
        %3569 = vmatmul.f32.gmra.mxu0 %v2762
        %v3570 = vpop.f32.mrf.mxu0
        %v3571 = vadd.f32 %v3548, %v3570
        %3572 = vdwg.mxu0
        %s3573 = scalar_lea.vmem %s230, 144 [#allocation3]
        %3574 = vst.msk [vmem:[%s3573] sm:$0xff] %vm491, %v3568
        %3575 = vst.msk [vmem:[%s3573 + $0x8] sm:$0xff] %vm491, %v3571
        %v3576 = vld [vmem:[#allocation2 + $0xa0] sm:$0xff]
        %v3577 = vld [vmem:[#allocation2 + $0xa8] sm:$0xff]
        %v3578 = vld [vmem:[#allocation2 + $0x1a0] sm:$0xff]
        %v3579 = vld [vmem:[#allocation2 + $0x1a8] sm:$0xff]
        %v3580 = vld [vmem:[#allocation2 + $0x2a0] sm:$0xff]
        %v3581 = vld [vmem:[#allocation2 + $0x2a8] sm:$0xff]
        %v3582 = vld [vmem:[#allocation2 + $0x3a0] sm:$0xff]
        %v3583 = vld [vmem:[#allocation2 + $0x3a8] sm:$0xff]
        %v3584 = vld [vmem:[#allocation2 + $0x4a0] sm:$0xff]
        %v3585 = vld [vmem:[#allocation2 + $0x4a8] sm:$0xff]
        %v3586 = vld [vmem:[#allocation2 + $0x5a0] sm:$0xff]
        %v3587 = vld [vmem:[#allocation2 + $0x5a8] sm:$0xff]
        %v3588 = vld [vmem:[#allocation2 + $0x6a0] sm:$0xff]
        %v3589 = vld [vmem:[#allocation2 + $0x6a8] sm:$0xff]
        %v3590 = vld [vmem:[#allocation2 + $0x7a0] sm:$0xff]
        %v3591 = vld [vmem:[#allocation2 + $0x7a8] sm:$0xff]
        %v3592 = vld [vmem:[#allocation2 + $0x8a0] sm:$0xff]
        %v3593 = vld [vmem:[#allocation2 + $0x8a8] sm:$0xff]
        %v3594 = vld [vmem:[#allocation2 + $0x9a0] sm:$0xff]
        %v3595 = vld [vmem:[#allocation2 + $0x9a8] sm:$0xff]
        %v3596 = vld [vmem:[#allocation2 + $0xaa0] sm:$0xff]
        %v3597 = vld [vmem:[#allocation2 + $0xaa8] sm:$0xff]
        %v3598 = vld [vmem:[#allocation2 + $0xba0] sm:$0xff]
        %v3599 = vld [vmem:[#allocation2 + $0xba8] sm:$0xff]
        %v3600 = vld [vmem:[#allocation2 + $0xca0] sm:$0xff]
        %v3601 = vld [vmem:[#allocation2 + $0xca8] sm:$0xff]
        %v3602 = vld [vmem:[#allocation2 + $0xda0] sm:$0xff]
        %v3603 = vld [vmem:[#allocation2 + $0xda8] sm:$0xff]
        %v3604 = vld [vmem:[#allocation2 + $0xea0] sm:$0xff]
        %v3605 = vld [vmem:[#allocation2 + $0xea8] sm:$0xff]
        %v3606 = vld [vmem:[#allocation2 + $0xfa0] sm:$0xff]
        %v3607 = vld [vmem:[#allocation2 + $0xfa8] sm:$0xff]
        %3608 = vmatpush.msra.mxu0 %v3591
        %3609 = vmatpush.msra.mxu0 %v3590
        %3610 = vmatpush.msra.mxu0 %v3589
        %3611 = vmatpush.msra.mxu0 %v3588
        %3612 = vmatpush.msra.mxu0 %v3587
        %3613 = vmatpush.msra.mxu0 %v3586
        %3614 = vmatpush.msra.mxu0 %v3585
        %3615 = vmatpush.msra.mxu0 %v3584
        %3616 = vmatpush.msra.mxu0 %v3583
        %3617 = vmatpush.msra.mxu0 %v3582
        %3618 = vmatpush.msra.mxu0 %v3581
        %3619 = vmatpush.msra.mxu0 %v3580
        %3620 = vmatpush.msra.mxu0 %v3579
        %3621 = vmatpush.msra.mxu0 %v3578
        %3622 = vmatpush.msra.mxu0 %v3577
        %3623 = vmatpush.msra.mxu0 %v3576
        %3624 = vmatmul.f32.gmra.mxu0 %v2759
        %v3625 = vpop.f32.mrf.mxu0
        %v3626 = vadd.f32 %v2797, %v3625
        %3627 = vmatmul.f32.gmra.mxu0 %v2761
        %v3628 = vpop.f32.mrf.mxu0
        %v3629 = vadd.f32 %v2797, %v3628
        %3630 = vdwg.mxu0
        %3631 = vmatpush.msra.mxu0 %v3607
        %3632 = vmatpush.msra.mxu0 %v3606
        %3633 = vmatpush.msra.mxu0 %v3605
        %3634 = vmatpush.msra.mxu0 %v3604
        %3635 = vmatpush.msra.mxu0 %v3603
        %3636 = vmatpush.msra.mxu0 %v3602
        %3637 = vmatpush.msra.mxu0 %v3601
        %3638 = vmatpush.msra.mxu0 %v3600
        %3639 = vmatpush.msra.mxu0 %v3599
        %3640 = vmatpush.msra.mxu0 %v3598
        %3641 = vmatpush.msra.mxu0 %v3597
        %3642 = vmatpush.msra.mxu0 %v3596
        %3643 = vmatpush.msra.mxu0 %v3595
        %3644 = vmatpush.msra.mxu0 %v3594
        %3645 = vmatpush.msra.mxu0 %v3593
        %3646 = vmatpush.msra.mxu0 %v3592
        %3647 = vmatmul.f32.gmra.mxu0 %v2760
        %v3648 = vpop.f32.mrf.mxu0
        %v3649 = vadd.f32 %v3626, %v3648
        %3650 = vmatmul.f32.gmra.mxu0 %v2762
        %v3651 = vpop.f32.mrf.mxu0
        %v3652 = vadd.f32 %v3629, %v3651
        %3653 = vdwg.mxu0
        %s3654 = scalar_lea.vmem %s230, 160 [#allocation3]
        %3655 = vst.msk [vmem:[%s3654] sm:$0xff] %vm491, %v3649
        %3656 = vst.msk [vmem:[%s3654 + $0x8] sm:$0xff] %vm491, %v3652
        %v3657 = vld [vmem:[#allocation2 + $0xb0] sm:$0xff]
        %v3658 = vld [vmem:[#allocation2 + $0xb8] sm:$0xff]
        %v3659 = vld [vmem:[#allocation2 + $0x1b0] sm:$0xff]
        %v3660 = vld [vmem:[#allocation2 + $0x1b8] sm:$0xff]
        %v3661 = vld [vmem:[#allocation2 + $0x2b0] sm:$0xff]
        %v3662 = vld [vmem:[#allocation2 + $0x2b8] sm:$0xff]
        %v3663 = vld [vmem:[#allocation2 + $0x3b0] sm:$0xff]
        %v3664 = vld [vmem:[#allocation2 + $0x3b8] sm:$0xff]
        %v3665 = vld [vmem:[#allocation2 + $0x4b0] sm:$0xff]
        %v3666 = vld [vmem:[#allocation2 + $0x4b8] sm:$0xff]
        %v3667 = vld [vmem:[#allocation2 + $0x5b0] sm:$0xff]
        %v3668 = vld [vmem:[#allocation2 + $0x5b8] sm:$0xff]
        %v3669 = vld [vmem:[#allocation2 + $0x6b0] sm:$0xff]
        %v3670 = vld [vmem:[#allocation2 + $0x6b8] sm:$0xff]
        %v3671 = vld [vmem:[#allocation2 + $0x7b0] sm:$0xff]
        %v3672 = vld [vmem:[#allocation2 + $0x7b8] sm:$0xff]
        %v3673 = vld [vmem:[#allocation2 + $0x8b0] sm:$0xff]
        %v3674 = vld [vmem:[#allocation2 + $0x8b8] sm:$0xff]
        %v3675 = vld [vmem:[#allocation2 + $0x9b0] sm:$0xff]
        %v3676 = vld [vmem:[#allocation2 + $0x9b8] sm:$0xff]
        %v3677 = vld [vmem:[#allocation2 + $0xab0] sm:$0xff]
        %v3678 = vld [vmem:[#allocation2 + $0xab8] sm:$0xff]
        %v3679 = vld [vmem:[#allocation2 + $0xbb0] sm:$0xff]
        %v3680 = vld [vmem:[#allocation2 + $0xbb8] sm:$0xff]
        %v3681 = vld [vmem:[#allocation2 + $0xcb0] sm:$0xff]
        %v3682 = vld [vmem:[#allocation2 + $0xcb8] sm:$0xff]
        %v3683 = vld [vmem:[#allocation2 + $0xdb0] sm:$0xff]
        %v3684 = vld [vmem:[#allocation2 + $0xdb8] sm:$0xff]
        %v3685 = vld [vmem:[#allocation2 + $0xeb0] sm:$0xff]
        %v3686 = vld [vmem:[#allocation2 + $0xeb8] sm:$0xff]
        %v3687 = vld [vmem:[#allocation2 + $0xfb0] sm:$0xff]
        %v3688 = vld [vmem:[#allocation2 + $0xfb8] sm:$0xff]
        %3689 = vmatpush.msra.mxu0 %v3672
        %3690 = vmatpush.msra.mxu0 %v3671
        %3691 = vmatpush.msra.mxu0 %v3670
        %3692 = vmatpush.msra.mxu0 %v3669
        %3693 = vmatpush.msra.mxu0 %v3668
        %3694 = vmatpush.msra.mxu0 %v3667
        %3695 = vmatpush.msra.mxu0 %v3666
        %3696 = vmatpush.msra.mxu0 %v3665
        %3697 = vmatpush.msra.mxu0 %v3664
        %3698 = vmatpush.msra.mxu0 %v3663
        %3699 = vmatpush.msra.mxu0 %v3662
        %3700 = vmatpush.msra.mxu0 %v3661
        %3701 = vmatpush.msra.mxu0 %v3660
        %3702 = vmatpush.msra.mxu0 %v3659
        %3703 = vmatpush.msra.mxu0 %v3658
        %3704 = vmatpush.msra.mxu0 %v3657
        %3705 = vmatmul.f32.gmra.mxu0 %v2759
        %v3706 = vpop.f32.mrf.mxu0
        %v3707 = vadd.f32 %v2797, %v3706
        %3708 = vmatmul.f32.gmra.mxu0 %v2761
        %v3709 = vpop.f32.mrf.mxu0
        %v3710 = vadd.f32 %v2797, %v3709
        %3711 = vdwg.mxu0
        %3712 = vmatpush.msra.mxu0 %v3688
        %3713 = vmatpush.msra.mxu0 %v3687
        %3714 = vmatpush.msra.mxu0 %v3686
        %3715 = vmatpush.msra.mxu0 %v3685
        %3716 = vmatpush.msra.mxu0 %v3684
        %3717 = vmatpush.msra.mxu0 %v3683
        %3718 = vmatpush.msra.mxu0 %v3682
        %3719 = vmatpush.msra.mxu0 %v3681
        %3720 = vmatpush.msra.mxu0 %v3680
        %3721 = vmatpush.msra.mxu0 %v3679
        %3722 = vmatpush.msra.mxu0 %v3678
        %3723 = vmatpush.msra.mxu0 %v3677
        %3724 = vmatpush.msra.mxu0 %v3676
        %3725 = vmatpush.msra.mxu0 %v3675
        %3726 = vmatpush.msra.mxu0 %v3674
        %3727 = vmatpush.msra.mxu0 %v3673
        %3728 = vmatmul.f32.gmra.mxu0 %v2760
        %v3729 = vpop.f32.mrf.mxu0
        %v3730 = vadd.f32 %v3707, %v3729
        %3731 = vmatmul.f32.gmra.mxu0 %v2762
        %v3732 = vpop.f32.mrf.mxu0
        %v3733 = vadd.f32 %v3710, %v3732
        %3734 = vdwg.mxu0
        %s3735 = scalar_lea.vmem %s230, 176 [#allocation3]
        %3736 = vst.msk [vmem:[%s3735] sm:$0xff] %vm491, %v3730
        %3737 = vst.msk [vmem:[%s3735 + $0x8] sm:$0xff] %vm491, %v3733
        %v3738 = vld [vmem:[#allocation2 + $0xc0] sm:$0xff]
        %v3739 = vld [vmem:[#allocation2 + $0xc8] sm:$0xff]
        %v3740 = vld [vmem:[#allocation2 + $0x1c0] sm:$0xff]
        %v3741 = vld [vmem:[#allocation2 + $0x1c8] sm:$0xff]
        %v3742 = vld [vmem:[#allocation2 + $0x2c0] sm:$0xff]
        %v3743 = vld [vmem:[#allocation2 + $0x2c8] sm:$0xff]
        %v3744 = vld [vmem:[#allocation2 + $0x3c0] sm:$0xff]
        %v3745 = vld [vmem:[#allocation2 + $0x3c8] sm:$0xff]
        %v3746 = vld [vmem:[#allocation2 + $0x4c0] sm:$0xff]
        %v3747 = vld [vmem:[#allocation2 + $0x4c8] sm:$0xff]
        %v3748 = vld [vmem:[#allocation2 + $0x5c0] sm:$0xff]
        %v3749 = vld [vmem:[#allocation2 + $0x5c8] sm:$0xff]
        %v3750 = vld [vmem:[#allocation2 + $0x6c0] sm:$0xff]
        %v3751 = vld [vmem:[#allocation2 + $0x6c8] sm:$0xff]
        %v3752 = vld [vmem:[#allocation2 + $0x7c0] sm:$0xff]
        %v3753 = vld [vmem:[#allocation2 + $0x7c8] sm:$0xff]
        %v3754 = vld [vmem:[#allocation2 + $0x8c0] sm:$0xff]
        %v3755 = vld [vmem:[#allocation2 + $0x8c8] sm:$0xff]
        %v3756 = vld [vmem:[#allocation2 + $0x9c0] sm:$0xff]
        %v3757 = vld [vmem:[#allocation2 + $0x9c8] sm:$0xff]
        %v3758 = vld [vmem:[#allocation2 + $0xac0] sm:$0xff]
        %v3759 = vld [vmem:[#allocation2 + $0xac8] sm:$0xff]
        %v3760 = vld [vmem:[#allocation2 + $0xbc0] sm:$0xff]
        %v3761 = vld [vmem:[#allocation2 + $0xbc8] sm:$0xff]
        %v3762 = vld [vmem:[#allocation2 + $0xcc0] sm:$0xff]
        %v3763 = vld [vmem:[#allocation2 + $0xcc8] sm:$0xff]
        %v3764 = vld [vmem:[#allocation2 + $0xdc0] sm:$0xff]
        %v3765 = vld [vmem:[#allocation2 + $0xdc8] sm:$0xff]
        %v3766 = vld [vmem:[#allocation2 + $0xec0] sm:$0xff]
        %v3767 = vld [vmem:[#allocation2 + $0xec8] sm:$0xff]
        %v3768 = vld [vmem:[#allocation2 + $0xfc0] sm:$0xff]
        %v3769 = vld [vmem:[#allocation2 + $0xfc8] sm:$0xff]
        %3770 = vmatpush.msra.mxu0 %v3753
        %3771 = vmatpush.msra.mxu0 %v3752
        %3772 = vmatpush.msra.mxu0 %v3751
        %3773 = vmatpush.msra.mxu0 %v3750
        %3774 = vmatpush.msra.mxu0 %v3749
        %3775 = vmatpush.msra.mxu0 %v3748
        %3776 = vmatpush.msra.mxu0 %v3747
        %3777 = vmatpush.msra.mxu0 %v3746
        %3778 = vmatpush.msra.mxu0 %v3745
        %3779 = vmatpush.msra.mxu0 %v3744
        %3780 = vmatpush.msra.mxu0 %v3743
        %3781 = vmatpush.msra.mxu0 %v3742
        %3782 = vmatpush.msra.mxu0 %v3741
        %3783 = vmatpush.msra.mxu0 %v3740
        %3784 = vmatpush.msra.mxu0 %v3739
        %3785 = vmatpush.msra.mxu0 %v3738
        %3786 = vmatmul.f32.gmra.mxu0 %v2759
        %v3787 = vpop.f32.mrf.mxu0
        %v3788 = vadd.f32 %v2797, %v3787
        %3789 = vmatmul.f32.gmra.mxu0 %v2761
        %v3790 = vpop.f32.mrf.mxu0
        %v3791 = vadd.f32 %v2797, %v3790
        %3792 = vdwg.mxu0
        %3793 = vmatpush.msra.mxu0 %v3769
        %3794 = vmatpush.msra.mxu0 %v3768
        %3795 = vmatpush.msra.mxu0 %v3767
        %3796 = vmatpush.msra.mxu0 %v3766
        %3797 = vmatpush.msra.mxu0 %v3765
        %3798 = vmatpush.msra.mxu0 %v3764
        %3799 = vmatpush.msra.mxu0 %v3763
        %3800 = vmatpush.msra.mxu0 %v3762
        %3801 = vmatpush.msra.mxu0 %v3761
        %3802 = vmatpush.msra.mxu0 %v3760
        %3803 = vmatpush.msra.mxu0 %v3759
        %3804 = vmatpush.msra.mxu0 %v3758
        %3805 = vmatpush.msra.mxu0 %v3757
        %3806 = vmatpush.msra.mxu0 %v3756
        %3807 = vmatpush.msra.mxu0 %v3755
        %3808 = vmatpush.msra.mxu0 %v3754
        %3809 = vmatmul.f32.gmra.mxu0 %v2760
        %v3810 = vpop.f32.mrf.mxu0
        %v3811 = vadd.f32 %v3788, %v3810
        %3812 = vmatmul.f32.gmra.mxu0 %v2762
        %v3813 = vpop.f32.mrf.mxu0
        %v3814 = vadd.f32 %v3791, %v3813
        %3815 = vdwg.mxu0
        %s3816 = scalar_lea.vmem %s230, 192 [#allocation3]
        %3817 = vst.msk [vmem:[%s3816] sm:$0xff] %vm491, %v3811
        %3818 = vst.msk [vmem:[%s3816 + $0x8] sm:$0xff] %vm491, %v3814
        %v3819 = vld [vmem:[#allocation2 + $0xd0] sm:$0xff]
        %v3820 = vld [vmem:[#allocation2 + $0xd8] sm:$0xff]
        %v3821 = vld [vmem:[#allocation2 + $0x1d0] sm:$0xff]
        %v3822 = vld [vmem:[#allocation2 + $0x1d8] sm:$0xff]
        %v3823 = vld [vmem:[#allocation2 + $0x2d0] sm:$0xff]
        %v3824 = vld [vmem:[#allocation2 + $0x2d8] sm:$0xff]
        %v3825 = vld [vmem:[#allocation2 + $0x3d0] sm:$0xff]
        %v3826 = vld [vmem:[#allocation2 + $0x3d8] sm:$0xff]
        %v3827 = vld [vmem:[#allocation2 + $0x4d0] sm:$0xff]
        %v3828 = vld [vmem:[#allocation2 + $0x4d8] sm:$0xff]
        %v3829 = vld [vmem:[#allocation2 + $0x5d0] sm:$0xff]
        %v3830 = vld [vmem:[#allocation2 + $0x5d8] sm:$0xff]
        %v3831 = vld [vmem:[#allocation2 + $0x6d0] sm:$0xff]
        %v3832 = vld [vmem:[#allocation2 + $0x6d8] sm:$0xff]
        %v3833 = vld [vmem:[#allocation2 + $0x7d0] sm:$0xff]
        %v3834 = vld [vmem:[#allocation2 + $0x7d8] sm:$0xff]
        %v3835 = vld [vmem:[#allocation2 + $0x8d0] sm:$0xff]
        %v3836 = vld [vmem:[#allocation2 + $0x8d8] sm:$0xff]
        %v3837 = vld [vmem:[#allocation2 + $0x9d0] sm:$0xff]
        %v3838 = vld [vmem:[#allocation2 + $0x9d8] sm:$0xff]
        %v3839 = vld [vmem:[#allocation2 + $0xad0] sm:$0xff]
        %v3840 = vld [vmem:[#allocation2 + $0xad8] sm:$0xff]
        %v3841 = vld [vmem:[#allocation2 + $0xbd0] sm:$0xff]
        %v3842 = vld [vmem:[#allocation2 + $0xbd8] sm:$0xff]
        %v3843 = vld [vmem:[#allocation2 + $0xcd0] sm:$0xff]
        %v3844 = vld [vmem:[#allocation2 + $0xcd8] sm:$0xff]
        %v3845 = vld [vmem:[#allocation2 + $0xdd0] sm:$0xff]
        %v3846 = vld [vmem:[#allocation2 + $0xdd8] sm:$0xff]
        %v3847 = vld [vmem:[#allocation2 + $0xed0] sm:$0xff]
        %v3848 = vld [vmem:[#allocation2 + $0xed8] sm:$0xff]
        %v3849 = vld [vmem:[#allocation2 + $0xfd0] sm:$0xff]
        %v3850 = vld [vmem:[#allocation2 + $0xfd8] sm:$0xff]
        %3851 = vmatpush.msra.mxu0 %v3834
        %3852 = vmatpush.msra.mxu0 %v3833
        %3853 = vmatpush.msra.mxu0 %v3832
        %3854 = vmatpush.msra.mxu0 %v3831
        %3855 = vmatpush.msra.mxu0 %v3830
        %3856 = vmatpush.msra.mxu0 %v3829
        %3857 = vmatpush.msra.mxu0 %v3828
        %3858 = vmatpush.msra.mxu0 %v3827
        %3859 = vmatpush.msra.mxu0 %v3826
        %3860 = vmatpush.msra.mxu0 %v3825
        %3861 = vmatpush.msra.mxu0 %v3824
        %3862 = vmatpush.msra.mxu0 %v3823
        %3863 = vmatpush.msra.mxu0 %v3822
        %3864 = vmatpush.msra.mxu0 %v3821
        %3865 = vmatpush.msra.mxu0 %v3820
        %3866 = vmatpush.msra.mxu0 %v3819
        %3867 = vmatmul.f32.gmra.mxu0 %v2759
        %v3868 = vpop.f32.mrf.mxu0
        %v3869 = vadd.f32 %v2797, %v3868
        %3870 = vmatmul.f32.gmra.mxu0 %v2761
        %v3871 = vpop.f32.mrf.mxu0
        %v3872 = vadd.f32 %v2797, %v3871
        %3873 = vdwg.mxu0
        %3874 = vmatpush.msra.mxu0 %v3850
        %3875 = vmatpush.msra.mxu0 %v3849
        %3876 = vmatpush.msra.mxu0 %v3848
        %3877 = vmatpush.msra.mxu0 %v3847
        %3878 = vmatpush.msra.mxu0 %v3846
        %3879 = vmatpush.msra.mxu0 %v3845
        %3880 = vmatpush.msra.mxu0 %v3844
        %3881 = vmatpush.msra.mxu0 %v3843
        %3882 = vmatpush.msra.mxu0 %v3842
        %3883 = vmatpush.msra.mxu0 %v3841
        %3884 = vmatpush.msra.mxu0 %v3840
        %3885 = vmatpush.msra.mxu0 %v3839
        %3886 = vmatpush.msra.mxu0 %v3838
        %3887 = vmatpush.msra.mxu0 %v3837
        %3888 = vmatpush.msra.mxu0 %v3836
        %3889 = vmatpush.msra.mxu0 %v3835
        %3890 = vmatmul.f32.gmra.mxu0 %v2760
        %v3891 = vpop.f32.mrf.mxu0
        %v3892 = vadd.f32 %v3869, %v3891
        %3893 = vmatmul.f32.gmra.mxu0 %v2762
        %v3894 = vpop.f32.mrf.mxu0
        %v3895 = vadd.f32 %v3872, %v3894
        %3896 = vdwg.mxu0
        %s3897 = scalar_lea.vmem %s230, 208 [#allocation3]
        %3898 = vst.msk [vmem:[%s3897] sm:$0xff] %vm491, %v3892
        %3899 = vst.msk [vmem:[%s3897 + $0x8] sm:$0xff] %vm491, %v3895
        %v3900 = vld [vmem:[#allocation2 + $0xe0] sm:$0xff]
        %v3901 = vld [vmem:[#allocation2 + $0xe8] sm:$0xff]
        %v3902 = vld [vmem:[#allocation2 + $0x1e0] sm:$0xff]
        %v3903 = vld [vmem:[#allocation2 + $0x1e8] sm:$0xff]
        %v3904 = vld [vmem:[#allocation2 + $0x2e0] sm:$0xff]
        %v3905 = vld [vmem:[#allocation2 + $0x2e8] sm:$0xff]
        %v3906 = vld [vmem:[#allocation2 + $0x3e0] sm:$0xff]
        %v3907 = vld [vmem:[#allocation2 + $0x3e8] sm:$0xff]
        %v3908 = vld [vmem:[#allocation2 + $0x4e0] sm:$0xff]
        %v3909 = vld [vmem:[#allocation2 + $0x4e8] sm:$0xff]
        %v3910 = vld [vmem:[#allocation2 + $0x5e0] sm:$0xff]
        %v3911 = vld [vmem:[#allocation2 + $0x5e8] sm:$0xff]
        %v3912 = vld [vmem:[#allocation2 + $0x6e0] sm:$0xff]
        %v3913 = vld [vmem:[#allocation2 + $0x6e8] sm:$0xff]
        %v3914 = vld [vmem:[#allocation2 + $0x7e0] sm:$0xff]
        %v3915 = vld [vmem:[#allocation2 + $0x7e8] sm:$0xff]
        %v3916 = vld [vmem:[#allocation2 + $0x8e0] sm:$0xff]
        %v3917 = vld [vmem:[#allocation2 + $0x8e8] sm:$0xff]
        %v3918 = vld [vmem:[#allocation2 + $0x9e0] sm:$0xff]
        %v3919 = vld [vmem:[#allocation2 + $0x9e8] sm:$0xff]
        %v3920 = vld [vmem:[#allocation2 + $0xae0] sm:$0xff]
        %v3921 = vld [vmem:[#allocation2 + $0xae8] sm:$0xff]
        %v3922 = vld [vmem:[#allocation2 + $0xbe0] sm:$0xff]
        %v3923 = vld [vmem:[#allocation2 + $0xbe8] sm:$0xff]
        %v3924 = vld [vmem:[#allocation2 + $0xce0] sm:$0xff]
        %v3925 = vld [vmem:[#allocation2 + $0xce8] sm:$0xff]
        %v3926 = vld [vmem:[#allocation2 + $0xde0] sm:$0xff]
        %v3927 = vld [vmem:[#allocation2 + $0xde8] sm:$0xff]
        %v3928 = vld [vmem:[#allocation2 + $0xee0] sm:$0xff]
        %v3929 = vld [vmem:[#allocation2 + $0xee8] sm:$0xff]
        %v3930 = vld [vmem:[#allocation2 + $0xfe0] sm:$0xff]
        %v3931 = vld [vmem:[#allocation2 + $0xfe8] sm:$0xff]
        %3932 = vmatpush.msra.mxu0 %v3915
        %3933 = vmatpush.msra.mxu0 %v3914
        %3934 = vmatpush.msra.mxu0 %v3913
        %3935 = vmatpush.msra.mxu0 %v3912
        %3936 = vmatpush.msra.mxu0 %v3911
        %3937 = vmatpush.msra.mxu0 %v3910
        %3938 = vmatpush.msra.mxu0 %v3909
        %3939 = vmatpush.msra.mxu0 %v3908
        %3940 = vmatpush.msra.mxu0 %v3907
        %3941 = vmatpush.msra.mxu0 %v3906
        %3942 = vmatpush.msra.mxu0 %v3905
        %3943 = vmatpush.msra.mxu0 %v3904
        %3944 = vmatpush.msra.mxu0 %v3903
        %3945 = vmatpush.msra.mxu0 %v3902
        %3946 = vmatpush.msra.mxu0 %v3901
        %3947 = vmatpush.msra.mxu0 %v3900
        %3948 = vmatmul.f32.gmra.mxu0 %v2759
        %v3949 = vpop.f32.mrf.mxu0
        %v3950 = vadd.f32 %v2797, %v3949
        %3951 = vmatmul.f32.gmra.mxu0 %v2761
        %v3952 = vpop.f32.mrf.mxu0
        %v3953 = vadd.f32 %v2797, %v3952
        %3954 = vdwg.mxu0
        %3955 = vmatpush.msra.mxu0 %v3931
        %3956 = vmatpush.msra.mxu0 %v3930
        %3957 = vmatpush.msra.mxu0 %v3929
        %3958 = vmatpush.msra.mxu0 %v3928
        %3959 = vmatpush.msra.mxu0 %v3927
        %3960 = vmatpush.msra.mxu0 %v3926
        %3961 = vmatpush.msra.mxu0 %v3925
        %3962 = vmatpush.msra.mxu0 %v3924
        %3963 = vmatpush.msra.mxu0 %v3923
        %3964 = vmatpush.msra.mxu0 %v3922
        %3965 = vmatpush.msra.mxu0 %v3921
        %3966 = vmatpush.msra.mxu0 %v3920
        %3967 = vmatpush.msra.mxu0 %v3919
        %3968 = vmatpush.msra.mxu0 %v3918
        %3969 = vmatpush.msra.mxu0 %v3917
        %3970 = vmatpush.msra.mxu0 %v3916
        %3971 = vmatmul.f32.gmra.mxu0 %v2760
        %v3972 = vpop.f32.mrf.mxu0
        %v3973 = vadd.f32 %v3950, %v3972
        %3974 = vmatmul.f32.gmra.mxu0 %v2762
        %v3975 = vpop.f32.mrf.mxu0
        %v3976 = vadd.f32 %v3953, %v3975
        %3977 = vdwg.mxu0
        %s3978 = scalar_lea.vmem %s230, 224 [#allocation3]
        %3979 = vst.msk [vmem:[%s3978] sm:$0xff] %vm491, %v3973
        %3980 = vst.msk [vmem:[%s3978 + $0x8] sm:$0xff] %vm491, %v3976
        %v3981 = vld [vmem:[#allocation2 + $0xf0] sm:$0xff]
        %v3982 = vld [vmem:[#allocation2 + $0xf8] sm:$0xff]
        %v3983 = vld [vmem:[#allocation2 + $0x1f0] sm:$0xff]
        %v3984 = vld [vmem:[#allocation2 + $0x1f8] sm:$0xff]
        %v3985 = vld [vmem:[#allocation2 + $0x2f0] sm:$0xff]
        %v3986 = vld [vmem:[#allocation2 + $0x2f8] sm:$0xff]
        %v3987 = vld [vmem:[#allocation2 + $0x3f0] sm:$0xff]
        %v3988 = vld [vmem:[#allocation2 + $0x3f8] sm:$0xff]
        %v3989 = vld [vmem:[#allocation2 + $0x4f0] sm:$0xff]
        %v3990 = vld [vmem:[#allocation2 + $0x4f8] sm:$0xff]
        %v3991 = vld [vmem:[#allocation2 + $0x5f0] sm:$0xff]
        %v3992 = vld [vmem:[#allocation2 + $0x5f8] sm:$0xff]
        %v3993 = vld [vmem:[#allocation2 + $0x6f0] sm:$0xff]
        %v3994 = vld [vmem:[#allocation2 + $0x6f8] sm:$0xff]
        %v3995 = vld [vmem:[#allocation2 + $0x7f0] sm:$0xff]
        %v3996 = vld [vmem:[#allocation2 + $0x7f8] sm:$0xff]
        %v3997 = vld [vmem:[#allocation2 + $0x8f0] sm:$0xff]
        %v3998 = vld [vmem:[#allocation2 + $0x8f8] sm:$0xff]
        %v3999 = vld [vmem:[#allocation2 + $0x9f0] sm:$0xff]
        %v4000 = vld [vmem:[#allocation2 + $0x9f8] sm:$0xff]
        %v4001 = vld [vmem:[#allocation2 + $0xaf0] sm:$0xff]
        %v4002 = vld [vmem:[#allocation2 + $0xaf8] sm:$0xff]
        %v4003 = vld [vmem:[#allocation2 + $0xbf0] sm:$0xff]
        %v4004 = vld [vmem:[#allocation2 + $0xbf8] sm:$0xff]
        %v4005 = vld [vmem:[#allocation2 + $0xcf0] sm:$0xff]
        %v4006 = vld [vmem:[#allocation2 + $0xcf8] sm:$0xff]
        %v4007 = vld [vmem:[#allocation2 + $0xdf0] sm:$0xff]
        %v4008 = vld [vmem:[#allocation2 + $0xdf8] sm:$0xff]
        %v4009 = vld [vmem:[#allocation2 + $0xef0] sm:$0xff]
        %v4010 = vld [vmem:[#allocation2 + $0xef8] sm:$0xff]
        %v4011 = vld [vmem:[#allocation2 + $0xff0] sm:$0xff]
        %v4012 = vld [vmem:[#allocation2 + $0xff8] sm:$0xff]
        %4013 = vmatpush.msra.mxu0 %v3996
        %4014 = vmatpush.msra.mxu0 %v3995
        %4015 = vmatpush.msra.mxu0 %v3994
        %4016 = vmatpush.msra.mxu0 %v3993
        %4017 = vmatpush.msra.mxu0 %v3992
        %4018 = vmatpush.msra.mxu0 %v3991
        %4019 = vmatpush.msra.mxu0 %v3990
        %4020 = vmatpush.msra.mxu0 %v3989
        %4021 = vmatpush.msra.mxu0 %v3988
        %4022 = vmatpush.msra.mxu0 %v3987
        %4023 = vmatpush.msra.mxu0 %v3986
        %4024 = vmatpush.msra.mxu0 %v3985
        %4025 = vmatpush.msra.mxu0 %v3984
        %4026 = vmatpush.msra.mxu0 %v3983
        %4027 = vmatpush.msra.mxu0 %v3982
        %4028 = vmatpush.msra.mxu0 %v3981
        %4029 = vmatmul.f32.gmra.mxu0 %v2759
        %v4030 = vpop.f32.mrf.mxu0
        %v4031 = vadd.f32 %v2797, %v4030
        %4032 = vmatmul.f32.gmra.mxu0 %v2761
        %v4033 = vpop.f32.mrf.mxu0
        %v4034 = vadd.f32 %v2797, %v4033
        %4035 = vdwg.mxu0
        %4036 = vmatpush.msra.mxu0 %v4012
        %4037 = vmatpush.msra.mxu0 %v4011
        %4038 = vmatpush.msra.mxu0 %v4010
        %4039 = vmatpush.msra.mxu0 %v4009
        %4040 = vmatpush.msra.mxu0 %v4008
        %4041 = vmatpush.msra.mxu0 %v4007
        %4042 = vmatpush.msra.mxu0 %v4006
        %4043 = vmatpush.msra.mxu0 %v4005
        %4044 = vmatpush.msra.mxu0 %v4004
        %4045 = vmatpush.msra.mxu0 %v4003
        %4046 = vmatpush.msra.mxu0 %v4002
        %4047 = vmatpush.msra.mxu0 %v4001
        %4048 = vmatpush.msra.mxu0 %v4000
        %4049 = vmatpush.msra.mxu0 %v3999
        %4050 = vmatpush.msra.mxu0 %v3998
        %4051 = vmatpush.msra.mxu0 %v3997
        %4052 = vmatmul.f32.gmra.mxu0 %v2760
        %v4053 = vpop.f32.mrf.mxu0
        %v4054 = vadd.f32 %v4031, %v4053
        %4055 = vmatmul.f32.gmra.mxu0 %v2762
        %v4056 = vpop.f32.mrf.mxu0
        %v4057 = vadd.f32 %v4034, %v4056
        %4058 = vdwg.mxu0
        %s4059 = scalar_lea.vmem %s230, 240 [#allocation3]
        %4060 = vst.msk [vmem:[%s4059] sm:$0xff] %vm491, %v4054
        %4061 = vst.msk [vmem:[%s4059 + $0x8] sm:$0xff] %vm491, %v4057
        %s4062 = sand.u32 %s136, 1
        %s4063 = scalar_lea.sflag [#allocation4], %s4062
        %s4064 = sand.u32 %s136, 1
        %s4065 = smul.addr %s4064, 256
        %s4066 = scalar_lea.vmem [#allocation3], %s4065
        // Predicated region
        $region37: #{outer_product_mean.3} parent=35 // pred_check
          %p4067 = pneg %p146
        $region38: #{outer_product_mean.3} parent=35 // pred_check_branch
          %4069 = sbr.rel (%p4067) target = $region40
        $region39: #{outer_product_mean.3} parent=35 // pred_region
          %s4070 = smul.u32 16, %s23
          %4072 = vsyncadd %s4063, 0
          %s4073 = smul.addr %s4070, 2
          %s4074 = smul.addr %s22, 32
          %s4075 = sadd.s32 %s4073, %s4074
          %s4076 = smul.addr %s4075, 8
          %s4077 = scalar_lea.hbm %s4, %s4076
          %s4078 = sshll.u32 %s4066, 4
          %s4079 = int_to_ptr.vmem [resolvable:$true] %s4078
          %s4080 = sshll.u32 %s4077, 4
          %s4081 = int_to_ptr.hbm [resolvable:$true] %s4080
          %4086 = dma.vmem_to_hbm [thread:$0]  %s4079, 4096, %s4081, %s4063, 128, 128, 8
        $region40: #{outer_product_mean.3} parent=35 // pred_fallthru
          _
      $region36: #{outer_product_mean.3} parent=5 // pred_fallthru
        _
      %p4087 = scmp.le.s32.totalorder 2, %s13
      // Predicated region
      $region41: #{outer_product_mean.3} parent=5 // pred_check
        %p4088 = pneg %p4087
      $region42: #{outer_product_mean.3} parent=5 // pred_check_branch
        %4090 = sbr.rel (%p4088) target = $region44
      $region43: #{outer_product_mean.3} parent=5 // pred_region
        %s4091 = ssub.s32 %s13, 2
        // Predicated region
        $region45: #{outer_product_mean.3} parent=43 // pred_check
          %p4092 = pneg %p152
        $region46: #{outer_product_mean.3} parent=43 // pred_check_branch
          %4094 = sbr.rel (%p4092) target = $region48
        $region47: #{outer_product_mean.3} parent=43 // pred_region
          %s4095 = sand.u32 %s137, 1
          %s4096 = scalar_lea.sflag [#allocation4], %s4095
          %s4097 = sand.u32 %s137, 1
          %s4098 = smul.addr %s4097, 256
          %s4099 = scalar_lea.vmem [#allocation3], %s4098
          %4101 = dma.done %s4096, 4096
        $region48: #{outer_product_mean.3} parent=43 // pred_fallthru
          _
      $region44: #{outer_product_mean.3} parent=5 // pred_fallthru
        _
    $region6: #{outer_product_mean.3} parent=1 // loop_footer
      %s17 = sadd.s32 1, %s13
    $region7: #{outer_product_mean.3} parent=1 // loop_footer_branch
      %12 = sbr.rel target = $region3
    $region8: #{outer_product_mean.3} parent=1 // loop_exit
      _
    %4102 = vsyncpa [#allocation4], 1
    %s4103 = scalar_lea.sflag [#allocation4], 1
    %4104 = vsyncpa %s4103, 1

</llo_original>
